<compile_context>
chip_gen: v7x
topology: tpu7x:2x2x1
jax: 0.10.0
libtpu: 0.0.40
codegen_flags: <defaults>
</compile_context>

<pallas_src>
import functools

import jax
import jax.numpy as jnp
from jax import lax
from jax.experimental import pallas as pl
from jax.experimental.pallas import tpu as pltpu

SMEM_SPEC = pl.BlockSpec(memory_space=pltpu.MemorySpace.SMEM)

# 64 MiB scoped VMEM: equals v7x physical VMEM, generous on v5e/v6e (raise
# further there for multi-image blocks at production sizes).
VMEM_LIMIT = 64 * 1024 * 1024


# ----------------------------- activation helpers ----------------------------

def _softplus_negbeta(y):
    # torch.nn.functional.softplus(y, beta=-1.0, threshold=20):
    #   returns y (linear) where -y > 20, else -log1p(exp(-y)).
    # exp input clamped so the unselected branch never produces inf.
    neg_y = -y
    sp = -jnp.log1p(jnp.exp(jnp.minimum(neg_y, 20.0)))
    return jnp.where(neg_y > 20.0, y, sp)


def _unirect(x, kappa, neg_log_lam, inv_lam):
    # UniRect_static.forward: p = exp(softplus(k*x - log l, beta=-1)/l); out = p*x
    p = jnp.exp(inv_lam * _softplus_negbeta(kappa * x + neg_log_lam))
    return p * x


def _unified(x, kappa, neg_log_lam, inv_lam):
    # Unified.forward: returns p itself (the SE gumbel gate).
    return jnp.exp(inv_lam * _softplus_negbeta(kappa * x + neg_log_lam))


# ------------------------------ Pallas kernels --------------------------------

def fused_conv_kernel(x_ref, w1_ref, sb1_ref, w2_ref, sb2_ref, w3_ref, sb3_ref,
                      sc_ref, out3_ref, chsum_ref, *, H, W):
    """conv1(1x1)+bn1+ur1 -> conv2(3x3)+bn2+ur2 -> conv3(1x1)+bn3, one image.

    x:     (1, Cin, H*W) f32 (NCHW slab; transposed/cast in-register)
    w1:    (Cin, Wd) bf16              sb1: (2, Wd) f32
    w2:    (9*Wd, Wd) bf16 (K axis ordered kh-major, kw, cin)   sb2: (2, Wd) f32
    w3:    (Wd, Cout) bf16             sb3: (2, Cout) f32
    sc:    SMEM (6,) = [k1, -log l1, 1/l1, k2, -log l2, 1/l2]
    out3:  (1, H*W, Cout) bf16         chsum: (1, 1, Cout) f32 (sum over H*W)
    """
    Wd = w1_ref.shape[1]
    HW = H * W

    # NCHW slab -> rows: in-register (Cin, HW) -> (HW, Cin) transpose + bf16 cast.
    x_rows = jnp.transpose(x_ref[0]).astype(jnp.bfloat16)        # (HW, Cin)

    # ---- conv1 (1x1) + bn1 + unirect1 ----
    h = jnp.dot(x_rows, w1_ref[...], preferred_element_type=jnp.float32)
    h = h * sb1_ref[0:1, :] + sb1_ref[1:2, :]
    h1 = _unirect(h, sc_ref[0], sc_ref[1], sc_ref[2])            # (HW, Wd) f32

    # ---- conv2 (3x3, stride 1, pad 1) + bn2 + unirect2 : ONE K=9*Wd matmul ----
    # Column (kw) shifts are flattened row-offset slices of a 2-row zero-padded
    # copy (wrapped boundary columns zeroed by a multiplicative (W,1) bf16
    # mask); row (kh) taps are free leading-axis slices.  im2col built in bf16.
    h1_3d = h1.reshape(H, W, Wd)
    zrows = jnp.zeros((2, W, Wd), jnp.float32)
    hp = jnp.concatenate([zrows, h1_3d, zrows], axis=0)          # (H+4, W, Wd)
    hp_flat = hp.reshape((H + 4) * W, Wd)

    col = lax.broadcasted_iota(jnp.int32, (W, 1), 0)
    mask_l = (col != 0).astype(jnp.bfloat16)       # kw=0: wrapped col 0 is pad
    mask_r = (col != W - 1).astype(jnp.bfloat16)   # kw=2: wrapped col W-1 is pad

    cols = []
    for kw in range(3):
        start = W + kw - 1
        s = hp_flat[start:start + (H + 2) * W, :].astype(jnp.bfloat16)
        s = s.reshape(H + 2, W, Wd)
        if kw == 0:
            s = s * mask_l
        elif kw == 2:
            s = s * mask_r
        cols.append(s)                                            # (H+2, W, Wd)
    pieces = [cols[kw][kh:kh + H] for kh in range(3) for kw in range(3)]
    xfull = jnp.concatenate(pieces, axis=-1).reshape(HW, 9 * Wd)  # (HW, 9Wd) bf16

    acc = jnp.dot(xfull, w2_ref[...], preferred_element_type=jnp.float32)
    acc = acc * sb2_ref[0:1, :] + sb2_ref[1:2, :]
    h2 = _unirect(acc, sc_ref[3], sc_ref[4], sc_ref[5])           # (HW, Wd) f32

    # ---- conv3 (1x1) + bn3 ----
    h3 = jnp.dot(h2.astype(jnp.bfloat16), w3_ref[...],
                 preferred_element_type=jnp.float32)
    h3 = h3 * sb3_ref[0:1, :] + sb3_ref[1:2, :]                   # (HW, Cout) f32

    # epilogue: partial reduction for the SE global average pool (kept in f32)
    chsum_ref[0] = jnp.sum(h3, axis=0, keepdims=True)
    # bf16 intermediate halves the out3 HBM round-trip
    out3_ref[0] = h3.astype(jnp.bfloat16)


def gate_residual_kernel(chsum_ref, ln_ref, wa_t_ref, wb_ref, out3_ref, idn_ref,
                         sc_ref, o_ref):
    """SE gate (LayerNorm + MLP + Unified) + gating + residual + unirect3.

    chsum: (1, 1, C) f32 per-image channel sums
    ln:    (2, C) LayerNorm gamma/beta
    wa_t:  (C//r, C) excitation Linear1 weight (pre-transposed)
    wb:    (C//r, C) excitation Linear2 weight
    out3:  (1, TM, C) bf16             idn: (1, C, TM) f32 (NCHW slab of x)
    sc:    SMEM (7,) = [1/(H*W), k_u, -log l_u, 1/l_u, k3, -log l3, 1/l3]
    o:     (1, C, TM) f32, written directly in NCHW layout
    """
    # --- SE gate on the (1, C) pooled vector (recomputed per tile; microscopic) ---
    y = chsum_ref[0] * sc_ref[0]                              # (1, C) global avg
    mu = jnp.mean(y, axis=-1, keepdims=True)
    var = jnp.mean(jnp.square(y - mu), axis=-1, keepdims=True)
    yn = (y - mu) * lax.rsqrt(var + 1e-5)
    yn = yn * ln_ref[0:1, :] + ln_ref[1:2, :]                 # LayerNorm eps=1e-5
    # excitation: Linear -> ReLU -> Linear (no bias); Dropout(0.1) = identity
    # (eval).  Tiny contractions as broadcast-multiply + reduce (pure VPU/XLU).
    hmid = jnp.maximum(
        jnp.sum(yn * wa_t_ref[...], axis=1, keepdims=True), 0.0)   # (C//r, 1)
    e = jnp.sum(hmid * wb_ref[...], axis=0, keepdims=True)         # (1, C)
    gate = _unified(e, sc_ref[1], sc_ref[2], sc_ref[3])            # (1, C)

    # --- gating + residual + unirect3, write back in NCHW layout ---
    idn_t = jnp.transpose(idn_ref[0])                              # (TM, C) f32
    v = out3_ref[0].astype(jnp.float32) * gate + idn_t
    r = _unirect(v, sc_ref[4], sc_ref[5], sc_ref[6])
    o_ref[0] = jnp.transpose(r)                                    # (C, TM)


# ---------------------------------- wrapper -----------------------------------

def se_bottleneck_forward(x_nchw, P):
    n, cin, h, w = x_nchw.shape
    width = P['w1'].shape[1]
    cout = P['w3'].shape[1]
    hidden = P['wa'].shape[1]
    assert cin == cout, "stride=1 / downsample=None requires inplanes == planes*4"
    hw = h * w

    # Single HBM copy of x: free reshape of NCHW.  Kernel 1 transposes/casts a
    # (Cin, HW) slab in-register; kernel 2 reads the identity branch from the
    # very same array.
    x_flat = x_nchw.reshape(n, cin, hw)

    w1 = P['w1'].astype(jnp.bfloat16)
    w2 = P['w2_hwio'].reshape(9 * width, width).astype(jnp.bfloat16)
    w3 = P['w3'].astype(jnp.bfloat16)
    wa_t = jnp.transpose(P['wa'])                                  # (C//r, C)
    sc12 = jnp.concatenate([P['sc1'], P['sc2']])                   # (6,)
    sc3u = jnp.concatenate([jnp.array([1.0 / hw], jnp.float32),
                            P['sc_u'], P['sc3']])                  # (7,)

    # ---- kernel 1: fused conv chain, grid over batch, megacore-parallel ----
    kernel1 = functools.partial(fused_conv_kernel, H=h, W=w)
    out3, chsum = pl.pallas_call(
        kernel1,
        grid=(n,),
        in_specs=[
            pl.BlockSpec((1, cin, hw), lambda i: (i, 0, 0)),
            pl.BlockSpec((cin, width), lambda i: (0, 0)),
            pl.BlockSpec((2, width), lambda i: (0, 0)),
            pl.BlockSpec((9 * width, width), lambda i: (0, 0)),
            pl.BlockSpec((2, width), lambda i: (0, 0)),
            pl.BlockSpec((width, cout), lambda i: (0, 0)),
            pl.BlockSpec((2, cout), lambda i: (0, 0)),
            SMEM_SPEC,
        ],
        out_specs=(
            pl.BlockSpec((1, hw, cout), lambda i: (i, 0, 0)),
            pl.BlockSpec((1, 1, cout), lambda i: (i, 0, 0)),
        ),
        out_shape=(
            jax.ShapeDtypeStruct((n, hw, cout), jnp.bfloat16),
            jax.ShapeDtypeStruct((n, 1, cout), jnp.float32),
        ),
        compiler_params=pltpu.CompilerParams(
            dimension_semantics=("parallel",),
            vmem_limit_bytes=VMEM_LIMIT),
    )(x_flat, w1, P['sb1'], w2, P['sb2'], w3, P['sb3'], sc12)

    # ---- kernel 2: SE gate + gating + residual + unirect3 (single kernel) ----
    tm = hw
    for cand in (4096, 2048, 1024, 512, 256, 128):
        if hw % cand == 0:
            tm = cand
            break
    out = pl.pallas_call(
        gate_residual_kernel,
        grid=(n, hw // tm),
        in_specs=[
            pl.BlockSpec((1, 1, cout), lambda i, t: (i, 0, 0)),
            pl.BlockSpec((2, cout), lambda i, t: (0, 0)),
            pl.BlockSpec((hidden, cout), lambda i, t: (0, 0)),
            pl.BlockSpec((hidden, cout), lambda i, t: (0, 0)),
            pl.BlockSpec((1, tm, cout), lambda i, t: (i, t, 0)),
            pl.BlockSpec((1, cout, tm), lambda i, t: (i, 0, t)),
            SMEM_SPEC,
        ],
        out_specs=pl.BlockSpec((1, cout, tm), lambda i, t: (i, 0, t)),
        out_shape=jax.ShapeDtypeStruct((n, cout, hw), jnp.float32),
        compiler_params=pltpu.CompilerParams(
            dimension_semantics=("parallel", "parallel"),
            vmem_limit_bytes=VMEM_LIMIT),
    )(chsum, P['ln'], wa_t, P['wb'], out3, x_flat, sc3u)

    return out.reshape(n, cout, h, w)          # already NCHW; reshape is free


# ---------------------------- deterministic params ----------------------------

def init_params(key, inplanes, planes, r=16):
    width = planes            # base_width=64, groups=1, dilation=1
    cout = planes * 4         # expansion = 4
    hidden = cout // r
    ks = jax.random.split(key, 12)

    def kaiming(rng, shape, fan_in):
        return jax.random.normal(rng, shape, jnp.float32) * (2.0 / fan_in) ** 0.5

    def bn_fold(rng, c):       # eval-mode BatchNorm folded to scale/bias
        kg, kb, km, kv = jax.random.split(rng, 4)
        gamma = jax.random.uniform(kg, (c,), jnp.float32, 0.5, 1.5)
        beta = jax.random.normal(kb, (c,), jnp.float32) * 0.1
        mean = jax.random.normal(km, (c,), jnp.float32) * 0.1
        var = jax.random.uniform(kv, (c,), jnp.float32, 0.5, 1.5)
        scale = gamma * lax.rsqrt(var + 1e-5)
        return jnp.stack([scale, beta - mean * scale], axis=0)     # (2, c)

    def unirect_scalars(rng):  # UniRect: lambda ~ U(0,1), kappa ~ U(0.8,1.2)
        kl, kk = jax.random.split(rng)
        lam = jax.random.uniform(kl, (), jnp.float32, 0.0, 1.0)
        kap = jax.random.uniform(kk, (), jnp.float32, 0.8, 1.2)
        lam = jnp.maximum(lam, 0.0) + 1e-8        # relu(lambda) + 1e-8
        return jnp.stack([kap, -jnp.log(lam), 1.0 / lam])          # (3,)

    P = {}
    P['w1'] = kaiming(ks[0], (inplanes, width), inplanes)          # (Cin, Wd)
    P['sb1'] = bn_fold(ks[1], width)
    P['sc1'] = unirect_scalars(ks[2])
    P['w2_hwio'] = kaiming(ks[3], (3, 3, width, width), 9 * width) # HWIO
    P['sb2'] = bn_fold(ks[4], width)
    P['sc2'] = unirect_scalars(ks[5])
    P['w3'] = kaiming(ks[6], (width, cout), width)                 # (Wd, Cout)
    P['sb3'] = bn_fold(ks[7], cout)
    P['sc3'] = unirect_scalars(ks[8])
    # SE block (use_gumbel=True): LayerNorm(c) -> Linear(c, c//r, no bias) ->
    # ReLU -> Linear(c//r, c, no bias) -> Dropout(0.1, eval: identity) -> Unified
    kg, kb = jax.random.split(ks[9])
    P['ln'] = jnp.stack([jax.random.uniform(kg, (cout,), jnp.float32, 0.5, 1.5),
                         jax.random.normal(kb, (cout,), jnp.float32) * 0.1], axis=0)
    P['wa'] = kaiming(ks[10], (cout, hidden), cout)
    P['wb'] = kaiming(jax.random.fold_in(ks[10], 1), (hidden, cout), hidden)
    kl, kk = jax.random.split(ks[11])
    lam_u = jnp.maximum(jax.random.uniform(kl, (), jnp.float32, 0.0, 1.0), 1e-4)
    kap_u = jax.random.uniform(kk, (), jnp.float32, -1.0, 0.0)
    P['sc_u'] = jnp.stack([kap_u, -jnp.log(lam_u), 1.0 / lam_u])   # Unified()
    return P


# ------------------------------ pure-JAX reference -----------------------------

def reference_forward(x_nchw, P):
    bf = jnp.bfloat16
    x = jnp.transpose(x_nchw, (0, 2, 3, 1)).astype(jnp.float32)    # NHWC

    def bn(v, sb):
        return v * sb[0] + sb[1]

    h1 = jnp.dot(x.astype(bf), P['w1'].astype(bf),
                 preferred_element_type=jnp.float32)
    h1 = _unirect(bn(h1, P['sb1']), P['sc1'][0], P['sc1'][1], P['sc1'][2])

    h2 = lax.conv_general_dilated(
        h1.astype(bf), P['w2_hwio'].astype(bf), (1, 1), ((1, 1), (1, 1)),
        dimension_numbers=('NHWC', 'HWIO', 'NHWC'),
        preferred_element_type=jnp.float32)
    h2 = _unirect(bn(h2, P['sb2']), P['sc2'][0], P['sc2'][1], P['sc2'][2])

    h3 = bn(jnp.dot(h2.astype(bf), P['w3'].astype(bf),
                    preferred_element_type=jnp.float32), P['sb3'])

    # SE block, use_gumbel=True, eval mode
    y = jnp.mean(h3, axis=(1, 2))                                  # (N, C)
    mu = jnp.mean(y, axis=-1, keepdims=True)
    var = jnp.mean(jnp.square(y - mu), axis=-1, keepdims=True)
    yn = (y - mu) * lax.rsqrt(var + 1e-5) * P['ln'][0] + P['ln'][1]
    e = jnp.maximum(yn @ P['wa'], 0.0) @ P['wb']
    gate = _unified(e, P['sc_u'][0], P['sc_u'][1], P['sc_u'][2])

    out = h3 * gate[:, None, None, :] + x
    out = _unirect(out, P['sc3'][0], P['sc3'][1], P['sc3'][2])
    return jnp.transpose(out, (0, 3, 1, 2))


if __name__ == "__main__":
    # Bottleneck config with downsample=None: inplanes == planes * expansion.
    inplanes, planes, r = 128, 32, 16          # width=32, cout=128 (lane-dense)
    N, H, W = 2, 16, 16

    key = jax.random.PRNGKey(0)
    kx, kp = jax.random.split(key)
    x = jax.random.normal(kx, (N, inplanes, H, W), jnp.float32)
    P = init_params(kp, inplanes, planes, r)

    out = jax.block_until_ready(jax.jit(se_bottleneck_forward)(x, P))
    ref = jax.block_until_ready(reference_forward(x, P))

    assert out.shape == (N, planes * 4, H, W), out.shape
    # Kernel deliberately stores the conv-chain output in bf16 (per perf review);
    # the reference keeps it f32, so allow a small relative tolerance.
    max_err = float(jnp.max(jnp.abs(out - ref)))
    scale = float(jnp.max(jnp.abs(ref))) + 1e-6
    assert max_err / scale < 2e-2, f"max abs err {max_err} (ref scale {scale})"
    print("KERNEL_OK")
</pallas_src>

<mosaic_0001>
module attributes {stable_mosaic.version = 11 : i64} {
  func.func @fused_conv_kernel(%arg0: i32, %arg1: memref<1x128x256xf32, #tpu.memory_space<vmem>>, %arg2: memref<128x32xbf16, #tpu.memory_space<vmem>>, %arg3: memref<2x32xf32, #tpu.memory_space<vmem>>, %arg4: memref<288x32xbf16, #tpu.memory_space<vmem>>, %arg5: memref<2x32xf32, #tpu.memory_space<vmem>>, %arg6: memref<32x128xbf16, #tpu.memory_space<vmem>>, %arg7: memref<2x128xf32, #tpu.memory_space<vmem>>, %arg8: memref<6xf32, #tpu.memory_space<smem>>, %arg9: memref<1x256x128xbf16, #tpu.memory_space<vmem>>, %arg10: memref<1x1x128xf32, #tpu.memory_space<vmem>>) attributes {dimension_semantics = [#tpu.dimension_semantics<parallel>], iteration_bounds = array<i64: 2>, scalar_prefetch = 0 : i64, scratch_operands = 0 : i64, tpu.core_type = #tpu.core_type<tc>, window_params = [{transform_indices = @transform_0, window_bounds = array<i64: 1, 128, 256>}, {pipeline_mode = #tpu.pipeline_mode<synchronous>, transform_indices = @transform_1, window_bounds = array<i64: 128, 32>}, {pipeline_mode = #tpu.pipeline_mode<synchronous>, transform_indices = @transform_2, window_bounds = array<i64: 2, 32>}, {pipeline_mode = #tpu.pipeline_mode<synchronous>, transform_indices = @transform_3, window_bounds = array<i64: 288, 32>}, {pipeline_mode = #tpu.pipeline_mode<synchronous>, transform_indices = @transform_4, window_bounds = array<i64: 2, 32>}, {pipeline_mode = #tpu.pipeline_mode<synchronous>, transform_indices = @transform_5, window_bounds = array<i64: 32, 128>}, {pipeline_mode = #tpu.pipeline_mode<synchronous>, transform_indices = @transform_6, window_bounds = array<i64: 2, 128>}, {transform_indices = @transform_7, window_bounds = array<i64: 6>}, {transform_indices = @transform_8, window_bounds = array<i64: 1, 256, 128>}, {transform_indices = @transform_9, window_bounds = array<i64: 1, 1, 128>}]} {
    %c0 = arith.constant 0 : index
    %c0_0 = arith.constant 0 : index
    %c0_1 = arith.constant 0 : index
    %0 = vector.load %arg1[%c0, %c0_0, %c0_1] : memref<1x128x256xf32, #tpu.memory_space<vmem>>, vector<1x128x256xf32>
    %1 = vector.shape_cast %0 : vector<1x128x256xf32> to vector<128x256xf32>
    %2 = tpu.transpose %1, [1, 0] : vector<128x256xf32> -> vector<256x128xf32>
    %3 = arith.truncf %2 : vector<256x128xf32> to vector<256x128xbf16>
    %c0_2 = arith.constant 0 : index
    %c0_3 = arith.constant 0 : index
    %4 = vector.load %arg2[%c0_2, %c0_3] : memref<128x32xbf16, #tpu.memory_space<vmem>>, vector<128x32xbf16>
    %cst = arith.constant dense<0.000000e+00> : vector<256x32xf32>
    %5 = tpu.matmul %3, %4, %cst {dimension_numbers = #tpu.dot_dimension_numbers<[1], [0], [0], [1], [0, 0, 1, 1], [], []>} : vector<256x128xbf16>, vector<128x32xbf16>, vector<256x32xf32> -> vector<256x32xf32>
    %c0_4 = arith.constant 0 : index
    %c0_5 = arith.constant 0 : index
    %6 = vector.load %arg3[%c0_4, %c0_5] : memref<2x32xf32, #tpu.memory_space<vmem>>, vector<1x32xf32>
    %7 = vector.broadcast %6 : vector<1x32xf32> to vector<256x32xf32>
    %8 = arith.mulf %5, %7 : vector<256x32xf32>
    %c1 = arith.constant 1 : index
    %c0_6 = arith.constant 0 : index
    %9 = vector.load %arg3[%c1, %c0_6] : memref<2x32xf32, #tpu.memory_space<vmem>>, vector<1x32xf32>
    %10 = vector.broadcast %9 : vector<1x32xf32> to vector<256x32xf32>
    %11 = arith.addf %8, %10 : vector<256x32xf32>
    %c0_7 = arith.constant 0 : index
    %12 = memref.load %arg8[%c0_7] : memref<6xf32, #tpu.memory_space<smem>>
    %c1_8 = arith.constant 1 : index
    %13 = memref.load %arg8[%c1_8] : memref<6xf32, #tpu.memory_space<smem>>
    %c2 = arith.constant 2 : index
    %14 = memref.load %arg8[%c2] : memref<6xf32, #tpu.memory_space<smem>>
    %15 = vector.broadcast %12 : f32 to vector<256x32xf32>
    %16 = arith.mulf %15, %11 : vector<256x32xf32>
    %17 = vector.broadcast %13 : f32 to vector<256x32xf32>
    %18 = arith.addf %16, %17 : vector<256x32xf32>
    %cst_9 = arith.constant 0.000000e+00 : f32
    %19 = vector.broadcast %cst_9 : f32 to vector<256x32xf32>
    %20 = arith.subf %19, %18 : vector<256x32xf32>
    %cst_10 = arith.constant 2.000000e+01 : f32
    %21 = vector.broadcast %cst_10 : f32 to vector<256x32xf32>
    %22 = arith.minimumf %20, %21 : vector<256x32xf32>
    %23 = math.exp %22 : vector<256x32xf32>
    %24 = math.log1p %23 : vector<256x32xf32>
    %cst_11 = arith.constant 0.000000e+00 : f32
    %25 = vector.broadcast %cst_11 : f32 to vector<256x32xf32>
    %26 = arith.subf %25, %24 : vector<256x32xf32>
    %cst_12 = arith.constant 2.000000e+01 : f32
    %27 = vector.broadcast %cst_12 : f32 to vector<256x32xf32>
    %28 = arith.cmpf ogt, %20, %27 : vector<256x32xf32>
    %29 = arith.select %28, %18, %26 : vector<256x32xi1>, vector<256x32xf32>
    %30 = vector.broadcast %14 : f32 to vector<256x32xf32>
    %31 = arith.mulf %30, %29 : vector<256x32xf32>
    %32 = math.exp %31 : vector<256x32xf32>
    %33 = arith.mulf %32, %11 : vector<256x32xf32>
    %34 = vector.shape_cast %33 : vector<256x32xf32> to vector<16x16x32xf32>
    %cst_13 = arith.constant 0.000000e+00 : f32
    %35 = vector.broadcast %cst_13 : f32 to vector<2x16x32xf32>
    %36 = tpu.concatenate %35, %34, %35 in 0 : vector<2x16x32xf32>, vector<16x16x32xf32>, vector<2x16x32xf32> -> vector<20x16x32xf32>
    %37 = vector.shape_cast %36 : vector<20x16x32xf32> to vector<320x32xf32>
    %38 = tpu.iota {dimensions = array<i32: 0>} : vector<16x1xi32>
    %c0_i32 = arith.constant 0 : i32
    %39 = vector.broadcast %c0_i32 : i32 to vector<16x1xi32>
    %40 = arith.cmpi ne, %38, %39 : vector<16x1xi32>
    %41 = arith.extui %40 : vector<16x1xi1> to vector<16x1xi32>
    %42 = arith.sitofp %41 : vector<16x1xi32> to vector<16x1xf32>
    %43 = arith.truncf %42 : vector<16x1xf32> to vector<16x1xbf16>
    %c15_i32 = arith.constant 15 : i32
    %44 = vector.broadcast %c15_i32 : i32 to vector<16x1xi32>
    %45 = arith.cmpi ne, %38, %44 : vector<16x1xi32>
    %46 = arith.extui %45 : vector<16x1xi1> to vector<16x1xi32>
    %47 = arith.sitofp %46 : vector<16x1xi32> to vector<16x1xf32>
    %48 = arith.truncf %47 : vector<16x1xf32> to vector<16x1xbf16>
    %49 = vector.extract_strided_slice %37 {offsets = [15, 0], sizes = [288, 32], strides = [1, 1]} : vector<320x32xf32> to vector<288x32xf32>
    %50 = arith.truncf %49 : vector<288x32xf32> to vector<288x32xbf16>
    %51 = vector.shape_cast %50 : vector<288x32xbf16> to vector<18x16x32xbf16>
    %52 = vector.shape_cast %43 : vector<16x1xbf16> to vector<1x16x1xbf16>
    %53 = vector.broadcast %52 : vector<1x16x1xbf16> to vector<18x16x32xbf16>
    %54 = arith.mulf %51, %53 : vector<18x16x32xbf16>
    %55 = vector.extract_strided_slice %37 {offsets = [16, 0], sizes = [288, 32], strides = [1, 1]} : vector<320x32xf32> to vector<288x32xf32>
    %56 = arith.truncf %55 : vector<288x32xf32> to vector<288x32xbf16>
    %57 = vector.shape_cast %56 : vector<288x32xbf16> to vector<18x16x32xbf16>
    %58 = vector.extract_strided_slice %37 {offsets = [17, 0], sizes = [288, 32], strides = [1, 1]} : vector<320x32xf32> to vector<288x32xf32>
    %59 = arith.truncf %58 : vector<288x32xf32> to vector<288x32xbf16>
    %60 = vector.shape_cast %59 : vector<288x32xbf16> to vector<18x16x32xbf16>
    %61 = vector.shape_cast %48 : vector<16x1xbf16> to vector<1x16x1xbf16>
    %62 = vector.broadcast %61 : vector<1x16x1xbf16> to vector<18x16x32xbf16>
    %63 = arith.mulf %60, %62 : vector<18x16x32xbf16>
    %64 = vector.extract_strided_slice %54 {offsets = [0, 0, 0], sizes = [16, 16, 32], strides = [1, 1, 1]} : vector<18x16x32xbf16> to vector<16x16x32xbf16>
    %65 = vector.extract_strided_slice %57 {offsets = [0, 0, 0], sizes = [16, 16, 32], strides = [1, 1, 1]} : vector<18x16x32xbf16> to vector<16x16x32xbf16>
    %66 = vector.extract_strided_slice %63 {offsets = [0, 0, 0], sizes = [16, 16, 32], strides = [1, 1, 1]} : vector<18x16x32xbf16> to vector<16x16x32xbf16>
    %67 = vector.extract_strided_slice %54 {offsets = [1, 0, 0], sizes = [16, 16, 32], strides = [1, 1, 1]} : vector<18x16x32xbf16> to vector<16x16x32xbf16>
    %68 = vector.extract_strided_slice %57 {offsets = [1, 0, 0], sizes = [16, 16, 32], strides = [1, 1, 1]} : vector<18x16x32xbf16> to vector<16x16x32xbf16>
    %69 = vector.extract_strided_slice %63 {offsets = [1, 0, 0], sizes = [16, 16, 32], strides = [1, 1, 1]} : vector<18x16x32xbf16> to vector<16x16x32xbf16>
    %70 = vector.extract_strided_slice %54 {offsets = [2, 0, 0], sizes = [16, 16, 32], strides = [1, 1, 1]} : vector<18x16x32xbf16> to vector<16x16x32xbf16>
    %71 = vector.extract_strided_slice %57 {offsets = [2, 0, 0], sizes = [16, 16, 32], strides = [1, 1, 1]} : vector<18x16x32xbf16> to vector<16x16x32xbf16>
    %72 = vector.extract_strided_slice %63 {offsets = [2, 0, 0], sizes = [16, 16, 32], strides = [1, 1, 1]} : vector<18x16x32xbf16> to vector<16x16x32xbf16>
    %73 = tpu.concatenate %64, %65, %66, %67, %68, %69, %70, %71, %72 in 2 : vector<16x16x32xbf16>, vector<16x16x32xbf16>, vector<16x16x32xbf16>, vector<16x16x32xbf16>, vector<16x16x32xbf16>, vector<16x16x32xbf16>, vector<16x16x32xbf16>, vector<16x16x32xbf16>, vector<16x16x32xbf16> -> vector<16x16x288xbf16>
    %74 = vector.shape_cast %73 : vector<16x16x288xbf16> to vector<256x288xbf16>
    %c0_14 = arith.constant 0 : index
    %c0_15 = arith.constant 0 : index
    %75 = vector.load %arg4[%c0_14, %c0_15] : memref<288x32xbf16, #tpu.memory_space<vmem>>, vector<288x32xbf16>
    %cst_16 = arith.constant dense<0.000000e+00> : vector<256x32xf32>
    %76 = tpu.matmul %74, %75, %cst_16 {dimension_numbers = #tpu.dot_dimension_numbers<[1], [0], [0], [1], [0, 0, 1, 1], [], []>} : vector<256x288xbf16>, vector<288x32xbf16>, vector<256x32xf32> -> vector<256x32xf32>
    %c0_17 = arith.constant 0 : index
    %c0_18 = arith.constant 0 : index
    %77 = vector.load %arg5[%c0_17, %c0_18] : memref<2x32xf32, #tpu.memory_space<vmem>>, vector<1x32xf32>
    %78 = vector.broadcast %77 : vector<1x32xf32> to vector<256x32xf32>
    %79 = arith.mulf %76, %78 : vector<256x32xf32>
    %c1_19 = arith.constant 1 : index
    %c0_20 = arith.constant 0 : index
    %80 = vector.load %arg5[%c1_19, %c0_20] : memref<2x32xf32, #tpu.memory_space<vmem>>, vector<1x32xf32>
    %81 = vector.broadcast %80 : vector<1x32xf32> to vector<256x32xf32>
    %82 = arith.addf %79, %81 : vector<256x32xf32>
    %c3 = arith.constant 3 : index
    %83 = memref.load %arg8[%c3] : memref<6xf32, #tpu.memory_space<smem>>
    %c4 = arith.constant 4 : index
    %84 = memref.load %arg8[%c4] : memref<6xf32, #tpu.memory_space<smem>>
    %c5 = arith.constant 5 : index
    %85 = memref.load %arg8[%c5] : memref<6xf32, #tpu.memory_space<smem>>
    %86 = vector.broadcast %83 : f32 to vector<256x32xf32>
    %87 = arith.mulf %86, %82 : vector<256x32xf32>
    %88 = vector.broadcast %84 : f32 to vector<256x32xf32>
    %89 = arith.addf %87, %88 : vector<256x32xf32>
    %cst_21 = arith.constant 0.000000e+00 : f32
    %90 = vector.broadcast %cst_21 : f32 to vector<256x32xf32>
    %91 = arith.subf %90, %89 : vector<256x32xf32>
    %cst_22 = arith.constant 2.000000e+01 : f32
    %92 = vector.broadcast %cst_22 : f32 to vector<256x32xf32>
    %93 = arith.minimumf %91, %92 : vector<256x32xf32>
    %94 = math.exp %93 : vector<256x32xf32>
    %95 = math.log1p %94 : vector<256x32xf32>
    %cst_23 = arith.constant 0.000000e+00 : f32
    %96 = vector.broadcast %cst_23 : f32 to vector<256x32xf32>
    %97 = arith.subf %96, %95 : vector<256x32xf32>
    %cst_24 = arith.constant 2.000000e+01 : f32
    %98 = vector.broadcast %cst_24 : f32 to vector<256x32xf32>
    %99 = arith.cmpf ogt, %91, %98 : vector<256x32xf32>
    %100 = arith.select %99, %89, %97 : vector<256x32xi1>, vector<256x32xf32>
    %101 = vector.broadcast %85 : f32 to vector<256x32xf32>
    %102 = arith.mulf %101, %100 : vector<256x32xf32>
    %103 = math.exp %102 : vector<256x32xf32>
    %104 = arith.mulf %103, %82 : vector<256x32xf32>
    %105 = arith.truncf %104 : vector<256x32xf32> to vector<256x32xbf16>
    %c0_25 = arith.constant 0 : index
    %c0_26 = arith.constant 0 : index
    %106 = vector.load %arg6[%c0_25, %c0_26] : memref<32x128xbf16, #tpu.memory_space<vmem>>, vector<32x128xbf16>
    %cst_27 = arith.constant dense<0.000000e+00> : vector<256x128xf32>
    %107 = tpu.matmul %105, %106, %cst_27 {dimension_numbers = #tpu.dot_dimension_numbers<[1], [0], [0], [1], [0, 0, 1, 1], [], []>} : vector<256x32xbf16>, vector<32x128xbf16>, vector<256x128xf32> -> vector<256x128xf32>
    %c0_28 = arith.constant 0 : index
    %c0_29 = arith.constant 0 : index
    %108 = vector.load %arg7[%c0_28, %c0_29] : memref<2x128xf32, #tpu.memory_space<vmem>>, vector<1x128xf32>
    %109 = vector.broadcast %108 : vector<1x128xf32> to vector<256x128xf32>
    %110 = arith.mulf %107, %109 : vector<256x128xf32>
    %c1_30 = arith.constant 1 : index
    %c0_31 = arith.constant 0 : index
    %111 = vector.load %arg7[%c1_30, %c0_31] : memref<2x128xf32, #tpu.memory_space<vmem>>, vector<1x128xf32>
    %112 = vector.broadcast %111 : vector<1x128xf32> to vector<256x128xf32>
    %113 = arith.addf %110, %112 : vector<256x128xf32>
    %cst_32 = arith.constant dense<0.000000e+00> : vector<128xf32>
    %114 = vector.multi_reduction <add>, %113, %cst_32 [0] : vector<256x128xf32> to vector<128xf32>
    %115 = vector.shape_cast %114 : vector<128xf32> to vector<1x128xf32>
    %c0_33 = arith.constant 0 : index
    %c0_34 = arith.constant 0 : index
    %c0_35 = arith.constant 0 : index
    %116 = vector.load %arg10[%c0_33, %c0_34, %c0_35] : memref<1x1x128xf32, #tpu.memory_space<vmem>>, vector<1x1x128xf32>
    %117 = vector.shape_cast %116 : vector<1x1x128xf32> to vector<1x128xf32>
    %118 = vector.shape_cast %115 : vector<1x128xf32> to vector<1x1x128xf32>
    tpu.vector_store %arg10[%c0_33, %c0_34, %c0_35], %118 {strides = array<i32>} : memref<1x1x128xf32, #tpu.memory_space<vmem>>, vector<1x1x128xf32>,
    %119 = arith.truncf %113 : vector<256x128xf32> to vector<256x128xbf16>
    %c0_36 = arith.constant 0 : index
    %c0_37 = arith.constant 0 : index
    %c0_38 = arith.constant 0 : index
    %120 = vector.load %arg9[%c0_36, %c0_37, %c0_38] : memref<1x256x128xbf16, #tpu.memory_space<vmem>>, vector<1x256x128xbf16>
    %121 = vector.shape_cast %120 : vector<1x256x128xbf16> to vector<256x128xbf16>
    %122 = vector.shape_cast %119 : vector<256x128xbf16> to vector<1x256x128xbf16>
    tpu.vector_store %arg9[%c0_36, %c0_37, %c0_38], %122 {strides = array<i32>} : memref<1x256x128xbf16, #tpu.memory_space<vmem>>, vector<1x256x128xbf16>,
    return
  }
  func.func @transform_0(%arg0: i32) -> (i32, i32, i32) {
    %c0_i32 = arith.constant 0 : i32
    %c0_i32_0 = arith.constant 0 : i32
    %c0_i32_1 = arith.constant 0 : i32
    return %arg0, %c0_i32, %c0_i32_0 : i32, i32, i32
  }
  func.func @transform_1(%arg0: i32) -> (i32, i32) {
    %c0_i32 = arith.constant 0 : i32
    %c0_i32_0 = arith.constant 0 : i32
    %c0_i32_1 = arith.constant 0 : i32
    return %c0_i32, %c0_i32_0 : i32, i32
  }
  func.func @transform_2(%arg0: i32) -> (i32, i32) {
    %c0_i32 = arith.constant 0 : i32
    %c0_i32_0 = arith.constant 0 : i32
    %c0_i32_1 = arith.constant 0 : i32
    return %c0_i32, %c0_i32_0 : i32, i32
  }
  func.func @transform_3(%arg0: i32) -> (i32, i32) {
    %c0_i32 = arith.constant 0 : i32
    %c0_i32_0 = arith.constant 0 : i32
    %c0_i32_1 = arith.constant 0 : i32
    return %c0_i32, %c0_i32_0 : i32, i32
  }
  func.func @transform_4(%arg0: i32) -> (i32, i32) {
    %c0_i32 = arith.constant 0 : i32
    %c0_i32_0 = arith.constant 0 : i32
    %c0_i32_1 = arith.constant 0 : i32
    return %c0_i32, %c0_i32_0 : i32, i32
  }
  func.func @transform_5(%arg0: i32) -> (i32, i32) {
    %c0_i32 = arith.constant 0 : i32
    %c0_i32_0 = arith.constant 0 : i32
    %c0_i32_1 = arith.constant 0 : i32
    return %c0_i32, %c0_i32_0 : i32, i32
  }
  func.func @transform_6(%arg0: i32) -> (i32, i32) {
    %c0_i32 = arith.constant 0 : i32
    %c0_i32_0 = arith.constant 0 : i32
    %c0_i32_1 = arith.constant 0 : i32
    return %c0_i32, %c0_i32_0 : i32, i32
  }
  func.func @transform_7(%arg0: i32) -> i32 {
    %c0_i32 = arith.constant 0 : i32
    %c0_i32_0 = arith.constant 0 : i32
    return %c0_i32 : i32
  }
  func.func @transform_8(%arg0: i32) -> (i32, i32, i32) {
    %c0_i32 = arith.constant 0 : i32
    %c0_i32_0 = arith.constant 0 : i32
    %c0_i32_1 = arith.constant 0 : i32
    return %arg0, %c0_i32, %c0_i32_0 : i32, i32, i32
  }
  func.func @transform_9(%arg0: i32) -> (i32, i32, i32) {
    %c0_i32 = arith.constant 0 : i32
    %c0_i32_0 = arith.constant 0 : i32
    %c0_i32_1 = arith.constant 0 : i32
    return %arg0, %c0_i32, %c0_i32_0 : i32, i32, i32
  }
}

module attributes {stable_mosaic.version = 11 : i64} {
  func.func @gate_residual_kernel(%arg0: i32, %arg1: i32, %arg2: memref<1x1x128xf32, #tpu.memory_space<vmem>>, %arg3: memref<2x128xf32, #tpu.memory_space<vmem>>, %arg4: memref<8x128xf32, #tpu.memory_space<vmem>>, %arg5: memref<8x128xf32, #tpu.memory_space<vmem>>, %arg6: memref<1x256x128xbf16, #tpu.memory_space<vmem>>, %arg7: memref<1x128x256xf32, #tpu.memory_space<vmem>>, %arg8: memref<7xf32, #tpu.memory_space<smem>>, %arg9: memref<1x128x256xf32, #tpu.memory_space<vmem>>) attributes {dimension_semantics = [#tpu.dimension_semantics<parallel>, #tpu.dimension_semantics<parallel>], iteration_bounds = array<i64: 2, 1>, scalar_prefetch = 0 : i64, scratch_operands = 0 : i64, tpu.core_type = #tpu.core_type<tc>, window_params = [{transform_indices = @transform_0, window_bounds = array<i64: 1, 1, 128>}, {pipeline_mode = #tpu.pipeline_mode<synchronous>, transform_indices = @transform_1, window_bounds = array<i64: 2, 128>}, {pipeline_mode = #tpu.pipeline_mode<synchronous>, transform_indices = @transform_2, window_bounds = array<i64: 8, 128>}, {pipeline_mode = #tpu.pipeline_mode<synchronous>, transform_indices = @transform_3, window_bounds = array<i64: 8, 128>}, {transform_indices = @transform_4, window_bounds = array<i64: 1, 256, 128>}, {transform_indices = @transform_5, window_bounds = array<i64: 1, 128, 256>}, {transform_indices = @transform_6, window_bounds = array<i64: 7>}, {transform_indices = @transform_7, window_bounds = array<i64: 1, 128, 256>}]} {
    %c0 = arith.constant 0 : index
    %c0_0 = arith.constant 0 : index
    %c0_1 = arith.constant 0 : index
    %0 = vector.load %arg2[%c0, %c0_0, %c0_1] : memref<1x1x128xf32, #tpu.memory_space<vmem>>, vector<1x1x128xf32>
    %1 = vector.shape_cast %0 : vector<1x1x128xf32> to vector<1x128xf32>
    %c0_2 = arith.constant 0 : index
    %2 = memref.load %arg8[%c0_2] : memref<7xf32, #tpu.memory_space<smem>>
    %3 = vector.broadcast %2 : f32 to vector<1x128xf32>
    %4 = arith.mulf %1, %3 : vector<1x128xf32>
    %cst = arith.constant dense<0.000000e+00> : vector<1xf32>
    %5 = vector.multi_reduction <add>, %4, %cst [1] : vector<1x128xf32> to vector<1xf32>
    %6 = vector.shape_cast %5 : vector<1xf32> to vector<1x1xf32>
    %cst_3 = arith.constant 1.280000e+02 : f32
    %7 = vector.broadcast %cst_3 : f32 to vector<1x1xf32>
    %8 = arith.divf %6, %7 : vector<1x1xf32>
    %9 = vector.broadcast %8 : vector<1x1xf32> to vector<1x128xf32>
    %10 = arith.subf %4, %9 : vector<1x128xf32>
    %11 = arith.mulf %10, %10 : vector<1x128xf32>
    %cst_4 = arith.constant dense<0.000000e+00> : vector<1xf32>
    %12 = vector.multi_reduction <add>, %11, %cst_4 [1] : vector<1x128xf32> to vector<1xf32>
    %13 = vector.shape_cast %12 : vector<1xf32> to vector<1x1xf32>
    %cst_5 = arith.constant 1.280000e+02 : f32
    %14 = vector.broadcast %cst_5 : f32 to vector<1x1xf32>
    %15 = arith.divf %13, %14 : vector<1x1xf32>
    %16 = vector.broadcast %8 : vector<1x1xf32> to vector<1x128xf32>
    %17 = arith.subf %4, %16 : vector<1x128xf32>
    %cst_6 = arith.constant 9.99999974E-6 : f32
    %18 = vector.broadcast %cst_6 : f32 to vector<1x1xf32>
    %19 = arith.addf %15, %18 : vector<1x1xf32>
    %20 = math.rsqrt %19 : vector<1x1xf32>
    %21 = vector.broadcast %20 : vector<1x1xf32> to vector<1x128xf32>
    %22 = arith.mulf %17, %21 : vector<1x128xf32>
    %c0_7 = arith.constant 0 : index
    %c0_8 = arith.constant 0 : index
    %23 = vector.load %arg3[%c0_7, %c0_8] : memref<2x128xf32, #tpu.memory_space<vmem>>, vector<1x128xf32>
    %24 = arith.mulf %22, %23 : vector<1x128xf32>
    %c1 = arith.constant 1 : index
    %c0_9 = arith.constant 0 : index
    %25 = vector.load %arg3[%c1, %c0_9] : memref<2x128xf32, #tpu.memory_space<vmem>>, vector<1x128xf32>
    %26 = arith.addf %24, %25 : vector<1x128xf32>
    %c0_10 = arith.constant 0 : index
    %c0_11 = arith.constant 0 : index
    %27 = vector.load %arg4[%c0_10, %c0_11] : memref<8x128xf32, #tpu.memory_space<vmem>>, vector<8x128xf32>
    %28 = vector.broadcast %26 : vector<1x128xf32> to vector<8x128xf32>
    %29 = arith.mulf %28, %27 : vector<8x128xf32>
    %cst_12 = arith.constant dense<0.000000e+00> : vector<8xf32>
    %30 = vector.multi_reduction <add>, %29, %cst_12 [1] : vector<8x128xf32> to vector<8xf32>
    %31 = vector.shape_cast %30 : vector<8xf32> to vector<8x1xf32>
    %cst_13 = arith.constant 0.000000e+00 : f32
    %32 = vector.broadcast %cst_13 : f32 to vector<8x1xf32>
    %33 = arith.maximumf %31, %32 : vector<8x1xf32>
    %c0_14 = arith.constant 0 : index
    %c0_15 = arith.constant 0 : index
    %34 = vector.load %arg5[%c0_14, %c0_15] : memref<8x128xf32, #tpu.memory_space<vmem>>, vector<8x128xf32>
    %35 = vector.broadcast %33 : vector<8x1xf32> to vector<8x128xf32>
    %36 = arith.mulf %35, %34 : vector<8x128xf32>
    %cst_16 = arith.constant dense<0.000000e+00> : vector<128xf32>
    %37 = vector.multi_reduction <add>, %36, %cst_16 [0] : vector<8x128xf32> to vector<128xf32>
    %38 = vector.shape_cast %37 : vector<128xf32> to vector<1x128xf32>
    %c1_17 = arith.constant 1 : index
    %39 = memref.load %arg8[%c1_17] : memref<7xf32, #tpu.memory_space<smem>>
    %c2 = arith.constant 2 : index
    %40 = memref.load %arg8[%c2] : memref<7xf32, #tpu.memory_space<smem>>
    %c3 = arith.constant 3 : index
    %41 = memref.load %arg8[%c3] : memref<7xf32, #tpu.memory_space<smem>>
    %42 = vector.broadcast %39 : f32 to vector<1x128xf32>
    %43 = arith.mulf %42, %38 : vector<1x128xf32>
    %44 = vector.broadcast %40 : f32 to vector<1x128xf32>
    %45 = arith.addf %43, %44 : vector<1x128xf32>
    %cst_18 = arith.constant 0.000000e+00 : f32
    %46 = vector.broadcast %cst_18 : f32 to vector<1x128xf32>
    %47 = arith.subf %46, %45 : vector<1x128xf32>
    %cst_19 = arith.constant 2.000000e+01 : f32
    %48 = vector.broadcast %cst_19 : f32 to vector<1x128xf32>
    %49 = arith.minimumf %47, %48 : vector<1x128xf32>
    %50 = math.exp %49 : vector<1x128xf32>
    %51 = math.log1p %50 : vector<1x128xf32>
    %cst_20 = arith.constant 0.000000e+00 : f32
    %52 = vector.broadcast %cst_20 : f32 to vector<1x128xf32>
    %53 = arith.subf %52, %51 : vector<1x128xf32>
    %cst_21 = arith.constant 2.000000e+01 : f32
    %54 = vector.broadcast %cst_21 : f32 to vector<1x128xf32>
    %55 = arith.cmpf ogt, %47, %54 : vector<1x128xf32>
    %56 = arith.select %55, %45, %53 : vector<1x128xi1>, vector<1x128xf32>
    %57 = vector.broadcast %41 : f32 to vector<1x128xf32>
    %58 = arith.mulf %57, %56 : vector<1x128xf32>
    %59 = math.exp %58 : vector<1x128xf32>
    %c0_22 = arith.constant 0 : index
    %c0_23 = arith.constant 0 : index
    %c0_24 = arith.constant 0 : index
    %60 = vector.load %arg7[%c0_22, %c0_23, %c0_24] : memref<1x128x256xf32, #tpu.memory_space<vmem>>, vector<1x128x256xf32>
    %61 = vector.shape_cast %60 : vector<1x128x256xf32> to vector<128x256xf32>
    %62 = tpu.transpose %61, [1, 0] : vector<128x256xf32> -> vector<256x128xf32>
    %c0_25 = arith.constant 0 : index
    %c0_26 = arith.constant 0 : index
    %c0_27 = arith.constant 0 : index
    %63 = vector.load %arg6[%c0_25, %c0_26, %c0_27] : memref<1x256x128xbf16, #tpu.memory_space<vmem>>, vector<1x256x128xbf16>
    %64 = vector.shape_cast %63 : vector<1x256x128xbf16> to vector<256x128xbf16>
    %65 = arith.extf %64 : vector<256x128xbf16> to vector<256x128xf32>
    %66 = vector.broadcast %59 : vector<1x128xf32> to vector<256x128xf32>
    %67 = arith.mulf %65, %66 : vector<256x128xf32>
    %68 = arith.addf %67, %62 : vector<256x128xf32>
    %c4 = arith.constant 4 : index
    %69 = memref.load %arg8[%c4] : memref<7xf32, #tpu.memory_space<smem>>
    %c5 = arith.constant 5 : index
    %70 = memref.load %arg8[%c5] : memref<7xf32, #tpu.memory_space<smem>>
    %c6 = arith.constant 6 : index
    %71 = memref.load %arg8[%c6] : memref<7xf32, #tpu.memory_space<smem>>
    %72 = vector.broadcast %69 : f32 to vector<256x128xf32>
    %73 = arith.mulf %72, %68 : vector<256x128xf32>
    %74 = vector.broadcast %70 : f32 to vector<256x128xf32>
    %75 = arith.addf %73, %74 : vector<256x128xf32>
    %cst_28 = arith.constant 0.000000e+00 : f32
    %76 = vector.broadcast %cst_28 : f32 to vector<256x128xf32>
    %77 = arith.subf %76, %75 : vector<256x128xf32>
    %cst_29 = arith.constant 2.000000e+01 : f32
    %78 = vector.broadcast %cst_29 : f32 to vector<256x128xf32>
    %79 = arith.minimumf %77, %78 : vector<256x128xf32>
    %80 = math.exp %79 : vector<256x128xf32>
    %81 = math.log1p %80 : vector<256x128xf32>
    %cst_30 = arith.constant 0.000000e+00 : f32
    %82 = vector.broadcast %cst_30 : f32 to vector<256x128xf32>
    %83 = arith.subf %82, %81 : vector<256x128xf32>
    %cst_31 = arith.constant 2.000000e+01 : f32
    %84 = vector.broadcast %cst_31 : f32 to vector<256x128xf32>
    %85 = arith.cmpf ogt, %77, %84 : vector<256x128xf32>
    %86 = arith.select %85, %75, %83 : vector<256x128xi1>, vector<256x128xf32>
    %87 = vector.broadcast %71 : f32 to vector<256x128xf32>
    %88 = arith.mulf %87, %86 : vector<256x128xf32>
    %89 = math.exp %88 : vector<256x128xf32>
    %90 = arith.mulf %89, %68 : vector<256x128xf32>
    %91 = tpu.transpose %90, [1, 0] : vector<256x128xf32> -> vector<128x256xf32>
    %c0_32 = arith.constant 0 : index
    %c0_33 = arith.constant 0 : index
    %c0_34 = arith.constant 0 : index
    %92 = vector.load %arg9[%c0_32, %c0_33, %c0_34] : memref<1x128x256xf32, #tpu.memory_space<vmem>>, vector<1x128x256xf32>
    %93 = vector.shape_cast %92 : vector<1x128x256xf32> to vector<128x256xf32>
    %94 = vector.shape_cast %91 : vector<128x256xf32> to vector<1x128x256xf32>
    tpu.vector_store %arg9[%c0_32, %c0_33, %c0_34], %94 {strides = array<i32>} : memref<1x128x256xf32, #tpu.memory_space<vmem>>, vector<1x128x256xf32>,
    return
  }
  func.func @transform_0(%arg0: i32, %arg1: i32) -> (i32, i32, i32) {
    %c0_i32 = arith.constant 0 : i32
    %c0_i32_0 = arith.constant 0 : i32
    %c0_i32_1 = arith.constant 0 : i32
    return %arg0, %c0_i32, %c0_i32_0 : i32, i32, i32
  }
  func.func @transform_1(%arg0: i32, %arg1: i32) -> (i32, i32) {
    %c0_i32 = arith.constant 0 : i32
    %c0_i32_0 = arith.constant 0 : i32
    %c0_i32_1 = arith.constant 0 : i32
    return %c0_i32, %c0_i32_0 : i32, i32
  }
  func.func @transform_2(%arg0: i32, %arg1: i32) -> (i32, i32) {
    %c0_i32 = arith.constant 0 : i32
    %c0_i32_0 = arith.constant 0 : i32
    %c0_i32_1 = arith.constant 0 : i32
    return %c0_i32, %c0_i32_0 : i32, i32
  }
  func.func @transform_3(%arg0: i32, %arg1: i32) -> (i32, i32) {
    %c0_i32 = arith.constant 0 : i32
    %c0_i32_0 = arith.constant 0 : i32
    %c0_i32_1 = arith.constant 0 : i32
    return %c0_i32, %c0_i32_0 : i32, i32
  }
  func.func @transform_4(%arg0: i32, %arg1: i32) -> (i32, i32, i32) {
    %c0_i32 = arith.constant 0 : i32
    %c0_i32_0 = arith.constant 0 : i32
    return %arg0, %arg1, %c0_i32 : i32, i32, i32
  }
  func.func @transform_5(%arg0: i32, %arg1: i32) -> (i32, i32, i32) {
    %c0_i32 = arith.constant 0 : i32
    %c0_i32_0 = arith.constant 0 : i32
    return %arg0, %c0_i32, %arg1 : i32, i32, i32
  }
  func.func @transform_6(%arg0: i32, %arg1: i32) -> i32 {
    %c0_i32 = arith.constant 0 : i32
    %c0_i32_0 = arith.constant 0 : i32
    return %c0_i32 : i32
  }
  func.func @transform_7(%arg0: i32, %arg1: i32) -> (i32, i32, i32) {
    %c0_i32 = arith.constant 0 : i32
    %c0_i32_0 = arith.constant 0 : i32
    return %arg0, %c0_i32, %arg1 : i32, i32, i32
  }
}

</mosaic_0001>

<llo_original>
// kernel: se_bottleneck_forward.3
$region0: #{se_bottleneck_forward.3}
  #allocation0 [shape = 'u32[]', space=smem, size = 0x4, offset = 0x4, fixed_abs, tag = 'smem constant byte address 0x4 - core index']
  #allocation1 [shape = 'u32[144,128]{1,0:T(1,128)}', space=vmem, size = 0x12000, scoped, tag = 'internal scratch']
  %s0 = inlined_call_operand.hbm [shape: f32[2,1,128], index: 0, kind: input, shape index: {}]
  %s1 = inlined_call_operand.hbm [shape: f32[2,128], index: 1, kind: input, shape index: {}]
  %s2 = inlined_call_operand.hbm [shape: f32[8,128], index: 2, kind: input, shape index: {}]
  %s3 = inlined_call_operand.hbm [shape: f32[8,128], index: 3, kind: input, shape index: {}]
  %s4 = inlined_call_operand.hbm [shape: bf16[2,256,128], index: 4, kind: input, shape index: {}]
  %s5 = inlined_call_operand.hbm [shape: f32[2,128,256], index: 5, kind: input, shape index: {}]
  %s6 = inlined_call_operand.hbm [shape: f32[7], index: 6, kind: input, shape index: {}]
  %s7 = inlined_call_operand.hbm [shape: f32[2,128,256], index: 7, kind: output, shape index: {}]
  %s8 = sld [smem:[#allocation0]]
  $region89: #{se_bottleneck_forward.3} parent=0
    _
  %s10 = ssub.s32 1, %s8
  %s11 = scalar_select 0, %s10, %s8
  $region1: #{se_bottleneck_forward.3} parent=0
    #allocation2 [shape = 'u8[1024]{0}', space=vmem, size = 0x400, scoped, tag = 'input window, operand 0']
    #allocation3 [shape = 's32[2]{0}', space=sflag, size = 0x8, scoped, tag = 'scoped memory for se_bottleneck_forward.3']
    #allocation4 [shape = 's32[2]{0}', space=sflag, size = 0x8, scoped, tag = 'scoped memory for se_bottleneck_forward.3']
    #allocation5 [shape = 's32[2]{0}', space=sflag, size = 0x8, scoped, tag = 'scoped memory for se_bottleneck_forward.3']
    #allocation6 [shape = 'u8[1024]{0}', space=vmem, size = 0x400, scoped, tag = 'input window, operand 1, single buffered']
    #allocation7 [shape = 's32[1]{0}', space=sflag, size = 0x4, scoped, tag = 'scoped memory for se_bottleneck_forward.3']
    #allocation8 [shape = 'u8[4096]{0}', space=vmem, size = 0x1000, scoped, tag = 'input window, operand 2, single buffered']
    #allocation9 [shape = 'u8[4096]{0}', space=vmem, size = 0x1000, scoped, tag = 'input window, operand 3, single buffered']
    #allocation10 [shape = 's32[1]{0}', space=sflag, size = 0x4, scoped, tag = 'scoped memory for se_bottleneck_forward.3']
    #allocation11 [shape = 'u8[131072]{0}', space=vmem, size = 0x20000, scoped, tag = 'input window, operand 4']
    #allocation12 [shape = 'u8[262144]{0}', space=vmem, size = 0x40000, scoped, tag = 'input window, operand 5']
    #allocation13 [shape = 'u8[512]{0}', space=smem, size = 0x200, scoped, tag = 'input window, operand 6, single buffered']
    #allocation14 [shape = 'u8[262144]{0}', space=vmem, size = 0x40000, scoped, tag = 'output window, operand 0']
    %12 = vsyncpa [#allocation3], 0
    %s13 = scalar_lea.sflag [#allocation3], 1
    %14 = vsyncpa %s13, 0
    %15 = vsyncpa [#allocation7], 0
    %16 = vsyncpa [#allocation10], 0
    %17 = vsyncpa [#allocation5], 0
    %18 = vsyncpa [#allocation4], 0
    %s19 = scalar_lea.sflag [#allocation4], 1
    %20 = vsyncpa %s19, 0
    loop: start=0, step=1, limit=4
    $region2: #{se_bottleneck_forward.3} parent=1 // loop_pre_header
      _
    $region3: #{se_bottleneck_forward.3} parent=1 // loop_header
      %s22 = sphi 0, %s26
      %p23 = scmp.ge.s32.totalorder %s22, 4
      %s29 = sphi 0, %s41
      %s30 = sphi 0, %s37
      %s31 = sphi 0, %s29
      %s32 = sphi 0, %s30
      %s33 = sphi 0, %s31
      %s34 = sphi 0, %s32
      %s44 = sphi 0, %s46
      %s47 = sphi 0, %s44
      %s48 = sphi 0, %s47
      %s64 = sphi 0, %s48
      %s68 = sphi 0, %s68
      %s70 = sphi 0, %s68
      %s71 = sphi 0, %s70
      %s85 = sphi 0, %s71
      %s89 = sphi 0, %s89
      %s91 = sphi 0, %s89
      %s92 = sphi 0, %s91
      %s106 = sphi 0, %s92
      %s110 = sphi 0, %s110
      %s112 = sphi 0, %s110
      %s113 = sphi 0, %s112
      %s127 = sphi 0, %s113
      %s135 = sphi 0, %s137
      %s138 = sphi 0, %s135
      %s139 = sphi 0, %s138
      %s155 = sphi 0, %s139
      %s163 = sphi 0, %s165
      %s166 = sphi 0, %s163
      %s167 = sphi 0, %s166
      %s183 = sphi 0, %s167
      %s187 = sphi 0, %s187
      %s189 = sphi 0, %s187
      %s190 = sphi 0, %s189
      %s204 = sphi 0, %s190
      %s212 = sphi 0, %s214
      %s215 = sphi 0, %s212
      %s216 = sphi 0, %s215
      %s232 = sphi 0, %s216
    $region4: #{se_bottleneck_forward.3} parent=1 // loop_header_branch
      %25 = sbr.rel (%p23) target = $region8
    $region5: #{se_bottleneck_forward.3} parent=1 // loop_body
      %s27 = ssub.s32 %s22, 1
      %s28 = ssub.s32 %s22, 2
      %s35 = sadd.s32 1, %s30
      %p36 = scmp.ge.s32.totalorder %s35, 1
      %s37 = scalar_select %p36, 0, %s35
      %s38 = sadd.s32 1, %s29
      %s39 = scalar_select %p36, %s38, %s29
      %p40 = scmp.ge.s32.totalorder %s39, 2
      %s41 = scalar_select %p40, 0, %s39
      %s42 = ssub.s32 %s29, %s41
      %p43 = scmp.eq.s32.totalorder %s42, 0
      %s45 = sadd.s32 %s44, 1
      %s46 = scalar_select %p43, %s44, %s45
      %p49 = pneg %p43
      %p50 = scmp.eq.s32.totalorder %s22, 1
      %p51 = por %p49, %p50
      %p52 = scmp.ne.s32.totalorder %s44, %s47
      %p53 = scmp.eq.s32.totalorder %s22, 0
      %p54 = por %p52, %p53
      %p55 = scmp.ne.s32.totalorder %s44, %s47
      %p56 = scmp.eq.s32.totalorder %s27, 1
      %p57 = por %p55, %p56
      %p58 = scmp.ne.s32.totalorder %s47, %s48
      %p59 = scmp.eq.s32.totalorder %s27, 0
      %p60 = por %p58, %p59
      %p61 = scmp.ne.s32.totalorder %s47, %s48
      %p62 = scmp.eq.s32.totalorder %s28, 1
      %p63 = por %p61, %p62
      %p65 = scmp.ne.s32.totalorder %s48, %s64
      %p66 = scmp.eq.s32.totalorder %s28, 0
      %p67 = por %p65, %p66
      %s69 = sadd.s32 %s68, 1
      %p72 = scmp.eq.s32.totalorder %s22, 1
      %p73 = scmp.ne.s32.totalorder %s68, %s70
      %p74 = scmp.eq.s32.totalorder %s22, 0
      %p75 = por %p73, %p74
      %p76 = scmp.ne.s32.totalorder %s68, %s70
      %p77 = scmp.eq.s32.totalorder %s27, 1
      %p78 = por %p76, %p77
      %p79 = scmp.ne.s32.totalorder %s70, %s71
      %p80 = scmp.eq.s32.totalorder %s27, 0
      %p81 = por %p79, %p80
      %p82 = scmp.ne.s32.totalorder %s70, %s71
      %p83 = scmp.eq.s32.totalorder %s28, 1
      %p84 = por %p82, %p83
      %p86 = scmp.ne.s32.totalorder %s71, %s85
      %p87 = scmp.eq.s32.totalorder %s28, 0
      %p88 = por %p86, %p87
      %s90 = sadd.s32 %s89, 1
      %p93 = scmp.eq.s32.totalorder %s22, 1
      %p94 = scmp.ne.s32.totalorder %s89, %s91
      %p95 = scmp.eq.s32.totalorder %s22, 0
      %p96 = por %p94, %p95
      %p97 = scmp.ne.s32.totalorder %s89, %s91
      %p98 = scmp.eq.s32.totalorder %s27, 1
      %p99 = por %p97, %p98
      %p100 = scmp.ne.s32.totalorder %s91, %s92
      %p101 = scmp.eq.s32.totalorder %s27, 0
      %p102 = por %p100, %p101
      %p103 = scmp.ne.s32.totalorder %s91, %s92
      %p104 = scmp.eq.s32.totalorder %s28, 1
      %p105 = por %p103, %p104
      %p107 = scmp.ne.s32.totalorder %s92, %s106
      %p108 = scmp.eq.s32.totalorder %s28, 0
      %p109 = por %p107, %p108
      %s111 = sadd.s32 %s110, 1
      %p114 = scmp.eq.s32.totalorder %s22, 1
      %p115 = scmp.ne.s32.totalorder %s110, %s112
      %p116 = scmp.eq.s32.totalorder %s22, 0
      %p117 = por %p115, %p116
      %p118 = scmp.ne.s32.totalorder %s110, %s112
      %p119 = scmp.eq.s32.totalorder %s27, 1
      %p120 = por %p118, %p119
      %p121 = scmp.ne.s32.totalorder %s112, %s113
      %p122 = scmp.eq.s32.totalorder %s27, 0
      %p123 = por %p121, %p122
      %p124 = scmp.ne.s32.totalorder %s112, %s113
      %p125 = scmp.eq.s32.totalorder %s28, 1
      %p126 = por %p124, %p125
      %p128 = scmp.ne.s32.totalorder %s113, %s127
      %p129 = scmp.eq.s32.totalorder %s28, 0
      %p130 = por %p128, %p129
      %s131 = ssub.s32 %s29, %s41
      %s132 = ssub.s32 %s30, %s37
      %s133 = sor.u32 %s131, %s132
      %p134 = scmp.eq.s32.totalorder %s133, 0
      %s136 = sadd.s32 %s135, 1
      %s137 = scalar_select %p134, %s135, %s136
      %p140 = pneg %p134
      %p141 = scmp.eq.s32.totalorder %s22, 1
      %p142 = por %p140, %p141
      %p143 = scmp.ne.s32.totalorder %s135, %s138
      %p144 = scmp.eq.s32.totalorder %s22, 0
      %p145 = por %p143, %p144
      %p146 = scmp.ne.s32.totalorder %s135, %s138
      %p147 = scmp.eq.s32.totalorder %s27, 1
      %p148 = por %p146, %p147
      %p149 = scmp.ne.s32.totalorder %s138, %s139
      %p150 = scmp.eq.s32.totalorder %s27, 0
      %p151 = por %p149, %p150
      %p152 = scmp.ne.s32.totalorder %s138, %s139
      %p153 = scmp.eq.s32.totalorder %s28, 1
      %p154 = por %p152, %p153
      %p156 = scmp.ne.s32.totalorder %s139, %s155
      %p157 = scmp.eq.s32.totalorder %s28, 0
      %p158 = por %p156, %p157
      %s159 = ssub.s32 %s29, %s41
      %s160 = ssub.s32 %s30, %s37
      %s161 = sor.u32 %s159, %s160
      %p162 = scmp.eq.s32.totalorder %s161, 0
      %s164 = sadd.s32 %s163, 1
      %s165 = scalar_select %p162, %s163, %s164
      %p168 = pneg %p162
      %p169 = scmp.eq.s32.totalorder %s22, 1
      %p170 = por %p168, %p169
      %p171 = scmp.ne.s32.totalorder %s163, %s166
      %p172 = scmp.eq.s32.totalorder %s22, 0
      %p173 = por %p171, %p172
      %p174 = scmp.ne.s32.totalorder %s163, %s166
      %p175 = scmp.eq.s32.totalorder %s27, 1
      %p176 = por %p174, %p175
      %p177 = scmp.ne.s32.totalorder %s166, %s167
      %p178 = scmp.eq.s32.totalorder %s27, 0
      %p179 = por %p177, %p178
      %p180 = scmp.ne.s32.totalorder %s166, %s167
      %p181 = scmp.eq.s32.totalorder %s28, 1
      %p182 = por %p180, %p181
      %p184 = scmp.ne.s32.totalorder %s167, %s183
      %p185 = scmp.eq.s32.totalorder %s28, 0
      %p186 = por %p184, %p185
      %s188 = sadd.s32 %s187, 1
      %p191 = scmp.eq.s32.totalorder %s22, 1
      %p192 = scmp.ne.s32.totalorder %s187, %s189
      %p193 = scmp.eq.s32.totalorder %s22, 0
      %p194 = por %p192, %p193
      %p195 = scmp.ne.s32.totalorder %s187, %s189
      %p196 = scmp.eq.s32.totalorder %s27, 1
      %p197 = por %p195, %p196
      %p198 = scmp.ne.s32.totalorder %s189, %s190
      %p199 = scmp.eq.s32.totalorder %s27, 0
      %p200 = por %p198, %p199
      %p201 = scmp.ne.s32.totalorder %s189, %s190
      %p202 = scmp.eq.s32.totalorder %s28, 1
      %p203 = por %p201, %p202
      %p205 = scmp.ne.s32.totalorder %s190, %s204
      %p206 = scmp.eq.s32.totalorder %s28, 0
      %p207 = por %p205, %p206
      %s208 = ssub.s32 %s29, %s41
      %s209 = ssub.s32 %s30, %s37
      %s210 = sor.u32 %s208, %s209
      %p211 = scmp.eq.s32.totalorder %s210, 0
      %s213 = sadd.s32 %s212, 1
      %s214 = scalar_select %p211, %s212, %s213
      %p217 = pneg %p211
      %p218 = scmp.eq.s32.totalorder %s22, 1
      %p219 = por %p217, %p218
      %p220 = scmp.ne.s32.totalorder %s212, %s215
      %p221 = scmp.eq.s32.totalorder %s22, 0
      %p222 = por %p220, %p221
      %p223 = scmp.ne.s32.totalorder %s212, %s215
      %p224 = scmp.eq.s32.totalorder %s27, 1
      %p225 = por %p223, %p224
      %p226 = scmp.ne.s32.totalorder %s215, %s216
      %p227 = scmp.eq.s32.totalorder %s27, 0
      %p228 = por %p226, %p227
      %p229 = scmp.ne.s32.totalorder %s215, %s216
      %p230 = scmp.eq.s32.totalorder %s28, 1
      %p231 = por %p229, %p230
      %p233 = scmp.ne.s32.totalorder %s216, %s232
      %p234 = scmp.eq.s32.totalorder %s28, 0
      %p235 = por %p233, %p234
      %p236 = scmp.le.s32.totalorder 1, %s22
      %p237 = scmp.lt.s32.totalorder %s22, 3
      %p238 = pnand %p236, %p237
      %p239 = pneg %p238
      // Predicated region
      $region9: #{se_bottleneck_forward.3} parent=5 // pred_check
        _
      $region10: #{se_bottleneck_forward.3} parent=5 // pred_check_branch
        %241 = sbr.rel (%p238) target = $region12
      $region11: #{se_bottleneck_forward.3} parent=5 // pred_region
        %s242 = ssub.s32 %s22, 1
        // Predicated region
        $region13: #{se_bottleneck_forward.3} parent=11 // pred_check
          %p243 = pneg %p81
        $region14: #{se_bottleneck_forward.3} parent=11 // pred_check_branch
          %245 = sbr.rel (%p243) target = $region16
        $region15: #{se_bottleneck_forward.3} parent=11 // pred_region
          %s247 = ssub.s32 32, 32
          %248 = vsyncadd [#allocation7], %s247
          %s250 = sshll.u32 [#allocation6], 4
          %s251 = int_to_ptr.vmem [resolvable:$true] %s250
          %253 = dma.hbm_to_vmem [thread:$0]  %s1, 32, %s251, [#allocation7]
        $region16: #{se_bottleneck_forward.3} parent=11 // pred_fallthru
          _
        // Predicated region
        $region17: #{se_bottleneck_forward.3} parent=11 // pred_check
          %p254 = pneg %p102
        $region18: #{se_bottleneck_forward.3} parent=11 // pred_check_branch
          %256 = sbr.rel (%p254) target = $region20
        $region19: #{se_bottleneck_forward.3} parent=11 // pred_region
          %s258 = ssub.s32 128, 128
          %259 = vsyncadd [#allocation7], %s258
          %s261 = sshll.u32 [#allocation8], 4
          %s262 = int_to_ptr.vmem [resolvable:$true] %s261
          %264 = dma.hbm_to_vmem [thread:$0]  %s2, 128, %s262, [#allocation7]
        $region20: #{se_bottleneck_forward.3} parent=11 // pred_fallthru
          _
        // Predicated region
        $region21: #{se_bottleneck_forward.3} parent=11 // pred_check
          %p265 = pneg %p123
        $region22: #{se_bottleneck_forward.3} parent=11 // pred_check_branch
          %267 = sbr.rel (%p265) target = $region24
        $region23: #{se_bottleneck_forward.3} parent=11 // pred_region
          %s269 = ssub.s32 128, 128
          %270 = vsyncadd [#allocation10], %s269
          %s272 = sshll.u32 [#allocation9], 4
          %s273 = int_to_ptr.vmem [resolvable:$true] %s272
          %275 = dma.hbm_to_vmem [thread:$0]  %s3, 128, %s273, [#allocation10]
        $region24: #{se_bottleneck_forward.3} parent=11 // pred_fallthru
          _
        // Predicated region
        $region25: #{se_bottleneck_forward.3} parent=11 // pred_check
          %p276 = pneg %p200
        $region26: #{se_bottleneck_forward.3} parent=11 // pred_check_branch
          %278 = sbr.rel (%p276) target = $region28
        $region27: #{se_bottleneck_forward.3} parent=11 // pred_region
          %s280 = ssub.s32 16, 16
          %281 = vsyncadd [#allocation5], %s280
          %284 = dma.hbm_to_smem %s6, 16, [#allocation13], [#allocation5]
        $region28: #{se_bottleneck_forward.3} parent=11 // pred_fallthru
          _
      $region12: #{se_bottleneck_forward.3} parent=5 // pred_fallthru
        _
      %p285 = scmp.lt.s32.totalorder %s22, 2
      // Predicated region
      $region29: #{se_bottleneck_forward.3} parent=5 // pred_check
        %p286 = pneg %p285
      $region30: #{se_bottleneck_forward.3} parent=5 // pred_check_branch
        %288 = sbr.rel (%p286) target = $region32
      $region31: #{se_bottleneck_forward.3} parent=5 // pred_region
        // Predicated region
        $region33: #{se_bottleneck_forward.3} parent=31 // pred_check
          %p289 = pneg %p54
        $region34: #{se_bottleneck_forward.3} parent=31 // pred_check_branch
          %291 = sbr.rel (%p289) target = $region36
        $region35: #{se_bottleneck_forward.3} parent=31 // pred_region
          %s292 = sand.u32 %s22, 1
          %s293 = scalar_lea.sflag [#allocation3], %s292
          %s294 = sand.u32 %s44, 1
          %s295 = scalar_lea.vmem [#allocation2], %s294
          %s297 = ssub.s32 16, 16
          %298 = vsyncadd %s293, %s297
          %s299 = smul.addr %s29, 16
          %s300 = scalar_lea.hbm %s0, %s299
          %s302 = sshll.u32 %s295, 4
          %s303 = int_to_ptr.vmem [resolvable:$true] %s302
          %305 = dma.hbm_to_vmem [thread:$0]  %s300, 16, %s303, %s293
        $region36: #{se_bottleneck_forward.3} parent=31 // pred_fallthru
          _
        // Predicated region
        $region37: #{se_bottleneck_forward.3} parent=31 // pred_check
          %p306 = pneg %p145
        $region38: #{se_bottleneck_forward.3} parent=31 // pred_check_branch
          %308 = sbr.rel (%p306) target = $region40
        $region39: #{se_bottleneck_forward.3} parent=31 // pred_region
          %s309 = sand.u32 %s22, 1
          %s310 = scalar_lea.sflag [#allocation3], %s309
          %s311 = sand.u32 %s135, 1
          %s312 = smul.addr %s311, 128
          %s313 = scalar_lea.vmem [#allocation11], %s312
          %s314 = smul.u32 32, %s30
          %s316 = ssub.s32 2048, 2048
          %317 = vsyncadd %s310, %s316
          %s318 = smul.addr %s29, 32
          %s319 = sadd.s32 %s314, %s318
          %s320 = smul.addr %s319, 64
          %s321 = scalar_lea.hbm %s4, %s320
          %s322 = sshll.u32 %s313, 4
          %s323 = int_to_ptr.vmem [resolvable:$true] %s322
          %328 = dma.hbm_to_vmem [thread:$0]  %s321, 2048, %s323, %s310, 64, 64, 4
        $region40: #{se_bottleneck_forward.3} parent=31 // pred_fallthru
          _
        // Predicated region
        $region41: #{se_bottleneck_forward.3} parent=31 // pred_check
          %p329 = pneg %p173
        $region42: #{se_bottleneck_forward.3} parent=31 // pred_check_branch
          %331 = sbr.rel (%p329) target = $region44
        $region43: #{se_bottleneck_forward.3} parent=31 // pred_region
          %s332 = sand.u32 %s22, 1
          %s333 = scalar_lea.sflag [#allocation3], %s332
          %s334 = sand.u32 %s163, 1
          %s335 = smul.addr %s334, 256
          %s336 = scalar_lea.vmem [#allocation12], %s335
          %s337 = smul.u32 2, %s30
          %s339 = ssub.s32 4096, 4096
          %340 = vsyncadd %s333, %s339
          %s341 = smul.addr %s29, 32
          %s342 = sadd.s32 %s337, %s341
          %s343 = smul.addr %s342, 128
          %s344 = scalar_lea.hbm %s5, %s343
          %s345 = sshll.u32 %s336, 4
          %s346 = int_to_ptr.vmem [resolvable:$true] %s345
          %351 = dma.hbm_to_vmem [thread:$0]  %s344, 4096, %s346, %s333, 256, 256, 16
        $region44: #{se_bottleneck_forward.3} parent=31 // pred_fallthru
          _
      $region32: #{se_bottleneck_forward.3} parent=5 // pred_fallthru
        _
      %p352 = scmp.le.s32.totalorder 1, %s22
      %p353 = scmp.lt.s32.totalorder %s22, 3
      %p354 = pnand %p352, %p353
      %p355 = pneg %p354
      // Predicated region
      $region45: #{se_bottleneck_forward.3} parent=5 // pred_check
        _
      $region46: #{se_bottleneck_forward.3} parent=5 // pred_check_branch
        %357 = sbr.rel (%p354) target = $region48
      $region47: #{se_bottleneck_forward.3} parent=5 // pred_region
        %s358 = ssub.s32 %s22, 1
        %s359 = sand.u32 %s27, 1
        %s360 = scalar_lea.sflag [#allocation3], %s359
        %s361 = sand.u32 %s47, 1
        %s362 = scalar_lea.vmem [#allocation2], %s361
        // Predicated region
        $region49: #{se_bottleneck_forward.3} parent=47 // pred_check
          %p363 = pneg %p60
        $region50: #{se_bottleneck_forward.3} parent=47 // pred_check_branch
          %365 = sbr.rel (%p363) target = $region52
        $region51: #{se_bottleneck_forward.3} parent=47 // pred_region
          %366 = dma.done %s360, 16
        $region52: #{se_bottleneck_forward.3} parent=47 // pred_fallthru
          _
        // Predicated region
        $region53: #{se_bottleneck_forward.3} parent=47 // pred_check
          %p367 = pneg %p81
        $region54: #{se_bottleneck_forward.3} parent=47 // pred_check_branch
          %369 = sbr.rel (%p367) target = $region56
        $region55: #{se_bottleneck_forward.3} parent=47 // pred_region
          %370 = dma.done [#allocation7], 32
        $region56: #{se_bottleneck_forward.3} parent=47 // pred_fallthru
          _
        // Predicated region
        $region57: #{se_bottleneck_forward.3} parent=47 // pred_check
          %p371 = pneg %p102
        $region58: #{se_bottleneck_forward.3} parent=47 // pred_check_branch
          %373 = sbr.rel (%p371) target = $region60
        $region59: #{se_bottleneck_forward.3} parent=47 // pred_region
          %374 = dma.done [#allocation7], 128
        $region60: #{se_bottleneck_forward.3} parent=47 // pred_fallthru
          _
        // Predicated region
        $region61: #{se_bottleneck_forward.3} parent=47 // pred_check
          %p375 = pneg %p123
        $region62: #{se_bottleneck_forward.3} parent=47 // pred_check_branch
          %377 = sbr.rel (%p375) target = $region64
        $region63: #{se_bottleneck_forward.3} parent=47 // pred_region
          %378 = dma.done [#allocation10], 128
        $region64: #{se_bottleneck_forward.3} parent=47 // pred_fallthru
          _
        %s379 = sand.u32 %s27, 1
        %s380 = scalar_lea.sflag [#allocation3], %s379
        %s381 = sand.u32 %s138, 1
        %s382 = smul.addr %s381, 128
        %s383 = scalar_lea.vmem [#allocation11], %s382
        // Predicated region
        $region65: #{se_bottleneck_forward.3} parent=47 // pred_check
          %p384 = pneg %p151
        $region66: #{se_bottleneck_forward.3} parent=47 // pred_check_branch
          %386 = sbr.rel (%p384) target = $region68
        $region67: #{se_bottleneck_forward.3} parent=47 // pred_region
          %387 = dma.done %s380, 2048
        $region68: #{se_bottleneck_forward.3} parent=47 // pred_fallthru
          _
        %s388 = sand.u32 %s27, 1
        %s389 = scalar_lea.sflag [#allocation3], %s388
        %s390 = sand.u32 %s166, 1
        %s391 = smul.addr %s390, 256
        %s392 = scalar_lea.vmem [#allocation12], %s391
        // Predicated region
        $region69: #{se_bottleneck_forward.3} parent=47 // pred_check
          %p393 = pneg %p179
        $region70: #{se_bottleneck_forward.3} parent=47 // pred_check_branch
          %395 = sbr.rel (%p393) target = $region72
        $region71: #{se_bottleneck_forward.3} parent=47 // pred_region
          %396 = dma.done %s389, 4096
        $region72: #{se_bottleneck_forward.3} parent=47 // pred_fallthru
          _
        // Predicated region
        $region73: #{se_bottleneck_forward.3} parent=47 // pred_check
          %p397 = pneg %p200
        $region74: #{se_bottleneck_forward.3} parent=47 // pred_check_branch
          %399 = sbr.rel (%p397) target = $region76
        $region75: #{se_bottleneck_forward.3} parent=47 // pred_region
          %400 = dma.done [#allocation5], 16
        $region76: #{se_bottleneck_forward.3} parent=47 // pred_fallthru
          _
        %401 = sfence
        %s402 = sand.u32 %s27, 1
        %s403 = scalar_lea.sflag [#allocation3], %s402
        %s404 = sand.u32 %s47, 1
        %s405 = scalar_lea.vmem [#allocation2], %s404
        %p406 = pneg %p60
        %p407 = pneg %p57
        %p408 = pneg %p81
        %p409 = pneg %p78
        %p410 = pneg %p102
        %p411 = pneg %p99
        %p412 = pneg %p123
        %p413 = pneg %p120
        %s414 = sand.u32 %s27, 1
        %s415 = scalar_lea.sflag [#allocation3], %s414
        %s416 = sand.u32 %s138, 1
        %s417 = smul.addr %s416, 128
        %s418 = scalar_lea.vmem [#allocation11], %s417
        %p419 = pneg %p151
        %p420 = pneg %p148
        %s421 = sand.u32 %s27, 1
        %s422 = scalar_lea.sflag [#allocation3], %s421
        %s423 = sand.u32 %s166, 1
        %s424 = smul.addr %s423, 256
        %s425 = scalar_lea.vmem [#allocation12], %s424
        %p426 = pneg %p179
        %p427 = pneg %p176
        %p428 = pneg %p200
        %p429 = pneg %p197
        %p430 = pneg %p228
        %p431 = pneg %p225
        %s432 = sand.u32 %s215, 1
        %s433 = scalar_lea.sflag [#allocation4], %s432
        %s434 = sand.u32 %s215, 1
        %s435 = smul.addr %s434, 256
        %s436 = scalar_lea.vmem [#allocation14], %s435
        %s437 = smul.u32 32, %s32
        %s438 = smul.u32 2, %s32
        %s439 = smul.u32 2, %s32
        %v440 = vld [vmem:[%s362] sm:$0x1]
        %s441 = sld [smem:[#allocation13]]
        %v442 = vstv %s441
        %v443 = vmul.f32 %v440, %v442
        %vm444 = vcmask 1040384
        %v445 = vsel %vm444, %v443, 0.0
        %446 = vadd.xlane.f32.xlu0 %v445
        %v447 = vpop.xlane.xlu0 %446
        %v448 = vrcp.pop 128.0
        %v449 = vmul.f32 %v447, %v448
        %v450 = vsub.f32 %v443, %v449
        %v451 = vmul.f32 %v450, %v450
        %v452 = vsel %vm444, %v451, 0.0
        %453 = vadd.xlane.f32.xlu0 %v452
        %v454 = vpop.xlane.xlu0 %453
        %v455 = vmul.f32 %v454, %v448
        %v456 = vadd.f32 %v455, 1e-05
        %v457 = vrsqrt.pop %v456
        %v458 = vmul.f32 %v450, %v457
        %v459 = vld [vmem:[#allocation6] sm:$0x1]
        %v460 = vmul.f32 %v458, %v459
        %v461 = vld [vmem:[#allocation6 + $0x1] sm:$0x1]
        %v462 = vadd.f32 %v460, %v461
        %v463 = vld [vmem:[#allocation8] sm:$0xff]
        %v465 = vlaneseq
        %v466 = vshrl.u32 %v465, 7
        %v467 = vsub.s32 0, %v466
        %v468 = vrot.slane %v462, %v467
        %v470 = vmul.f32 %v468, %v463
        %471 = vadd.xlane.f32.xlu0 %v470
        %v472 = vpop.xlane.xlu0 %471
        %v473 = vmax.f32 %v472, 0.0
        %v474 = vld [vmem:[#allocation9] sm:$0xff]
        %v475 = vmul.f32 %v473, %v474
        %v476 = vrot.slane %v475, 4
        %v477 = vadd.f32 %v475, %v476
        %v478 = vrot.slane %v477, 2
        %v479 = vadd.f32 %v477, %v478
        %v480 = vrot.slane %v479, 1
        %v481 = vadd.f32 %v479, %v480
        %s482 = sld [smem:[#allocation13 + $0x1]]
        %s483 = sld [smem:[#allocation13 + $0x2]]
        %s484 = sld [smem:[#allocation13 + $0x3]]
        %v485 = vstv %s482
        %v486 = vmul.f32 %v485, %v481
        %v487 = vstv %s483
        %v488 = vadd.f32 %v486, %v487
        %v489 = vsub.f32 0.0, %v488
        %v490 = vmin.f32 %v489, 20.0
        %v491 = vmul.f32 %v490, 1.442695
        %v492 = vpow.pop %v491
        %v493 = vadd.f32 %v492, 1.0
        %v494 = vlog2.pop %v493
        %v495 = vmul.f32 %v494, 0.6931472
        %v496 = vmul.f32 -0.5, %v492
        %v497 = vadd.f32 %v496, 1.0
        %v498 = vmul.f32 %v497, %v492
        %v499 = vand.u32 2147483647, %v492
        %vm500 = vcmp.lt.f32.partialorder %v499, 0.0004427343
        %v501 = vsel %vm500, %v498, %v495
        %v502 = vsub.f32 0.0, %v501
        %vm503 = vcmp.gt.f32.partialorder %v489, 20.0
        %v504 = vsel %vm503, %v488, %v502
        %v505 = vstv %s484
        %v506 = vmul.f32 %v505, %v504
        %v507 = vmul.f32 %v506, 1.442695
        %v508 = vpow.pop %v507
        %v509 = vld [vmem:[%s392] sm:$0xff]
        %v510 = vld [vmem:[%s392 + $0x8] sm:$0xff]
        %v511 = vld [vmem:[%s392 + $0x10] sm:$0xff]
        %v512 = vld [vmem:[%s392 + $0x18] sm:$0xff]
        %v513 = vld [vmem:[%s392 + $0x20] sm:$0xff]
        %v514 = vld [vmem:[%s392 + $0x28] sm:$0xff]
        %v515 = vld [vmem:[%s392 + $0x30] sm:$0xff]
        %v516 = vld [vmem:[%s392 + $0x38] sm:$0xff]
        %v517 = vld [vmem:[%s392 + $0x40] sm:$0xff]
        %v518 = vld [vmem:[%s392 + $0x48] sm:$0xff]
        %v519 = vld [vmem:[%s392 + $0x50] sm:$0xff]
        %v520 = vld [vmem:[%s392 + $0x58] sm:$0xff]
        %v521 = vld [vmem:[%s392 + $0x60] sm:$0xff]
        %v522 = vld [vmem:[%s392 + $0x68] sm:$0xff]
        %v523 = vld [vmem:[%s392 + $0x70] sm:$0xff]
        %v524 = vld [vmem:[%s392 + $0x78] sm:$0xff]
        %v525 = vld [vmem:[%s392 + $0x80] sm:$0xff]
        %v526 = vld [vmem:[%s392 + $0x88] sm:$0xff]
        %v527 = vld [vmem:[%s392 + $0x90] sm:$0xff]
        %v528 = vld [vmem:[%s392 + $0x98] sm:$0xff]
        %v529 = vld [vmem:[%s392 + $0xa0] sm:$0xff]
        %v530 = vld [vmem:[%s392 + $0xa8] sm:$0xff]
        %v531 = vld [vmem:[%s392 + $0xb0] sm:$0xff]
        %v532 = vld [vmem:[%s392 + $0xb8] sm:$0xff]
        %v533 = vld [vmem:[%s392 + $0xc0] sm:$0xff]
        %v534 = vld [vmem:[%s392 + $0xc8] sm:$0xff]
        %v535 = vld [vmem:[%s392 + $0xd0] sm:$0xff]
        %v536 = vld [vmem:[%s392 + $0xd8] sm:$0xff]
        %v537 = vld [vmem:[%s392 + $0xe0] sm:$0xff]
        %v538 = vld [vmem:[%s392 + $0xe8] sm:$0xff]
        %v539 = vld [vmem:[%s392 + $0xf0] sm:$0xff]
        %v540 = vld [vmem:[%s392 + $0xf8] sm:$0xff]
        %541 = vxpose.xlu0.b32.start [1/16] %v509, 128
        %542 = vxpose.xlu0.b32.cont [2/16] %v511, 128
        %543 = vxpose.xlu0.b32.cont [3/16] %v513, 128
        %544 = vxpose.xlu0.b32.cont [4/16] %v515, 128
        %545 = vxpose.xlu0.b32.cont [5/16] %v517, 128
        %546 = vxpose.xlu0.b32.cont [6/16] %v519, 128
        %547 = vxpose.xlu0.b32.cont [7/16] %v521, 128
        %548 = vxpose.xlu0.b32.cont [8/16] %v523, 128
        %549 = vxpose.xlu0.b32.cont [9/16] %v525, 128
        %550 = vxpose.xlu0.b32.cont [10/16] %v527, 128
        %551 = vxpose.xlu0.b32.cont [11/16] %v529, 128
        %552 = vxpose.xlu0.b32.cont [12/16] %v531, 128
        %553 = vxpose.xlu0.b32.cont [13/16] %v533, 128
        %554 = vxpose.xlu0.b32.cont [14/16] %v535, 128
        %555 = vxpose.xlu0.b32.cont [15/16] %v537, 128
        %556 = vxpose.xlu0.b32.end [16/16] %v539, 128
        %v557 = vpop.trf.xlu0
        %v558 = vpop.trf.xlu0
        %v559 = vpop.trf.xlu0
        %v560 = vpop.trf.xlu0
        %v561 = vpop.trf.xlu0
        %v562 = vpop.trf.xlu0
        %v563 = vpop.trf.xlu0
        %v564 = vpop.trf.xlu0
        %v565 = vpop.trf.xlu0
        %v566 = vpop.trf.xlu0
        %v567 = vpop.trf.xlu0
        %v568 = vpop.trf.xlu0
        %v569 = vpop.trf.xlu0
        %v570 = vpop.trf.xlu0
        %v571 = vpop.trf.xlu0
        %v572 = vpop.trf.xlu0
        %573 = vxpose.xlu0.b32.start [1/16] %v510, 128
        %574 = vxpose.xlu0.b32.cont [2/16] %v512, 128
        %575 = vxpose.xlu0.b32.cont [3/16] %v514, 128
        %576 = vxpose.xlu0.b32.cont [4/16] %v516, 128
        %577 = vxpose.xlu0.b32.cont [5/16] %v518, 128
        %578 = vxpose.xlu0.b32.cont [6/16] %v520, 128
        %579 = vxpose.xlu0.b32.cont [7/16] %v522, 128
        %580 = vxpose.xlu0.b32.cont [8/16] %v524, 128
        %581 = vxpose.xlu0.b32.cont [9/16] %v526, 128
        %582 = vxpose.xlu0.b32.cont [10/16] %v528, 128
        %583 = vxpose.xlu0.b32.cont [11/16] %v530, 128
        %584 = vxpose.xlu0.b32.cont [12/16] %v532, 128
        %585 = vxpose.xlu0.b32.cont [13/16] %v534, 128
        %586 = vxpose.xlu0.b32.cont [14/16] %v536, 128
        %587 = vxpose.xlu0.b32.cont [15/16] %v538, 128
        %588 = vxpose.xlu0.b32.end [16/16] %v540, 128
        %v589 = vpop.trf.xlu0
        %v590 = vpop.trf.xlu0
        %v591 = vpop.trf.xlu0
        %v592 = vpop.trf.xlu0
        %v593 = vpop.trf.xlu0
        %v594 = vpop.trf.xlu0
        %v595 = vpop.trf.xlu0
        %v596 = vpop.trf.xlu0
        %v597 = vpop.trf.xlu0
        %v598 = vpop.trf.xlu0
        %v599 = vpop.trf.xlu0
        %v600 = vpop.trf.xlu0
        %v601 = vpop.trf.xlu0
        %v602 = vpop.trf.xlu0
        %v603 = vpop.trf.xlu0
        %v604 = vpop.trf.xlu0
        %v605 = vld [vmem:[%s383] sm:$0xf]
        %v606 = vld [vmem:[%s383 + $0x4] sm:$0xf]
        %v607 = vld [vmem:[%s383 + $0x8] sm:$0xf]
        %v608 = vld [vmem:[%s383 + $0xc] sm:$0xf]
        %v609 = vld [vmem:[%s383 + $0x10] sm:$0xf]
        %v610 = vld [vmem:[%s383 + $0x14] sm:$0xf]
        %v611 = vld [vmem:[%s383 + $0x18] sm:$0xf]
        %v612 = vld [vmem:[%s383 + $0x1c] sm:$0xf]
        %v613 = vld [vmem:[%s383 + $0x20] sm:$0xf]
        %v614 = vld [vmem:[%s383 + $0x24] sm:$0xf]
        %v615 = vld [vmem:[%s383 + $0x28] sm:$0xf]
        %v616 = vld [vmem:[%s383 + $0x2c] sm:$0xf]
        %v617 = vld [vmem:[%s383 + $0x30] sm:$0xf]
        %v618 = vld [vmem:[%s383 + $0x34] sm:$0xf]
        %v619 = vld [vmem:[%s383 + $0x38] sm:$0xf]
        %v620 = vld [vmem:[%s383 + $0x3c] sm:$0xf]
        %v621 = vld [vmem:[%s383 + $0x40] sm:$0xf]
        %v622 = vld [vmem:[%s383 + $0x44] sm:$0xf]
        %v623 = vld [vmem:[%s383 + $0x48] sm:$0xf]
        %v624 = vld [vmem:[%s383 + $0x4c] sm:$0xf]
        %v625 = vld [vmem:[%s383 + $0x50] sm:$0xf]
        %v626 = vld [vmem:[%s383 + $0x54] sm:$0xf]
        %v627 = vld [vmem:[%s383 + $0x58] sm:$0xf]
        %v628 = vld [vmem:[%s383 + $0x5c] sm:$0xf]
        %v629 = vld [vmem:[%s383 + $0x60] sm:$0xf]
        %v630 = vld [vmem:[%s383 + $0x64] sm:$0xf]
        %v631 = vld [vmem:[%s383 + $0x68] sm:$0xf]
        %v632 = vld [vmem:[%s383 + $0x6c] sm:$0xf]
        %v633 = vld [vmem:[%s383 + $0x70] sm:$0xf]
        %v634 = vld [vmem:[%s383 + $0x74] sm:$0xf]
        %v635 = vld [vmem:[%s383 + $0x78] sm:$0xf]
        %v636 = vld [vmem:[%s383 + $0x7c] sm:$0xf]
        %v637 = vunpack.c.l.bf16 %v605
        %v638 = vunpack.c.l.bf16 %v606
        %v639 = vunpack.c.l.bf16 %v607
        %v640 = vunpack.c.l.bf16 %v608
        %v641 = vunpack.c.l.bf16 %v609
        %v642 = vunpack.c.l.bf16 %v610
        %v643 = vunpack.c.l.bf16 %v611
        %v644 = vunpack.c.l.bf16 %v612
        %v645 = vunpack.c.l.bf16 %v613
        %v646 = vunpack.c.l.bf16 %v614
        %v647 = vunpack.c.l.bf16 %v615
        %v648 = vunpack.c.l.bf16 %v616
        %v649 = vunpack.c.l.bf16 %v617
        %v650 = vunpack.c.l.bf16 %v618
        %v651 = vunpack.c.l.bf16 %v619
        %v652 = vunpack.c.l.bf16 %v620
        %v653 = vunpack.c.l.bf16 %v621
        %v654 = vunpack.c.l.bf16 %v622
        %v655 = vunpack.c.l.bf16 %v623
        %v656 = vunpack.c.l.bf16 %v624
        %v657 = vunpack.c.l.bf16 %v625
        %v658 = vunpack.c.l.bf16 %v626
        %v659 = vunpack.c.l.bf16 %v627
        %v660 = vunpack.c.l.bf16 %v628
        %v661 = vunpack.c.l.bf16 %v629
        %v662 = vunpack.c.l.bf16 %v630
        %v663 = vunpack.c.l.bf16 %v631
        %v664 = vunpack.c.l.bf16 %v632
        %v665 = vunpack.c.l.bf16 %v633
        %v666 = vunpack.c.l.bf16 %v634
        %v667 = vunpack.c.l.bf16 %v635
        %v668 = vunpack.c.l.bf16 %v636
        %v669 = vmul.f32 %v637, %v508
        %v670 = vmul.f32 %v638, %v508
        %v671 = vmul.f32 %v639, %v508
        %v672 = vmul.f32 %v640, %v508
        %v673 = vmul.f32 %v641, %v508
        %v674 = vmul.f32 %v642, %v508
        %v675 = vmul.f32 %v643, %v508
        %v676 = vmul.f32 %v644, %v508
        %v677 = vmul.f32 %v645, %v508
        %v678 = vmul.f32 %v646, %v508
        %v679 = vmul.f32 %v647, %v508
        %v680 = vmul.f32 %v648, %v508
        %v681 = vmul.f32 %v649, %v508
        %v682 = vmul.f32 %v650, %v508
        %v683 = vmul.f32 %v651, %v508
        %v684 = vmul.f32 %v652, %v508
        %v685 = vmul.f32 %v653, %v508
        %v686 = vmul.f32 %v654, %v508
        %v687 = vmul.f32 %v655, %v508
        %v688 = vmul.f32 %v656, %v508
        %v689 = vmul.f32 %v657, %v508
        %v690 = vmul.f32 %v658, %v508
        %v691 = vmul.f32 %v659, %v508
        %v692 = vmul.f32 %v660, %v508
        %v693 = vmul.f32 %v661, %v508
        %v694 = vmul.f32 %v662, %v508
        %v695 = vmul.f32 %v663, %v508
        %v696 = vmul.f32 %v664, %v508
        %v697 = vmul.f32 %v665, %v508
        %v698 = vmul.f32 %v666, %v508
        %v699 = vmul.f32 %v667, %v508
        %v700 = vmul.f32 %v668, %v508
        %v701 = vadd.f32 %v669, %v557
        %v702 = vadd.f32 %v670, %v558
        %v703 = vadd.f32 %v671, %v559
        %v704 = vadd.f32 %v672, %v560
        %v705 = vadd.f32 %v673, %v561
        %v706 = vadd.f32 %v674, %v562
        %v707 = vadd.f32 %v675, %v563
        %v708 = vadd.f32 %v676, %v564
        %v709 = vadd.f32 %v677, %v565
        %v710 = vadd.f32 %v678, %v566
        %v711 = vadd.f32 %v679, %v567
        %v712 = vadd.f32 %v680, %v568
        %v713 = vadd.f32 %v681, %v569
        %v714 = vadd.f32 %v682, %v570
        %v715 = vadd.f32 %v683, %v571
        %v716 = vadd.f32 %v684, %v572
        %v717 = vadd.f32 %v685, %v589
        %v718 = vadd.f32 %v686, %v590
        %v719 = vadd.f32 %v687, %v591
        %v720 = vadd.f32 %v688, %v592
        %v721 = vadd.f32 %v689, %v593
        %v722 = vadd.f32 %v690, %v594
        %v723 = vadd.f32 %v691, %v595
        %v724 = vadd.f32 %v692, %v596
        %v725 = vadd.f32 %v693, %v597
        %v726 = vadd.f32 %v694, %v598
        %v727 = vadd.f32 %v695, %v599
        %v728 = vadd.f32 %v696, %v600
        %v729 = vadd.f32 %v697, %v601
        %v730 = vadd.f32 %v698, %v602
        %v731 = vadd.f32 %v699, %v603
        %v732 = vadd.f32 %v700, %v604
        %s733 = sld [smem:[#allocation13 + $0x4]]
        %s734 = sld [smem:[#allocation13 + $0x5]]
        %s735 = sld [smem:[#allocation13 + $0x6]]
        %v736 = vstv %s733
        %v737 = vmul.f32 %v736, %v701
        %v738 = vmul.f32 %v736, %v702
        %v739 = vmul.f32 %v736, %v703
        %v740 = vmul.f32 %v736, %v704
        %v741 = vmul.f32 %v736, %v705
        %v742 = vmul.f32 %v736, %v706
        %v743 = vmul.f32 %v736, %v707
        %v744 = vmul.f32 %v736, %v708
        %v745 = vmul.f32 %v736, %v709
        %v746 = vmul.f32 %v736, %v710
        %v747 = vmul.f32 %v736, %v711
        %v748 = vmul.f32 %v736, %v712
        %v749 = vmul.f32 %v736, %v713
        %v750 = vmul.f32 %v736, %v714
        %v751 = vmul.f32 %v736, %v715
        %v752 = vmul.f32 %v736, %v716
        %v753 = vmul.f32 %v736, %v717
        %v754 = vmul.f32 %v736, %v718
        %v755 = vmul.f32 %v736, %v719
        %v756 = vmul.f32 %v736, %v720
        %v757 = vmul.f32 %v736, %v721
        %v758 = vmul.f32 %v736, %v722
        %v759 = vmul.f32 %v736, %v723
        %v760 = vmul.f32 %v736, %v724
        %v761 = vmul.f32 %v736, %v725
        %v762 = vmul.f32 %v736, %v726
        %v763 = vmul.f32 %v736, %v727
        %v764 = vmul.f32 %v736, %v728
        %v765 = vmul.f32 %v736, %v729
        %v766 = vmul.f32 %v736, %v730
        %v767 = vmul.f32 %v736, %v731
        %v768 = vmul.f32 %v736, %v732
        %v769 = vstv %s734
        %v770 = vadd.f32 %v737, %v769
        %v771 = vadd.f32 %v738, %v769
        %v772 = vadd.f32 %v739, %v769
        %v773 = vadd.f32 %v740, %v769
        %v774 = vadd.f32 %v741, %v769
        %v775 = vadd.f32 %v742, %v769
        %v776 = vadd.f32 %v743, %v769
        %v777 = vadd.f32 %v744, %v769
        %v778 = vadd.f32 %v745, %v769
        %v779 = vadd.f32 %v746, %v769
        %v780 = vadd.f32 %v747, %v769
        %v781 = vadd.f32 %v748, %v769
        %v782 = vadd.f32 %v749, %v769
        %v783 = vadd.f32 %v750, %v769
        %v784 = vadd.f32 %v751, %v769
        %v785 = vadd.f32 %v752, %v769
        %v786 = vadd.f32 %v753, %v769
        %v787 = vadd.f32 %v754, %v769
        %v788 = vadd.f32 %v755, %v769
        %v789 = vadd.f32 %v756, %v769
        %v790 = vadd.f32 %v757, %v769
        %v791 = vadd.f32 %v758, %v769
        %v792 = vadd.f32 %v759, %v769
        %v793 = vadd.f32 %v760, %v769
        %v794 = vadd.f32 %v761, %v769
        %v795 = vadd.f32 %v762, %v769
        %v796 = vadd.f32 %v763, %v769
        %v797 = vadd.f32 %v764, %v769
        %v798 = vadd.f32 %v765, %v769
        %v799 = vadd.f32 %v766, %v769
        %v800 = vadd.f32 %v767, %v769
        %v801 = vadd.f32 %v768, %v769
        %v802 = vsub.f32 0.0, %v770
        %v803 = vsub.f32 0.0, %v771
        %v804 = vsub.f32 0.0, %v772
        %v805 = vsub.f32 0.0, %v773
        %v806 = vsub.f32 0.0, %v774
        %v807 = vsub.f32 0.0, %v775
        %v808 = vsub.f32 0.0, %v776
        %v809 = vsub.f32 0.0, %v777
        %v810 = vsub.f32 0.0, %v778
        %v811 = vsub.f32 0.0, %v779
        %v812 = vsub.f32 0.0, %v780
        %v813 = vsub.f32 0.0, %v781
        %v814 = vsub.f32 0.0, %v782
        %v815 = vsub.f32 0.0, %v783
        %v816 = vsub.f32 0.0, %v784
        %v817 = vsub.f32 0.0, %v785
        %v818 = vsub.f32 0.0, %v786
        %v819 = vsub.f32 0.0, %v787
        %v820 = vsub.f32 0.0, %v788
        %v821 = vsub.f32 0.0, %v789
        %v822 = vsub.f32 0.0, %v790
        %v823 = vsub.f32 0.0, %v791
        %v824 = vsub.f32 0.0, %v792
        %v825 = vsub.f32 0.0, %v793
        %v826 = vsub.f32 0.0, %v794
        %v827 = vsub.f32 0.0, %v795
        %v828 = vsub.f32 0.0, %v796
        %v829 = vsub.f32 0.0, %v797
        %v830 = vsub.f32 0.0, %v798
        %v831 = vsub.f32 0.0, %v799
        %v832 = vsub.f32 0.0, %v800
        %v833 = vsub.f32 0.0, %v801
        %v834 = vmin.f32 %v802, 20.0
        %v835 = vmin.f32 %v803, 20.0
        %v836 = vmin.f32 %v804, 20.0
        %v837 = vmin.f32 %v805, 20.0
        %v838 = vmin.f32 %v806, 20.0
        %v839 = vmin.f32 %v807, 20.0
        %v840 = vmin.f32 %v808, 20.0
        %v841 = vmin.f32 %v809, 20.0
        %v842 = vmin.f32 %v810, 20.0
        %v843 = vmin.f32 %v811, 20.0
        %v844 = vmin.f32 %v812, 20.0
        %v845 = vmin.f32 %v813, 20.0
        %v846 = vmin.f32 %v814, 20.0
        %v847 = vmin.f32 %v815, 20.0
        %v848 = vmin.f32 %v816, 20.0
        %v849 = vmin.f32 %v817, 20.0
        %v850 = vmin.f32 %v818, 20.0
        %v851 = vmin.f32 %v819, 20.0
        %v852 = vmin.f32 %v820, 20.0
        %v853 = vmin.f32 %v821, 20.0
        %v854 = vmin.f32 %v822, 20.0
        %v855 = vmin.f32 %v823, 20.0
        %v856 = vmin.f32 %v824, 20.0
        %v857 = vmin.f32 %v825, 20.0
        %v858 = vmin.f32 %v826, 20.0
        %v859 = vmin.f32 %v827, 20.0
        %v860 = vmin.f32 %v828, 20.0
        %v861 = vmin.f32 %v829, 20.0
        %v862 = vmin.f32 %v830, 20.0
        %v863 = vmin.f32 %v831, 20.0
        %v864 = vmin.f32 %v832, 20.0
        %v865 = vmin.f32 %v833, 20.0
        %v866 = vmul.f32 %v834, 1.442695
        %v867 = vpow.pop %v866
        %v868 = vmul.f32 %v835, 1.442695
        %v869 = vpow.pop %v868
        %v870 = vmul.f32 %v836, 1.442695
        %v871 = vpow.pop %v870
        %v872 = vmul.f32 %v837, 1.442695
        %v873 = vpow.pop %v872
        %v874 = vmul.f32 %v838, 1.442695
        %v875 = vpow.pop %v874
        %v876 = vmul.f32 %v839, 1.442695
        %v877 = vpow.pop %v876
        %v878 = vmul.f32 %v840, 1.442695
        %v879 = vpow.pop %v878
        %v880 = vmul.f32 %v841, 1.442695
        %v881 = vpow.pop %v880
        %v882 = vmul.f32 %v842, 1.442695
        %v883 = vpow.pop %v882
        %v884 = vmul.f32 %v843, 1.442695
        %v885 = vpow.pop %v884
        %v886 = vmul.f32 %v844, 1.442695
        %v887 = vpow.pop %v886
        %v888 = vmul.f32 %v845, 1.442695
        %v889 = vpow.pop %v888
        %v890 = vmul.f32 %v846, 1.442695
        %v891 = vpow.pop %v890
        %v892 = vmul.f32 %v847, 1.442695
        %v893 = vpow.pop %v892
        %v894 = vmul.f32 %v848, 1.442695
        %v895 = vpow.pop %v894
        %v896 = vmul.f32 %v849, 1.442695
        %v897 = vpow.pop %v896
        %v898 = vmul.f32 %v850, 1.442695
        %v899 = vpow.pop %v898
        %v900 = vmul.f32 %v851, 1.442695
        %v901 = vpow.pop %v900
        %v902 = vmul.f32 %v852, 1.442695
        %v903 = vpow.pop %v902
        %v904 = vmul.f32 %v853, 1.442695
        %v905 = vpow.pop %v904
        %v906 = vmul.f32 %v854, 1.442695
        %v907 = vpow.pop %v906
        %v908 = vmul.f32 %v855, 1.442695
        %v909 = vpow.pop %v908
        %v910 = vmul.f32 %v856, 1.442695
        %v911 = vpow.pop %v910
        %v912 = vmul.f32 %v857, 1.442695
        %v913 = vpow.pop %v912
        %v914 = vmul.f32 %v858, 1.442695
        %v915 = vpow.pop %v914
        %v916 = vmul.f32 %v859, 1.442695
        %v917 = vpow.pop %v916
        %v918 = vmul.f32 %v860, 1.442695
        %v919 = vpow.pop %v918
        %v920 = vmul.f32 %v861, 1.442695
        %v921 = vpow.pop %v920
        %v922 = vmul.f32 %v862, 1.442695
        %v923 = vpow.pop %v922
        %v924 = vmul.f32 %v863, 1.442695
        %v925 = vpow.pop %v924
        %v926 = vmul.f32 %v864, 1.442695
        %v927 = vpow.pop %v926
        %v928 = vmul.f32 %v865, 1.442695
        %v929 = vpow.pop %v928
        %v930 = vadd.f32 %v867, 1.0
        %v931 = vlog2.pop %v930
        %v932 = vmul.f32 %v931, 0.6931472
        %v933 = vmul.f32 -0.5, %v867
        %v934 = vadd.f32 %v933, 1.0
        %v935 = vmul.f32 %v934, %v867
        %v936 = vand.u32 2147483647, %v867
        %vm937 = vcmp.lt.f32.partialorder %v936, 0.0004427343
        %v938 = vsel %vm937, %v935, %v932
        %v939 = vadd.f32 %v869, 1.0
        %v940 = vlog2.pop %v939
        %v941 = vmul.f32 %v940, 0.6931472
        %v942 = vmul.f32 -0.5, %v869
        %v943 = vadd.f32 %v942, 1.0
        %v944 = vmul.f32 %v943, %v869
        %v945 = vand.u32 2147483647, %v869
        %vm946 = vcmp.lt.f32.partialorder %v945, 0.0004427343
        %v947 = vsel %vm946, %v944, %v941
        %v948 = vadd.f32 %v871, 1.0
        %v949 = vlog2.pop %v948
        %v950 = vmul.f32 %v949, 0.6931472
        %v951 = vmul.f32 -0.5, %v871
        %v952 = vadd.f32 %v951, 1.0
        %v953 = vmul.f32 %v952, %v871
        %v954 = vand.u32 2147483647, %v871
        %vm955 = vcmp.lt.f32.partialorder %v954, 0.0004427343
        %v956 = vsel %vm955, %v953, %v950
        %v957 = vadd.f32 %v873, 1.0
        %v958 = vlog2.pop %v957
        %v959 = vmul.f32 %v958, 0.6931472
        %v960 = vmul.f32 -0.5, %v873
        %v961 = vadd.f32 %v960, 1.0
        %v962 = vmul.f32 %v961, %v873
        %v963 = vand.u32 2147483647, %v873
        %vm964 = vcmp.lt.f32.partialorder %v963, 0.0004427343
        %v965 = vsel %vm964, %v962, %v959
        %v966 = vadd.f32 %v875, 1.0
        %v967 = vlog2.pop %v966
        %v968 = vmul.f32 %v967, 0.6931472
        %v969 = vmul.f32 -0.5, %v875
        %v970 = vadd.f32 %v969, 1.0
        %v971 = vmul.f32 %v970, %v875
        %v972 = vand.u32 2147483647, %v875
        %vm973 = vcmp.lt.f32.partialorder %v972, 0.0004427343
        %v974 = vsel %vm973, %v971, %v968
        %v975 = vadd.f32 %v877, 1.0
        %v976 = vlog2.pop %v975
        %v977 = vmul.f32 %v976, 0.6931472
        %v978 = vmul.f32 -0.5, %v877
        %v979 = vadd.f32 %v978, 1.0
        %v980 = vmul.f32 %v979, %v877
        %v981 = vand.u32 2147483647, %v877
        %vm982 = vcmp.lt.f32.partialorder %v981, 0.0004427343
        %v983 = vsel %vm982, %v980, %v977
        %v984 = vadd.f32 %v879, 1.0
        %v985 = vlog2.pop %v984
        %v986 = vmul.f32 %v985, 0.6931472
        %v987 = vmul.f32 -0.5, %v879
        %v988 = vadd.f32 %v987, 1.0
        %v989 = vmul.f32 %v988, %v879
        %v990 = vand.u32 2147483647, %v879
        %vm991 = vcmp.lt.f32.partialorder %v990, 0.0004427343
        %v992 = vsel %vm991, %v989, %v986
        %v993 = vadd.f32 %v881, 1.0
        %v994 = vlog2.pop %v993
        %v995 = vmul.f32 %v994, 0.6931472
        %v996 = vmul.f32 -0.5, %v881
        %v997 = vadd.f32 %v996, 1.0
        %v998 = vmul.f32 %v997, %v881
        %v999 = vand.u32 2147483647, %v881
        %vm1000 = vcmp.lt.f32.partialorder %v999, 0.0004427343
        %v1001 = vsel %vm1000, %v998, %v995
        %v1002 = vadd.f32 %v883, 1.0
        %v1003 = vlog2.pop %v1002
        %v1004 = vmul.f32 %v1003, 0.6931472
        %v1005 = vmul.f32 -0.5, %v883
        %v1006 = vadd.f32 %v1005, 1.0
        %v1007 = vmul.f32 %v1006, %v883
        %v1008 = vand.u32 2147483647, %v883
        %vm1009 = vcmp.lt.f32.partialorder %v1008, 0.0004427343
        %v1010 = vsel %vm1009, %v1007, %v1004
        %v1011 = vadd.f32 %v885, 1.0
        %v1012 = vlog2.pop %v1011
        %v1013 = vmul.f32 %v1012, 0.6931472
        %v1014 = vmul.f32 -0.5, %v885
        %v1015 = vadd.f32 %v1014, 1.0
        %v1016 = vmul.f32 %v1015, %v885
        %v1017 = vand.u32 2147483647, %v885
        %vm1018 = vcmp.lt.f32.partialorder %v1017, 0.0004427343
        %v1019 = vsel %vm1018, %v1016, %v1013
        %v1020 = vadd.f32 %v887, 1.0
        %v1021 = vlog2.pop %v1020
        %v1022 = vmul.f32 %v1021, 0.6931472
        %v1023 = vmul.f32 -0.5, %v887
        %v1024 = vadd.f32 %v1023, 1.0
        %v1025 = vmul.f32 %v1024, %v887
        %v1026 = vand.u32 2147483647, %v887
        %vm1027 = vcmp.lt.f32.partialorder %v1026, 0.0004427343
        %v1028 = vsel %vm1027, %v1025, %v1022
        %v1029 = vadd.f32 %v889, 1.0
        %v1030 = vlog2.pop %v1029
        %v1031 = vmul.f32 %v1030, 0.6931472
        %v1032 = vmul.f32 -0.5, %v889
        %v1033 = vadd.f32 %v1032, 1.0
        %v1034 = vmul.f32 %v1033, %v889
        %v1035 = vand.u32 2147483647, %v889
        %vm1036 = vcmp.lt.f32.partialorder %v1035, 0.0004427343
        %v1037 = vsel %vm1036, %v1034, %v1031
        %v1038 = vadd.f32 %v891, 1.0
        %v1039 = vlog2.pop %v1038
        %v1040 = vmul.f32 %v1039, 0.6931472
        %v1041 = vmul.f32 -0.5, %v891
        %v1042 = vadd.f32 %v1041, 1.0
        %v1043 = vmul.f32 %v1042, %v891
        %v1044 = vand.u32 2147483647, %v891
        %vm1045 = vcmp.lt.f32.partialorder %v1044, 0.0004427343
        %v1046 = vsel %vm1045, %v1043, %v1040
        %v1047 = vadd.f32 %v893, 1.0
        %v1048 = vlog2.pop %v1047
        %v1049 = vmul.f32 %v1048, 0.6931472
        %v1050 = vmul.f32 -0.5, %v893
        %v1051 = vadd.f32 %v1050, 1.0
        %v1052 = vmul.f32 %v1051, %v893
        %v1053 = vand.u32 2147483647, %v893
        %vm1054 = vcmp.lt.f32.partialorder %v1053, 0.0004427343
        %v1055 = vsel %vm1054, %v1052, %v1049
        %v1056 = vadd.f32 %v895, 1.0
        %v1057 = vlog2.pop %v1056
        %v1058 = vmul.f32 %v1057, 0.6931472
        %v1059 = vmul.f32 -0.5, %v895
        %v1060 = vadd.f32 %v1059, 1.0
        %v1061 = vmul.f32 %v1060, %v895
        %v1062 = vand.u32 2147483647, %v895
        %vm1063 = vcmp.lt.f32.partialorder %v1062, 0.0004427343
        %v1064 = vsel %vm1063, %v1061, %v1058
        %v1065 = vadd.f32 %v897, 1.0
        %v1066 = vlog2.pop %v1065
        %v1067 = vmul.f32 %v1066, 0.6931472
        %v1068 = vmul.f32 -0.5, %v897
        %v1069 = vadd.f32 %v1068, 1.0
        %v1070 = vmul.f32 %v1069, %v897
        %v1071 = vand.u32 2147483647, %v897
        %vm1072 = vcmp.lt.f32.partialorder %v1071, 0.0004427343
        %v1073 = vsel %vm1072, %v1070, %v1067
        %v1074 = vadd.f32 %v899, 1.0
        %v1075 = vlog2.pop %v1074
        %v1076 = vmul.f32 %v1075, 0.6931472
        %v1077 = vmul.f32 -0.5, %v899
        %v1078 = vadd.f32 %v1077, 1.0
        %v1079 = vmul.f32 %v1078, %v899
        %v1080 = vand.u32 2147483647, %v899
        %vm1081 = vcmp.lt.f32.partialorder %v1080, 0.0004427343
        %v1082 = vsel %vm1081, %v1079, %v1076
        %v1083 = vadd.f32 %v901, 1.0
        %v1084 = vlog2.pop %v1083
        %v1085 = vmul.f32 %v1084, 0.6931472
        %v1086 = vmul.f32 -0.5, %v901
        %v1087 = vadd.f32 %v1086, 1.0
        %v1088 = vmul.f32 %v1087, %v901
        %v1089 = vand.u32 2147483647, %v901
        %vm1090 = vcmp.lt.f32.partialorder %v1089, 0.0004427343
        %v1091 = vsel %vm1090, %v1088, %v1085
        %v1092 = vadd.f32 %v903, 1.0
        %v1093 = vlog2.pop %v1092
        %v1094 = vmul.f32 %v1093, 0.6931472
        %v1095 = vmul.f32 -0.5, %v903
        %v1096 = vadd.f32 %v1095, 1.0
        %v1097 = vmul.f32 %v1096, %v903
        %v1098 = vand.u32 2147483647, %v903
        %vm1099 = vcmp.lt.f32.partialorder %v1098, 0.0004427343
        %v1100 = vsel %vm1099, %v1097, %v1094
        %v1101 = vadd.f32 %v905, 1.0
        %v1102 = vlog2.pop %v1101
        %v1103 = vmul.f32 %v1102, 0.6931472
        %v1104 = vmul.f32 -0.5, %v905
        %v1105 = vadd.f32 %v1104, 1.0
        %v1106 = vmul.f32 %v1105, %v905
        %v1107 = vand.u32 2147483647, %v905
        %vm1108 = vcmp.lt.f32.partialorder %v1107, 0.0004427343
        %v1109 = vsel %vm1108, %v1106, %v1103
        %v1110 = vadd.f32 %v907, 1.0
        %v1111 = vlog2.pop %v1110
        %v1112 = vmul.f32 %v1111, 0.6931472
        %v1113 = vmul.f32 -0.5, %v907
        %v1114 = vadd.f32 %v1113, 1.0
        %v1115 = vmul.f32 %v1114, %v907
        %v1116 = vand.u32 2147483647, %v907
        %vm1117 = vcmp.lt.f32.partialorder %v1116, 0.0004427343
        %v1118 = vsel %vm1117, %v1115, %v1112
        %v1119 = vadd.f32 %v909, 1.0
        %v1120 = vlog2.pop %v1119
        %v1121 = vmul.f32 %v1120, 0.6931472
        %v1122 = vmul.f32 -0.5, %v909
        %v1123 = vadd.f32 %v1122, 1.0
        %v1124 = vmul.f32 %v1123, %v909
        %v1125 = vand.u32 2147483647, %v909
        %vm1126 = vcmp.lt.f32.partialorder %v1125, 0.0004427343
        %v1127 = vsel %vm1126, %v1124, %v1121
        %v1128 = vadd.f32 %v911, 1.0
        %v1129 = vlog2.pop %v1128
        %v1130 = vmul.f32 %v1129, 0.6931472
        %v1131 = vmul.f32 -0.5, %v911
        %v1132 = vadd.f32 %v1131, 1.0
        %v1133 = vmul.f32 %v1132, %v911
        %v1134 = vand.u32 2147483647, %v911
        %vm1135 = vcmp.lt.f32.partialorder %v1134, 0.0004427343
        %v1136 = vsel %vm1135, %v1133, %v1130
        %v1137 = vadd.f32 %v913, 1.0
        %v1138 = vlog2.pop %v1137
        %v1139 = vmul.f32 %v1138, 0.6931472
        %v1140 = vmul.f32 -0.5, %v913
        %v1141 = vadd.f32 %v1140, 1.0
        %v1142 = vmul.f32 %v1141, %v913
        %v1143 = vand.u32 2147483647, %v913
        %vm1144 = vcmp.lt.f32.partialorder %v1143, 0.0004427343
        %v1145 = vsel %vm1144, %v1142, %v1139
        %v1146 = vadd.f32 %v915, 1.0
        %v1147 = vlog2.pop %v1146
        %v1148 = vmul.f32 %v1147, 0.6931472
        %v1149 = vmul.f32 -0.5, %v915
        %v1150 = vadd.f32 %v1149, 1.0
        %v1151 = vmul.f32 %v1150, %v915
        %v1152 = vand.u32 2147483647, %v915
        %vm1153 = vcmp.lt.f32.partialorder %v1152, 0.0004427343
        %v1154 = vsel %vm1153, %v1151, %v1148
        %v1155 = vadd.f32 %v917, 1.0
        %v1156 = vlog2.pop %v1155
        %v1157 = vmul.f32 %v1156, 0.6931472
        %v1158 = vmul.f32 -0.5, %v917
        %v1159 = vadd.f32 %v1158, 1.0
        %v1160 = vmul.f32 %v1159, %v917
        %v1161 = vand.u32 2147483647, %v917
        %vm1162 = vcmp.lt.f32.partialorder %v1161, 0.0004427343
        %v1163 = vsel %vm1162, %v1160, %v1157
        %v1164 = vadd.f32 %v919, 1.0
        %v1165 = vlog2.pop %v1164
        %v1166 = vmul.f32 %v1165, 0.6931472
        %v1167 = vmul.f32 -0.5, %v919
        %v1168 = vadd.f32 %v1167, 1.0
        %v1169 = vmul.f32 %v1168, %v919
        %v1170 = vand.u32 2147483647, %v919
        %vm1171 = vcmp.lt.f32.partialorder %v1170, 0.0004427343
        %v1172 = vsel %vm1171, %v1169, %v1166
        %v1173 = vadd.f32 %v921, 1.0
        %v1174 = vlog2.pop %v1173
        %v1175 = vmul.f32 %v1174, 0.6931472
        %v1176 = vmul.f32 -0.5, %v921
        %v1177 = vadd.f32 %v1176, 1.0
        %v1178 = vmul.f32 %v1177, %v921
        %v1179 = vand.u32 2147483647, %v921
        %vm1180 = vcmp.lt.f32.partialorder %v1179, 0.0004427343
        %v1181 = vsel %vm1180, %v1178, %v1175
        %v1182 = vadd.f32 %v923, 1.0
        %v1183 = vlog2.pop %v1182
        %v1184 = vmul.f32 %v1183, 0.6931472
        %v1185 = vmul.f32 -0.5, %v923
        %v1186 = vadd.f32 %v1185, 1.0
        %v1187 = vmul.f32 %v1186, %v923
        %v1188 = vand.u32 2147483647, %v923
        %vm1189 = vcmp.lt.f32.partialorder %v1188, 0.0004427343
        %v1190 = vsel %vm1189, %v1187, %v1184
        %v1191 = vadd.f32 %v925, 1.0
        %v1192 = vlog2.pop %v1191
        %v1193 = vmul.f32 %v1192, 0.6931472
        %v1194 = vmul.f32 -0.5, %v925
        %v1195 = vadd.f32 %v1194, 1.0
        %v1196 = vmul.f32 %v1195, %v925
        %v1197 = vand.u32 2147483647, %v925
        %vm1198 = vcmp.lt.f32.partialorder %v1197, 0.0004427343
        %v1199 = vsel %vm1198, %v1196, %v1193
        %v1200 = vadd.f32 %v927, 1.0
        %v1201 = vlog2.pop %v1200
        %v1202 = vmul.f32 %v1201, 0.6931472
        %v1203 = vmul.f32 -0.5, %v927
        %v1204 = vadd.f32 %v1203, 1.0
        %v1205 = vmul.f32 %v1204, %v927
        %v1206 = vand.u32 2147483647, %v927
        %vm1207 = vcmp.lt.f32.partialorder %v1206, 0.0004427343
        %v1208 = vsel %vm1207, %v1205, %v1202
        %v1209 = vadd.f32 %v929, 1.0
        %v1210 = vlog2.pop %v1209
        %v1211 = vmul.f32 %v1210, 0.6931472
        %v1212 = vmul.f32 -0.5, %v929
        %v1213 = vadd.f32 %v1212, 1.0
        %v1214 = vmul.f32 %v1213, %v929
        %v1215 = vand.u32 2147483647, %v929
        %vm1216 = vcmp.lt.f32.partialorder %v1215, 0.0004427343
        %v1217 = vsel %vm1216, %v1214, %v1211
        %v1218 = vsub.f32 0.0, %v938
        %v1219 = vsub.f32 0.0, %v947
        %v1220 = vsub.f32 0.0, %v956
        %v1221 = vsub.f32 0.0, %v965
        %v1222 = vsub.f32 0.0, %v974
        %v1223 = vsub.f32 0.0, %v983
        %v1224 = vsub.f32 0.0, %v992
        %v1225 = vsub.f32 0.0, %v1001
        %v1226 = vsub.f32 0.0, %v1010
        %v1227 = vsub.f32 0.0, %v1019
        %v1228 = vsub.f32 0.0, %v1028
        %v1229 = vsub.f32 0.0, %v1037
        %v1230 = vsub.f32 0.0, %v1046
        %v1231 = vsub.f32 0.0, %v1055
        %v1232 = vsub.f32 0.0, %v1064
        %v1233 = vsub.f32 0.0, %v1073
        %v1234 = vsub.f32 0.0, %v1082
        %v1235 = vsub.f32 0.0, %v1091
        %v1236 = vsub.f32 0.0, %v1100
        %v1237 = vsub.f32 0.0, %v1109
        %v1238 = vsub.f32 0.0, %v1118
        %v1239 = vsub.f32 0.0, %v1127
        %v1240 = vsub.f32 0.0, %v1136
        %v1241 = vsub.f32 0.0, %v1145
        %v1242 = vsub.f32 0.0, %v1154
        %v1243 = vsub.f32 0.0, %v1163
        %v1244 = vsub.f32 0.0, %v1172
        %v1245 = vsub.f32 0.0, %v1181
        %v1246 = vsub.f32 0.0, %v1190
        %v1247 = vsub.f32 0.0, %v1199
        %v1248 = vsub.f32 0.0, %v1208
        %v1249 = vsub.f32 0.0, %v1217
        %vm1250 = vcmp.gt.f32.partialorder %v802, 20.0
        %vm1251 = vcmp.gt.f32.partialorder %v803, 20.0
        %vm1252 = vcmp.gt.f32.partialorder %v804, 20.0
        %vm1253 = vcmp.gt.f32.partialorder %v805, 20.0
        %vm1254 = vcmp.gt.f32.partialorder %v806, 20.0
        %vm1255 = vcmp.gt.f32.partialorder %v807, 20.0
        %vm1256 = vcmp.gt.f32.partialorder %v808, 20.0
        %vm1257 = vcmp.gt.f32.partialorder %v809, 20.0
        %vm1258 = vcmp.gt.f32.partialorder %v810, 20.0
        %vm1259 = vcmp.gt.f32.partialorder %v811, 20.0
        %vm1260 = vcmp.gt.f32.partialorder %v812, 20.0
        %vm1261 = vcmp.gt.f32.partialorder %v813, 20.0
        %vm1262 = vcmp.gt.f32.partialorder %v814, 20.0
        %vm1263 = vcmp.gt.f32.partialorder %v815, 20.0
        %vm1264 = vcmp.gt.f32.partialorder %v816, 20.0
        %vm1265 = vcmp.gt.f32.partialorder %v817, 20.0
        %vm1266 = vcmp.gt.f32.partialorder %v818, 20.0
        %vm1267 = vcmp.gt.f32.partialorder %v819, 20.0
        %vm1268 = vcmp.gt.f32.partialorder %v820, 20.0
        %vm1269 = vcmp.gt.f32.partialorder %v821, 20.0
        %vm1270 = vcmp.gt.f32.partialorder %v822, 20.0
        %vm1271 = vcmp.gt.f32.partialorder %v823, 20.0
        %vm1272 = vcmp.gt.f32.partialorder %v824, 20.0
        %vm1273 = vcmp.gt.f32.partialorder %v825, 20.0
        %vm1274 = vcmp.gt.f32.partialorder %v826, 20.0
        %vm1275 = vcmp.gt.f32.partialorder %v827, 20.0
        %vm1276 = vcmp.gt.f32.partialorder %v828, 20.0
        %vm1277 = vcmp.gt.f32.partialorder %v829, 20.0
        %vm1278 = vcmp.gt.f32.partialorder %v830, 20.0
        %vm1279 = vcmp.gt.f32.partialorder %v831, 20.0
        %vm1280 = vcmp.gt.f32.partialorder %v832, 20.0
        %vm1281 = vcmp.gt.f32.partialorder %v833, 20.0
        %v1282 = vsel %vm1250, %v770, %v1218
        %v1283 = vsel %vm1251, %v771, %v1219
        %v1284 = vsel %vm1252, %v772, %v1220
        %v1285 = vsel %vm1253, %v773, %v1221
        %v1286 = vsel %vm1254, %v774, %v1222
        %v1287 = vsel %vm1255, %v775, %v1223
        %v1288 = vsel %vm1256, %v776, %v1224
        %v1289 = vsel %vm1257, %v777, %v1225
        %v1290 = vsel %vm1258, %v778, %v1226
        %v1291 = vsel %vm1259, %v779, %v1227
        %v1292 = vsel %vm1260, %v780, %v1228
        %v1293 = vsel %vm1261, %v781, %v1229
        %v1294 = vsel %vm1262, %v782, %v1230
        %v1295 = vsel %vm1263, %v783, %v1231
        %v1296 = vsel %vm1264, %v784, %v1232
        %v1297 = vsel %vm1265, %v785, %v1233
        %v1298 = vsel %vm1266, %v786, %v1234
        %v1299 = vsel %vm1267, %v787, %v1235
        %v1300 = vsel %vm1268, %v788, %v1236
        %v1301 = vsel %vm1269, %v789, %v1237
        %v1302 = vsel %vm1270, %v790, %v1238
        %v1303 = vsel %vm1271, %v791, %v1239
        %v1304 = vsel %vm1272, %v792, %v1240
        %v1305 = vsel %vm1273, %v793, %v1241
        %v1306 = vsel %vm1274, %v794, %v1242
        %v1307 = vsel %vm1275, %v795, %v1243
        %v1308 = vsel %vm1276, %v796, %v1244
        %v1309 = vsel %vm1277, %v797, %v1245
        %v1310 = vsel %vm1278, %v798, %v1246
        %v1311 = vsel %vm1279, %v799, %v1247
        %v1312 = vsel %vm1280, %v800, %v1248
        %v1313 = vsel %vm1281, %v801, %v1249
        %v1314 = vstv %s735
        %v1315 = vmul.f32 %v1314, %v1282
        %v1316 = vmul.f32 %v1314, %v1283
        %v1317 = vmul.f32 %v1314, %v1284
        %v1318 = vmul.f32 %v1314, %v1285
        %v1319 = vmul.f32 %v1314, %v1286
        %v1320 = vmul.f32 %v1314, %v1287
        %v1321 = vmul.f32 %v1314, %v1288
        %v1322 = vmul.f32 %v1314, %v1289
        %v1323 = vmul.f32 %v1314, %v1290
        %v1324 = vmul.f32 %v1314, %v1291
        %v1325 = vmul.f32 %v1314, %v1292
        %v1326 = vmul.f32 %v1314, %v1293
        %v1327 = vmul.f32 %v1314, %v1294
        %v1328 = vmul.f32 %v1314, %v1295
        %v1329 = vmul.f32 %v1314, %v1296
        %v1330 = vmul.f32 %v1314, %v1297
        %v1331 = vmul.f32 %v1314, %v1298
        %v1332 = vmul.f32 %v1314, %v1299
        %v1333 = vmul.f32 %v1314, %v1300
        %v1334 = vmul.f32 %v1314, %v1301
        %v1335 = vmul.f32 %v1314, %v1302
        %v1336 = vmul.f32 %v1314, %v1303
        %v1337 = vmul.f32 %v1314, %v1304
        %v1338 = vmul.f32 %v1314, %v1305
        %v1339 = vmul.f32 %v1314, %v1306
        %v1340 = vmul.f32 %v1314, %v1307
        %v1341 = vmul.f32 %v1314, %v1308
        %v1342 = vmul.f32 %v1314, %v1309
        %v1343 = vmul.f32 %v1314, %v1310
        %v1344 = vmul.f32 %v1314, %v1311
        %v1345 = vmul.f32 %v1314, %v1312
        %v1346 = vmul.f32 %v1314, %v1313
        %v1347 = vmul.f32 %v1315, 1.442695
        %v1348 = vpow.pop %v1347
        %v1349 = vmul.f32 %v1316, 1.442695
        %v1350 = vpow.pop %v1349
        %v1351 = vmul.f32 %v1317, 1.442695
        %v1352 = vpow.pop %v1351
        %v1353 = vmul.f32 %v1318, 1.442695
        %v1354 = vpow.pop %v1353
        %v1355 = vmul.f32 %v1319, 1.442695
        %v1356 = vpow.pop %v1355
        %v1357 = vmul.f32 %v1320, 1.442695
        %v1358 = vpow.pop %v1357
        %v1359 = vmul.f32 %v1321, 1.442695
        %v1360 = vpow.pop %v1359
        %v1361 = vmul.f32 %v1322, 1.442695
        %v1362 = vpow.pop %v1361
        %v1363 = vmul.f32 %v1323, 1.442695
        %v1364 = vpow.pop %v1363
        %v1365 = vmul.f32 %v1324, 1.442695
        %v1366 = vpow.pop %v1365
        %v1367 = vmul.f32 %v1325, 1.442695
        %v1368 = vpow.pop %v1367
        %v1369 = vmul.f32 %v1326, 1.442695
        %v1370 = vpow.pop %v1369
        %v1371 = vmul.f32 %v1327, 1.442695
        %v1372 = vpow.pop %v1371
        %v1373 = vmul.f32 %v1328, 1.442695
        %v1374 = vpow.pop %v1373
        %v1375 = vmul.f32 %v1329, 1.442695
        %v1376 = vpow.pop %v1375
        %v1377 = vmul.f32 %v1330, 1.442695
        %v1378 = vpow.pop %v1377
        %v1379 = vmul.f32 %v1331, 1.442695
        %v1380 = vpow.pop %v1379
        %v1381 = vmul.f32 %v1332, 1.442695
        %v1382 = vpow.pop %v1381
        %v1383 = vmul.f32 %v1333, 1.442695
        %v1384 = vpow.pop %v1383
        %v1385 = vmul.f32 %v1334, 1.442695
        %v1386 = vpow.pop %v1385
        %v1387 = vmul.f32 %v1335, 1.442695
        %v1388 = vpow.pop %v1387
        %v1389 = vmul.f32 %v1336, 1.442695
        %v1390 = vpow.pop %v1389
        %v1391 = vmul.f32 %v1337, 1.442695
        %v1392 = vpow.pop %v1391
        %v1393 = vmul.f32 %v1338, 1.442695
        %v1394 = vpow.pop %v1393
        %v1395 = vmul.f32 %v1339, 1.442695
        %v1396 = vpow.pop %v1395
        %v1397 = vmul.f32 %v1340, 1.442695
        %v1398 = vpow.pop %v1397
        %v1399 = vmul.f32 %v1341, 1.442695
        %v1400 = vpow.pop %v1399
        %v1401 = vmul.f32 %v1342, 1.442695
        %v1402 = vpow.pop %v1401
        %v1403 = vmul.f32 %v1343, 1.442695
        %v1404 = vpow.pop %v1403
        %v1405 = vmul.f32 %v1344, 1.442695
        %v1406 = vpow.pop %v1405
        %v1407 = vmul.f32 %v1345, 1.442695
        %v1408 = vpow.pop %v1407
        %v1409 = vmul.f32 %v1346, 1.442695
        %v1410 = vpow.pop %v1409
        %v1411 = vmul.f32 %v1348, %v701
        %v1412 = vmul.f32 %v1350, %v702
        %v1413 = vmul.f32 %v1352, %v703
        %v1414 = vmul.f32 %v1354, %v704
        %v1415 = vmul.f32 %v1356, %v705
        %v1416 = vmul.f32 %v1358, %v706
        %v1417 = vmul.f32 %v1360, %v707
        %v1418 = vmul.f32 %v1362, %v708
        %v1419 = vmul.f32 %v1364, %v709
        %v1420 = vmul.f32 %v1366, %v710
        %v1421 = vmul.f32 %v1368, %v711
        %v1422 = vmul.f32 %v1370, %v712
        %v1423 = vmul.f32 %v1372, %v713
        %v1424 = vmul.f32 %v1374, %v714
        %v1425 = vmul.f32 %v1376, %v715
        %v1426 = vmul.f32 %v1378, %v716
        %v1427 = vmul.f32 %v1380, %v717
        %v1428 = vmul.f32 %v1382, %v718
        %v1429 = vmul.f32 %v1384, %v719
        %v1430 = vmul.f32 %v1386, %v720
        %v1431 = vmul.f32 %v1388, %v721
        %v1432 = vmul.f32 %v1390, %v722
        %v1433 = vmul.f32 %v1392, %v723
        %v1434 = vmul.f32 %v1394, %v724
        %v1435 = vmul.f32 %v1396, %v725
        %v1436 = vmul.f32 %v1398, %v726
        %v1437 = vmul.f32 %v1400, %v727
        %v1438 = vmul.f32 %v1402, %v728
        %v1439 = vmul.f32 %v1404, %v729
        %v1440 = vmul.f32 %v1406, %v730
        %v1441 = vmul.f32 %v1408, %v731
        %v1442 = vmul.f32 %v1410, %v732
        %1443 = vxpose.xlu0.b32.start [1/16] %v1411, 128
        %1444 = vxpose.xlu0.b32.cont [2/16] %v1412, 128
        %1445 = vxpose.xlu0.b32.cont [3/16] %v1413, 128
        %1446 = vxpose.xlu0.b32.cont [4/16] %v1414, 128
        %1447 = vxpose.xlu0.b32.cont [5/16] %v1415, 128
        %1448 = vxpose.xlu0.b32.cont [6/16] %v1416, 128
        %1449 = vxpose.xlu0.b32.cont [7/16] %v1417, 128
        %1450 = vxpose.xlu0.b32.cont [8/16] %v1418, 128
        %1451 = vxpose.xlu0.b32.cont [9/16] %v1419, 128
        %1452 = vxpose.xlu0.b32.cont [10/16] %v1420, 128
        %1453 = vxpose.xlu0.b32.cont [11/16] %v1421, 128
        %1454 = vxpose.xlu0.b32.cont [12/16] %v1422, 128
        %1455 = vxpose.xlu0.b32.cont [13/16] %v1423, 128
        %1456 = vxpose.xlu0.b32.cont [14/16] %v1424, 128
        %1457 = vxpose.xlu0.b32.cont [15/16] %v1425, 128
        %1458 = vxpose.xlu0.b32.end [16/16] %v1426, 128
        %v1459 = vpop.trf.xlu0
        %v1460 = vpop.trf.xlu0
        %v1461 = vpop.trf.xlu0
        %v1462 = vpop.trf.xlu0
        %v1463 = vpop.trf.xlu0
        %v1464 = vpop.trf.xlu0
        %v1465 = vpop.trf.xlu0
        %v1466 = vpop.trf.xlu0
        %v1467 = vpop.trf.xlu0
        %v1468 = vpop.trf.xlu0
        %v1469 = vpop.trf.xlu0
        %v1470 = vpop.trf.xlu0
        %v1471 = vpop.trf.xlu0
        %v1472 = vpop.trf.xlu0
        %v1473 = vpop.trf.xlu0
        %v1474 = vpop.trf.xlu0
        %1475 = vxpose.xlu0.b32.start [1/16] %v1427, 128
        %1476 = vxpose.xlu0.b32.cont [2/16] %v1428, 128
        %1477 = vxpose.xlu0.b32.cont [3/16] %v1429, 128
        %1478 = vxpose.xlu0.b32.cont [4/16] %v1430, 128
        %1479 = vxpose.xlu0.b32.cont [5/16] %v1431, 128
        %1480 = vxpose.xlu0.b32.cont [6/16] %v1432, 128
        %1481 = vxpose.xlu0.b32.cont [7/16] %v1433, 128
        %1482 = vxpose.xlu0.b32.cont [8/16] %v1434, 128
        %1483 = vxpose.xlu0.b32.cont [9/16] %v1435, 128
        %1484 = vxpose.xlu0.b32.cont [10/16] %v1436, 128
        %1485 = vxpose.xlu0.b32.cont [11/16] %v1437, 128
        %1486 = vxpose.xlu0.b32.cont [12/16] %v1438, 128
        %1487 = vxpose.xlu0.b32.cont [13/16] %v1439, 128
        %1488 = vxpose.xlu0.b32.cont [14/16] %v1440, 128
        %1489 = vxpose.xlu0.b32.cont [15/16] %v1441, 128
        %1490 = vxpose.xlu0.b32.end [16/16] %v1442, 128
        %v1491 = vpop.trf.xlu0
        %v1492 = vpop.trf.xlu0
        %v1493 = vpop.trf.xlu0
        %v1494 = vpop.trf.xlu0
        %v1495 = vpop.trf.xlu0
        %v1496 = vpop.trf.xlu0
        %v1497 = vpop.trf.xlu0
        %v1498 = vpop.trf.xlu0
        %v1499 = vpop.trf.xlu0
        %v1500 = vpop.trf.xlu0
        %v1501 = vpop.trf.xlu0
        %v1502 = vpop.trf.xlu0
        %v1503 = vpop.trf.xlu0
        %v1504 = vpop.trf.xlu0
        %v1505 = vpop.trf.xlu0
        %v1506 = vpop.trf.xlu0
        %1507 = vst [vmem:[%s436] sm:$0xff] %v1459
        %1508 = vst [vmem:[%s436 + $0x8] sm:$0xff] %v1491
        %1509 = vst [vmem:[%s436 + $0x10] sm:$0xff] %v1460
        %1510 = vst [vmem:[%s436 + $0x18] sm:$0xff] %v1492
        %1511 = vst [vmem:[%s436 + $0x20] sm:$0xff] %v1461
        %1512 = vst [vmem:[%s436 + $0x28] sm:$0xff] %v1493
        %1513 = vst [vmem:[%s436 + $0x30] sm:$0xff] %v1462
        %1514 = vst [vmem:[%s436 + $0x38] sm:$0xff] %v1494
        %1515 = vst [vmem:[%s436 + $0x40] sm:$0xff] %v1463
        %1516 = vst [vmem:[%s436 + $0x48] sm:$0xff] %v1495
        %1517 = vst [vmem:[%s436 + $0x50] sm:$0xff] %v1464
        %1518 = vst [vmem:[%s436 + $0x58] sm:$0xff] %v1496
        %1519 = vst [vmem:[%s436 + $0x60] sm:$0xff] %v1465
        %1520 = vst [vmem:[%s436 + $0x68] sm:$0xff] %v1497
        %1521 = vst [vmem:[%s436 + $0x70] sm:$0xff] %v1466
        %1522 = vst [vmem:[%s436 + $0x78] sm:$0xff] %v1498
        %1523 = vst [vmem:[%s436 + $0x80] sm:$0xff] %v1467
        %1524 = vst [vmem:[%s436 + $0x88] sm:$0xff] %v1499
        %1525 = vst [vmem:[%s436 + $0x90] sm:$0xff] %v1468
        %1526 = vst [vmem:[%s436 + $0x98] sm:$0xff] %v1500
        %1527 = vst [vmem:[%s436 + $0xa0] sm:$0xff] %v1469
        %1528 = vst [vmem:[%s436 + $0xa8] sm:$0xff] %v1501
        %1529 = vst [vmem:[%s436 + $0xb0] sm:$0xff] %v1470
        %1530 = vst [vmem:[%s436 + $0xb8] sm:$0xff] %v1502
        %1531 = vst [vmem:[%s436 + $0xc0] sm:$0xff] %v1471
        %1532 = vst [vmem:[%s436 + $0xc8] sm:$0xff] %v1503
        %1533 = vst [vmem:[%s436 + $0xd0] sm:$0xff] %v1472
        %1534 = vst [vmem:[%s436 + $0xd8] sm:$0xff] %v1504
        %1535 = vst [vmem:[%s436 + $0xe0] sm:$0xff] %v1473
        %1536 = vst [vmem:[%s436 + $0xe8] sm:$0xff] %v1505
        %1537 = vst [vmem:[%s436 + $0xf0] sm:$0xff] %v1474
        %1538 = vst [vmem:[%s436 + $0xf8] sm:$0xff] %v1506
        %s1539 = sand.u32 %s215, 1
        %s1540 = scalar_lea.sflag [#allocation4], %s1539
        %s1541 = sand.u32 %s215, 1
        %s1542 = smul.addr %s1541, 256
        %s1543 = scalar_lea.vmem [#allocation14], %s1542
        // Predicated region
        $region77: #{se_bottleneck_forward.3} parent=47 // pred_check
          %p1544 = pneg %p225
        $region78: #{se_bottleneck_forward.3} parent=47 // pred_check_branch
          %1546 = sbr.rel (%p1544) target = $region80
        $region79: #{se_bottleneck_forward.3} parent=47 // pred_region
          %s1547 = smul.u32 2, %s32
          %s1549 = ssub.s32 4096, 4096
          %1550 = vsyncadd %s1540, %s1549
          %s1551 = smul.addr %s31, 32
          %s1552 = sadd.s32 %s1547, %s1551
          %s1553 = smul.addr %s1552, 128
          %s1554 = scalar_lea.hbm %s7, %s1553
          %s1555 = sshll.u32 %s1543, 4
          %s1556 = int_to_ptr.vmem [resolvable:$true] %s1555
          %1561 = dma.vmem_to_hbm [thread:$0]  %s1556, 4096, %s1554, %s1540, 256, 256, 16
        $region80: #{se_bottleneck_forward.3} parent=47 // pred_fallthru
          _
      $region48: #{se_bottleneck_forward.3} parent=5 // pred_fallthru
        _
      %p1562 = scmp.le.s32.totalorder 2, %s22
      // Predicated region
      $region81: #{se_bottleneck_forward.3} parent=5 // pred_check
        %p1563 = pneg %p1562
      $region82: #{se_bottleneck_forward.3} parent=5 // pred_check_branch
        %1565 = sbr.rel (%p1563) target = $region84
      $region83: #{se_bottleneck_forward.3} parent=5 // pred_region
        %s1566 = ssub.s32 %s22, 2
        // Predicated region
        $region85: #{se_bottleneck_forward.3} parent=83 // pred_check
          %p1567 = pneg %p231
        $region86: #{se_bottleneck_forward.3} parent=83 // pred_check_branch
          %1569 = sbr.rel (%p1567) target = $region88
        $region87: #{se_bottleneck_forward.3} parent=83 // pred_region
          %s1570 = sand.u32 %s216, 1
          %s1571 = scalar_lea.sflag [#allocation4], %s1570
          %s1572 = sand.u32 %s216, 1
          %s1573 = smul.addr %s1572, 256
          %s1574 = scalar_lea.vmem [#allocation14], %s1573
          %1575 = dma.done %s1571, 4096
        $region88: #{se_bottleneck_forward.3} parent=83 // pred_fallthru
          _
      $region84: #{se_bottleneck_forward.3} parent=5 // pred_fallthru
        _
    $region6: #{se_bottleneck_forward.3} parent=1 // loop_footer
      %s26 = sadd.s32 1, %s22
    $region7: #{se_bottleneck_forward.3} parent=1 // loop_footer_branch
      %21 = sbr.rel target = $region3
    $region8: #{se_bottleneck_forward.3} parent=1 // loop_exit
      _
    %1576 = vsyncpa [#allocation3], 1
    %s1577 = scalar_lea.sflag [#allocation3], 1
    %1578 = vsyncpa %s1577, 1
    %1579 = vsyncpa [#allocation7], 1
    %1580 = vsyncpa [#allocation10], 1
    %1581 = vsyncpa [#allocation4], 1
    %s1582 = scalar_lea.sflag [#allocation4], 1
    %1583 = vsyncpa %s1582, 1
    %1584 = vsyncpa [#allocation5], 1
    %s1585 = scalar_lea.sflag [#allocation5], 1
    %1586 = vsyncpa %s1585, 1

// kernel: se_bottleneck_forward.2
$region0: #{se_bottleneck_forward.2}
  #allocation0 [shape = 'u32[]', space=smem, size = 0x4, offset = 0x4, fixed_abs, tag = 'smem constant byte address 0x4 - core index']
  #allocation1 [shape = 'u32[144,128]{1,0:T(1,128)}', space=vmem, size = 0x12000, scoped, tag = 'internal scratch']
  %s0 = inlined_call_operand.hbm [shape: f32[2,128,256], index: 0, kind: input, shape index: {}]
  %s1 = inlined_call_operand.hbm [shape: bf16[128,32], index: 1, kind: input, shape index: {}]
  %s2 = inlined_call_operand.hbm [shape: f32[2,32], index: 2, kind: input, shape index: {}]
  %s3 = inlined_call_operand.hbm [shape: bf16[288,32], index: 3, kind: input, shape index: {}]
  %s4 = inlined_call_operand.hbm [shape: f32[2,32], index: 4, kind: input, shape index: {}]
  %s5 = inlined_call_operand.hbm [shape: bf16[32,128], index: 5, kind: input, shape index: {}]
  %s6 = inlined_call_operand.hbm [shape: f32[2,128], index: 6, kind: input, shape index: {}]
  %s7 = inlined_call_operand.hbm [shape: f32[6], index: 7, kind: input, shape index: {}]
  %s8 = inlined_call_operand.hbm [shape: bf16[2,256,128], index: 8, kind: output, shape index: {0}]
  %s9 = inlined_call_operand.hbm [shape: f32[2,1,128], index: 9, kind: output, shape index: {1}]
  %10 = xla_tuple %s8, %s9
  %s11 = sld [smem:[#allocation0]]
  $region105: #{se_bottleneck_forward.2} parent=0
    _
  %s13 = ssub.s32 1, %s11
  %s14 = scalar_select 0, %s13, %s11
  $region1: #{se_bottleneck_forward.2} parent=0
    #allocation2 [shape = 'u8[262144]{0}', space=vmem, size = 0x40000, scoped, tag = 'input window, operand 0']
    #allocation3 [shape = 's32[2]{0}', space=sflag, size = 0x8, scoped, tag = 'scoped memory for se_bottleneck_forward.2']
    #allocation4 [shape = 's32[2]{0}', space=sflag, size = 0x8, scoped, tag = 'scoped memory for se_bottleneck_forward.2']
    #allocation5 [shape = 's32[2]{0}', space=sflag, size = 0x8, scoped, tag = 'scoped memory for se_bottleneck_forward.2']
    #allocation6 [shape = 'u8[32768]{0}', space=vmem, size = 0x8000, scoped, tag = 'input window, operand 1, single buffered']
    #allocation7 [shape = 's32[1]{0}', space=sflag, size = 0x4, scoped, tag = 'scoped memory for se_bottleneck_forward.2']
    #allocation8 [shape = 'u8[1024]{0}', space=vmem, size = 0x400, scoped, tag = 'input window, operand 2, single buffered']
    #allocation9 [shape = 'u8[73728]{0}', space=vmem, size = 0x12000, scoped, tag = 'input window, operand 3, single buffered']
    #allocation10 [shape = 's32[1]{0}', space=sflag, size = 0x4, scoped, tag = 'scoped memory for se_bottleneck_forward.2']
    #allocation11 [shape = 'u8[1024]{0}', space=vmem, size = 0x400, scoped, tag = 'input window, operand 4, single buffered']
    #allocation12 [shape = 'u8[8192]{0}', space=vmem, size = 0x2000, scoped, tag = 'input window, operand 5, single buffered']
    #allocation13 [shape = 's32[1]{0}', space=sflag, size = 0x4, scoped, tag = 'scoped memory for se_bottleneck_forward.2']
    #allocation14 [shape = 'u8[1024]{0}', space=vmem, size = 0x400, scoped, tag = 'input window, operand 6, single buffered']
    #allocation15 [shape = 'u8[512]{0}', space=smem, size = 0x200, scoped, tag = 'input window, operand 7, single buffered']
    #allocation16 [shape = 'u8[131072]{0}', space=vmem, size = 0x20000, scoped, tag = 'output window, operand 0']
    #allocation17 [shape = 'u8[1024]{0}', space=vmem, size = 0x400, scoped, tag = 'output window, operand 1']
    #allocation18 [shape = 's32[2]{0}', space=sflag, size = 0x8, scoped, tag = 'scoped memory for se_bottleneck_forward.2']
    %15 = vsyncpa [#allocation3], 0
    %s16 = scalar_lea.sflag [#allocation3], 1
    %17 = vsyncpa %s16, 0
    %18 = vsyncpa [#allocation7], 0
    %19 = vsyncpa [#allocation10], 0
    %20 = vsyncpa [#allocation13], 0
    %21 = vsyncpa [#allocation5], 0
    %22 = vsyncpa [#allocation4], 0
    %s23 = scalar_lea.sflag [#allocation4], 1
    %24 = vsyncpa %s23, 0
    %25 = vsyncpa [#allocation18], 0
    %s26 = scalar_lea.sflag [#allocation18], 1
    %27 = vsyncpa %s26, 0
    loop: start=0, step=1, limit=4
    $region2: #{se_bottleneck_forward.2} parent=1 // loop_pre_header
      _
    $region3: #{se_bottleneck_forward.2} parent=1 // loop_header
      %s29 = sphi 0, %s33
      %p30 = scmp.ge.s32.totalorder %s29, 4
      %s39 = sphi 0, %s41
      %s42 = sphi 0, %s39
      %s43 = sphi 0, %s42
      %s59 = sphi 0, %s43
      %s63 = sphi 0, %s63
      %s65 = sphi 0, %s63
      %s66 = sphi 0, %s65
      %s80 = sphi 0, %s66
      %s84 = sphi 0, %s84
      %s86 = sphi 0, %s84
      %s87 = sphi 0, %s86
      %s101 = sphi 0, %s87
      %s105 = sphi 0, %s105
      %s107 = sphi 0, %s105
      %s108 = sphi 0, %s107
      %s122 = sphi 0, %s108
      %s126 = sphi 0, %s126
      %s128 = sphi 0, %s126
      %s129 = sphi 0, %s128
      %s143 = sphi 0, %s129
      %s147 = sphi 0, %s147
      %s149 = sphi 0, %s147
      %s150 = sphi 0, %s149
      %s164 = sphi 0, %s150
      %s168 = sphi 0, %s168
      %s170 = sphi 0, %s168
      %s171 = sphi 0, %s170
      %s185 = sphi 0, %s171
      %s189 = sphi 0, %s189
      %s191 = sphi 0, %s189
      %s192 = sphi 0, %s191
      %s206 = sphi 0, %s192
      %s212 = sphi 0, %s214
      %s215 = sphi 0, %s212
      %s216 = sphi 0, %s215
      %s232 = sphi 0, %s216
      %s238 = sphi 0, %s240
      %s241 = sphi 0, %s238
      %s242 = sphi 0, %s241
      %s258 = sphi 0, %s242
    $region4: #{se_bottleneck_forward.2} parent=1 // loop_header_branch
      %32 = sbr.rel (%p30) target = $region8
    $region5: #{se_bottleneck_forward.2} parent=1 // loop_body
      %s34 = ssub.s32 %s29, 1
      %s35 = ssub.s32 %s29, 2
      %s36 = sadd.s32 %s29, 1
      %s37 = ssub.s32 %s29, %s36
      %p38 = scmp.eq.s32.totalorder %s37, 0
      %s40 = sadd.s32 %s39, 1
      %s41 = scalar_select %p38, %s39, %s40
      %p44 = pneg %p38
      %p45 = scmp.eq.s32.totalorder %s29, 1
      %p46 = por %p44, %p45
      %p47 = scmp.ne.s32.totalorder %s39, %s42
      %p48 = scmp.eq.s32.totalorder %s29, 0
      %p49 = por %p47, %p48
      %p50 = scmp.ne.s32.totalorder %s39, %s42
      %p51 = scmp.eq.s32.totalorder %s34, 1
      %p52 = por %p50, %p51
      %p53 = scmp.ne.s32.totalorder %s42, %s43
      %p54 = scmp.eq.s32.totalorder %s34, 0
      %p55 = por %p53, %p54
      %p56 = scmp.ne.s32.totalorder %s42, %s43
      %p57 = scmp.eq.s32.totalorder %s35, 1
      %p58 = por %p56, %p57
      %p60 = scmp.ne.s32.totalorder %s43, %s59
      %p61 = scmp.eq.s32.totalorder %s35, 0
      %p62 = por %p60, %p61
      %s64 = sadd.s32 %s63, 1
      %p67 = scmp.eq.s32.totalorder %s29, 1
      %p68 = scmp.ne.s32.totalorder %s63, %s65
      %p69 = scmp.eq.s32.totalorder %s29, 0
      %p70 = por %p68, %p69
      %p71 = scmp.ne.s32.totalorder %s63, %s65
      %p72 = scmp.eq.s32.totalorder %s34, 1
      %p73 = por %p71, %p72
      %p74 = scmp.ne.s32.totalorder %s65, %s66
      %p75 = scmp.eq.s32.totalorder %s34, 0
      %p76 = por %p74, %p75
      %p77 = scmp.ne.s32.totalorder %s65, %s66
      %p78 = scmp.eq.s32.totalorder %s35, 1
      %p79 = por %p77, %p78
      %p81 = scmp.ne.s32.totalorder %s66, %s80
      %p82 = scmp.eq.s32.totalorder %s35, 0
      %p83 = por %p81, %p82
      %s85 = sadd.s32 %s84, 1
      %p88 = scmp.eq.s32.totalorder %s29, 1
      %p89 = scmp.ne.s32.totalorder %s84, %s86
      %p90 = scmp.eq.s32.totalorder %s29, 0
      %p91 = por %p89, %p90
      %p92 = scmp.ne.s32.totalorder %s84, %s86
      %p93 = scmp.eq.s32.totalorder %s34, 1
      %p94 = por %p92, %p93
      %p95 = scmp.ne.s32.totalorder %s86, %s87
      %p96 = scmp.eq.s32.totalorder %s34, 0
      %p97 = por %p95, %p96
      %p98 = scmp.ne.s32.totalorder %s86, %s87
      %p99 = scmp.eq.s32.totalorder %s35, 1
      %p100 = por %p98, %p99
      %p102 = scmp.ne.s32.totalorder %s87, %s101
      %p103 = scmp.eq.s32.totalorder %s35, 0
      %p104 = por %p102, %p103
      %s106 = sadd.s32 %s105, 1
      %p109 = scmp.eq.s32.totalorder %s29, 1
      %p110 = scmp.ne.s32.totalorder %s105, %s107
      %p111 = scmp.eq.s32.totalorder %s29, 0
      %p112 = por %p110, %p111
      %p113 = scmp.ne.s32.totalorder %s105, %s107
      %p114 = scmp.eq.s32.totalorder %s34, 1
      %p115 = por %p113, %p114
      %p116 = scmp.ne.s32.totalorder %s107, %s108
      %p117 = scmp.eq.s32.totalorder %s34, 0
      %p118 = por %p116, %p117
      %p119 = scmp.ne.s32.totalorder %s107, %s108
      %p120 = scmp.eq.s32.totalorder %s35, 1
      %p121 = por %p119, %p120
      %p123 = scmp.ne.s32.totalorder %s108, %s122
      %p124 = scmp.eq.s32.totalorder %s35, 0
      %p125 = por %p123, %p124
      %s127 = sadd.s32 %s126, 1
      %p130 = scmp.eq.s32.totalorder %s29, 1
      %p131 = scmp.ne.s32.totalorder %s126, %s128
      %p132 = scmp.eq.s32.totalorder %s29, 0
      %p133 = por %p131, %p132
      %p134 = scmp.ne.s32.totalorder %s126, %s128
      %p135 = scmp.eq.s32.totalorder %s34, 1
      %p136 = por %p134, %p135
      %p137 = scmp.ne.s32.totalorder %s128, %s129
      %p138 = scmp.eq.s32.totalorder %s34, 0
      %p139 = por %p137, %p138
      %p140 = scmp.ne.s32.totalorder %s128, %s129
      %p141 = scmp.eq.s32.totalorder %s35, 1
      %p142 = por %p140, %p141
      %p144 = scmp.ne.s32.totalorder %s129, %s143
      %p145 = scmp.eq.s32.totalorder %s35, 0
      %p146 = por %p144, %p145
      %s148 = sadd.s32 %s147, 1
      %p151 = scmp.eq.s32.totalorder %s29, 1
      %p152 = scmp.ne.s32.totalorder %s147, %s149
      %p153 = scmp.eq.s32.totalorder %s29, 0
      %p154 = por %p152, %p153
      %p155 = scmp.ne.s32.totalorder %s147, %s149
      %p156 = scmp.eq.s32.totalorder %s34, 1
      %p157 = por %p155, %p156
      %p158 = scmp.ne.s32.totalorder %s149, %s150
      %p159 = scmp.eq.s32.totalorder %s34, 0
      %p160 = por %p158, %p159
      %p161 = scmp.ne.s32.totalorder %s149, %s150
      %p162 = scmp.eq.s32.totalorder %s35, 1
      %p163 = por %p161, %p162
      %p165 = scmp.ne.s32.totalorder %s150, %s164
      %p166 = scmp.eq.s32.totalorder %s35, 0
      %p167 = por %p165, %p166
      %s169 = sadd.s32 %s168, 1
      %p172 = scmp.eq.s32.totalorder %s29, 1
      %p173 = scmp.ne.s32.totalorder %s168, %s170
      %p174 = scmp.eq.s32.totalorder %s29, 0
      %p175 = por %p173, %p174
      %p176 = scmp.ne.s32.totalorder %s168, %s170
      %p177 = scmp.eq.s32.totalorder %s34, 1
      %p178 = por %p176, %p177
      %p179 = scmp.ne.s32.totalorder %s170, %s171
      %p180 = scmp.eq.s32.totalorder %s34, 0
      %p181 = por %p179, %p180
      %p182 = scmp.ne.s32.totalorder %s170, %s171
      %p183 = scmp.eq.s32.totalorder %s35, 1
      %p184 = por %p182, %p183
      %p186 = scmp.ne.s32.totalorder %s171, %s185
      %p187 = scmp.eq.s32.totalorder %s35, 0
      %p188 = por %p186, %p187
      %s190 = sadd.s32 %s189, 1
      %p193 = scmp.eq.s32.totalorder %s29, 1
      %p194 = scmp.ne.s32.totalorder %s189, %s191
      %p195 = scmp.eq.s32.totalorder %s29, 0
      %p196 = por %p194, %p195
      %p197 = scmp.ne.s32.totalorder %s189, %s191
      %p198 = scmp.eq.s32.totalorder %s34, 1
      %p199 = por %p197, %p198
      %p200 = scmp.ne.s32.totalorder %s191, %s192
      %p201 = scmp.eq.s32.totalorder %s34, 0
      %p202 = por %p200, %p201
      %p203 = scmp.ne.s32.totalorder %s191, %s192
      %p204 = scmp.eq.s32.totalorder %s35, 1
      %p205 = por %p203, %p204
      %p207 = scmp.ne.s32.totalorder %s192, %s206
      %p208 = scmp.eq.s32.totalorder %s35, 0
      %p209 = por %p207, %p208
      %s210 = ssub.s32 %s29, %s36
      %p211 = scmp.eq.s32.totalorder %s210, 0
      %s213 = sadd.s32 %s212, 1
      %s214 = scalar_select %p211, %s212, %s213
      %p217 = pneg %p211
      %p218 = scmp.eq.s32.totalorder %s29, 1
      %p219 = por %p217, %p218
      %p220 = scmp.ne.s32.totalorder %s212, %s215
      %p221 = scmp.eq.s32.totalorder %s29, 0
      %p222 = por %p220, %p221
      %p223 = scmp.ne.s32.totalorder %s212, %s215
      %p224 = scmp.eq.s32.totalorder %s34, 1
      %p225 = por %p223, %p224
      %p226 = scmp.ne.s32.totalorder %s215, %s216
      %p227 = scmp.eq.s32.totalorder %s34, 0
      %p228 = por %p226, %p227
      %p229 = scmp.ne.s32.totalorder %s215, %s216
      %p230 = scmp.eq.s32.totalorder %s35, 1
      %p231 = por %p229, %p230
      %p233 = scmp.ne.s32.totalorder %s216, %s232
      %p234 = scmp.eq.s32.totalorder %s35, 0
      %p235 = por %p233, %p234
      %s236 = ssub.s32 %s29, %s36
      %p237 = scmp.eq.s32.totalorder %s236, 0
      %s239 = sadd.s32 %s238, 1
      %s240 = scalar_select %p237, %s238, %s239
      %p243 = pneg %p237
      %p244 = scmp.eq.s32.totalorder %s29, 1
      %p245 = por %p243, %p244
      %p246 = scmp.ne.s32.totalorder %s238, %s241
      %p247 = scmp.eq.s32.totalorder %s29, 0
      %p248 = por %p246, %p247
      %p249 = scmp.ne.s32.totalorder %s238, %s241
      %p250 = scmp.eq.s32.totalorder %s34, 1
      %p251 = por %p249, %p250
      %p252 = scmp.ne.s32.totalorder %s241, %s242
      %p253 = scmp.eq.s32.totalorder %s34, 0
      %p254 = por %p252, %p253
      %p255 = scmp.ne.s32.totalorder %s241, %s242
      %p256 = scmp.eq.s32.totalorder %s35, 1
      %p257 = por %p255, %p256
      %p259 = scmp.ne.s32.totalorder %s242, %s258
      %p260 = scmp.eq.s32.totalorder %s35, 0
      %p261 = por %p259, %p260
      %p262 = scmp.le.s32.totalorder 1, %s29
      %p263 = scmp.lt.s32.totalorder %s29, 3
      %p264 = pnand %p262, %p263
      %p265 = pneg %p264
      // Predicated region
      $region9: #{se_bottleneck_forward.2} parent=5 // pred_check
        _
      $region10: #{se_bottleneck_forward.2} parent=5 // pred_check_branch
        %267 = sbr.rel (%p264) target = $region12
      $region11: #{se_bottleneck_forward.2} parent=5 // pred_region
        %s268 = ssub.s32 %s29, 1
        // Predicated region
        $region13: #{se_bottleneck_forward.2} parent=11 // pred_check
          %p269 = pneg %p76
        $region14: #{se_bottleneck_forward.2} parent=11 // pred_check_branch
          %271 = sbr.rel (%p269) target = $region16
        $region15: #{se_bottleneck_forward.2} parent=11 // pred_region
          %s273 = ssub.s32 1024, 1024
          %274 = vsyncadd [#allocation7], %s273
          %s275 = sshll.u32 [#allocation6], 4
          %s276 = int_to_ptr.vmem [resolvable:$true] %s275
          %281 = dma.hbm_to_vmem [thread:$0]  %s1, 1024, %s276, [#allocation7], 64, 64, 4
        $region16: #{se_bottleneck_forward.2} parent=11 // pred_fallthru
          _
        // Predicated region
        $region17: #{se_bottleneck_forward.2} parent=11 // pred_check
          %p282 = pneg %p97
        $region18: #{se_bottleneck_forward.2} parent=11 // pred_check_branch
          %284 = sbr.rel (%p282) target = $region20
        $region19: #{se_bottleneck_forward.2} parent=11 // pred_region
          %s286 = ssub.s32 32, 32
          %287 = vsyncadd [#allocation7], %s286
          %s289 = sshll.u32 [#allocation8], 4
          %s290 = int_to_ptr.vmem [resolvable:$true] %s289
          %292 = dma.hbm_to_vmem [thread:$0]  %s2, 32, %s290, [#allocation7]
        $region20: #{se_bottleneck_forward.2} parent=11 // pred_fallthru
          _
        // Predicated region
        $region21: #{se_bottleneck_forward.2} parent=11 // pred_check
          %p293 = pneg %p118
        $region22: #{se_bottleneck_forward.2} parent=11 // pred_check_branch
          %295 = sbr.rel (%p293) target = $region24
        $region23: #{se_bottleneck_forward.2} parent=11 // pred_region
          %s297 = ssub.s32 2304, 2304
          %298 = vsyncadd [#allocation10], %s297
          %s299 = sshll.u32 [#allocation9], 4
          %s300 = int_to_ptr.vmem [resolvable:$true] %s299
          %305 = dma.hbm_to_vmem [thread:$0]  %s3, 2304, %s300, [#allocation10], 64, 64, 4
        $region24: #{se_bottleneck_forward.2} parent=11 // pred_fallthru
          _
        // Predicated region
        $region25: #{se_bottleneck_forward.2} parent=11 // pred_check
          %p306 = pneg %p139
        $region26: #{se_bottleneck_forward.2} parent=11 // pred_check_branch
          %308 = sbr.rel (%p306) target = $region28
        $region27: #{se_bottleneck_forward.2} parent=11 // pred_region
          %s310 = ssub.s32 32, 32
          %311 = vsyncadd [#allocation10], %s310
          %s313 = sshll.u32 [#allocation11], 4
          %s314 = int_to_ptr.vmem [resolvable:$true] %s313
          %316 = dma.hbm_to_vmem [thread:$0]  %s4, 32, %s314, [#allocation10]
        $region28: #{se_bottleneck_forward.2} parent=11 // pred_fallthru
          _
        // Predicated region
        $region29: #{se_bottleneck_forward.2} parent=11 // pred_check
          %p317 = pneg %p160
        $region30: #{se_bottleneck_forward.2} parent=11 // pred_check_branch
          %319 = sbr.rel (%p317) target = $region32
        $region31: #{se_bottleneck_forward.2} parent=11 // pred_region
          %s321 = ssub.s32 256, 256
          %322 = vsyncadd [#allocation13], %s321
          %s323 = sshll.u32 [#allocation12], 4
          %s324 = int_to_ptr.vmem [resolvable:$true] %s323
          %329 = dma.hbm_to_vmem [thread:$0]  %s5, 256, %s324, [#allocation13], 64, 64, 4
        $region32: #{se_bottleneck_forward.2} parent=11 // pred_fallthru
          _
        // Predicated region
        $region33: #{se_bottleneck_forward.2} parent=11 // pred_check
          %p330 = pneg %p181
        $region34: #{se_bottleneck_forward.2} parent=11 // pred_check_branch
          %332 = sbr.rel (%p330) target = $region36
        $region35: #{se_bottleneck_forward.2} parent=11 // pred_region
          %s334 = ssub.s32 32, 32
          %335 = vsyncadd [#allocation13], %s334
          %s337 = sshll.u32 [#allocation14], 4
          %s338 = int_to_ptr.vmem [resolvable:$true] %s337
          %340 = dma.hbm_to_vmem [thread:$0]  %s6, 32, %s338, [#allocation13]
        $region36: #{se_bottleneck_forward.2} parent=11 // pred_fallthru
          _
        // Predicated region
        $region37: #{se_bottleneck_forward.2} parent=11 // pred_check
          %p341 = pneg %p202
        $region38: #{se_bottleneck_forward.2} parent=11 // pred_check_branch
          %343 = sbr.rel (%p341) target = $region40
        $region39: #{se_bottleneck_forward.2} parent=11 // pred_region
          %s345 = ssub.s32 16, 16
          %346 = vsyncadd [#allocation5], %s345
          %349 = dma.hbm_to_smem %s7, 16, [#allocation15], [#allocation5]
        $region40: #{se_bottleneck_forward.2} parent=11 // pred_fallthru
          _
      $region12: #{se_bottleneck_forward.2} parent=5 // pred_fallthru
        _
      %p350 = scmp.lt.s32.totalorder %s29, 2
      // Predicated region
      $region41: #{se_bottleneck_forward.2} parent=5 // pred_check
        %p351 = pneg %p350
      $region42: #{se_bottleneck_forward.2} parent=5 // pred_check_branch
        %353 = sbr.rel (%p351) target = $region44
      $region43: #{se_bottleneck_forward.2} parent=5 // pred_region
        // Predicated region
        $region45: #{se_bottleneck_forward.2} parent=43 // pred_check
          %p354 = pneg %p49
        $region46: #{se_bottleneck_forward.2} parent=43 // pred_check_branch
          %356 = sbr.rel (%p354) target = $region48
        $region47: #{se_bottleneck_forward.2} parent=43 // pred_region
          %s357 = sand.u32 %s39, 1
          %s358 = scalar_lea.sflag [#allocation3], %s357
          %s359 = sand.u32 %s39, 1
          %s360 = smul.addr %s359, 256
          %s361 = scalar_lea.vmem [#allocation2], %s360
          %s363 = ssub.s32 4096, 4096
          %364 = vsyncadd %s358, %s363
          %s365 = smul.addr %s29, 32
          %s366 = smul.addr %s365, 128
          %s367 = scalar_lea.hbm %s0, %s366
          %s368 = sshll.u32 %s361, 4
          %s369 = int_to_ptr.vmem [resolvable:$true] %s368
          %374 = dma.hbm_to_vmem [thread:$0]  %s367, 4096, %s369, %s358, 256, 256, 16
        $region48: #{se_bottleneck_forward.2} parent=43 // pred_fallthru
          _
      $region44: #{se_bottleneck_forward.2} parent=5 // pred_fallthru
        _
      %p375 = scmp.le.s32.totalorder 1, %s29
      %p376 = scmp.lt.s32.totalorder %s29, 3
      %p377 = pnand %p375, %p376
      %p378 = pneg %p377
      // Predicated region
      $region49: #{se_bottleneck_forward.2} parent=5 // pred_check
        _
      $region50: #{se_bottleneck_forward.2} parent=5 // pred_check_branch
        %380 = sbr.rel (%p377) target = $region52
      $region51: #{se_bottleneck_forward.2} parent=5 // pred_region
        %s381 = ssub.s32 %s29, 1
        %s382 = sand.u32 %s42, 1
        %s383 = scalar_lea.sflag [#allocation3], %s382
        %s384 = sand.u32 %s42, 1
        %s385 = smul.addr %s384, 256
        %s386 = scalar_lea.vmem [#allocation2], %s385
        // Predicated region
        $region53: #{se_bottleneck_forward.2} parent=51 // pred_check
          %p387 = pneg %p55
        $region54: #{se_bottleneck_forward.2} parent=51 // pred_check_branch
          %389 = sbr.rel (%p387) target = $region56
        $region55: #{se_bottleneck_forward.2} parent=51 // pred_region
          %390 = dma.done %s383, 4096
        $region56: #{se_bottleneck_forward.2} parent=51 // pred_fallthru
          _
        // Predicated region
        $region57: #{se_bottleneck_forward.2} parent=51 // pred_check
          %p391 = pneg %p76
        $region58: #{se_bottleneck_forward.2} parent=51 // pred_check_branch
          %393 = sbr.rel (%p391) target = $region60
        $region59: #{se_bottleneck_forward.2} parent=51 // pred_region
          %394 = dma.done [#allocation7], 1024
        $region60: #{se_bottleneck_forward.2} parent=51 // pred_fallthru
          _
        // Predicated region
        $region61: #{se_bottleneck_forward.2} parent=51 // pred_check
          %p395 = pneg %p97
        $region62: #{se_bottleneck_forward.2} parent=51 // pred_check_branch
          %397 = sbr.rel (%p395) target = $region64
        $region63: #{se_bottleneck_forward.2} parent=51 // pred_region
          %398 = dma.done [#allocation7], 32
        $region64: #{se_bottleneck_forward.2} parent=51 // pred_fallthru
          _
        // Predicated region
        $region65: #{se_bottleneck_forward.2} parent=51 // pred_check
          %p399 = pneg %p118
        $region66: #{se_bottleneck_forward.2} parent=51 // pred_check_branch
          %401 = sbr.rel (%p399) target = $region68
        $region67: #{se_bottleneck_forward.2} parent=51 // pred_region
          %402 = dma.done [#allocation10], 2304
        $region68: #{se_bottleneck_forward.2} parent=51 // pred_fallthru
          _
        // Predicated region
        $region69: #{se_bottleneck_forward.2} parent=51 // pred_check
          %p403 = pneg %p139
        $region70: #{se_bottleneck_forward.2} parent=51 // pred_check_branch
          %405 = sbr.rel (%p403) target = $region72
        $region71: #{se_bottleneck_forward.2} parent=51 // pred_region
          %406 = dma.done [#allocation10], 32
        $region72: #{se_bottleneck_forward.2} parent=51 // pred_fallthru
          _
        // Predicated region
        $region73: #{se_bottleneck_forward.2} parent=51 // pred_check
          %p407 = pneg %p160
        $region74: #{se_bottleneck_forward.2} parent=51 // pred_check_branch
          %409 = sbr.rel (%p407) target = $region76
        $region75: #{se_bottleneck_forward.2} parent=51 // pred_region
          %410 = dma.done [#allocation13], 256
        $region76: #{se_bottleneck_forward.2} parent=51 // pred_fallthru
          _
        // Predicated region
        $region77: #{se_bottleneck_forward.2} parent=51 // pred_check
          %p411 = pneg %p181
        $region78: #{se_bottleneck_forward.2} parent=51 // pred_check_branch
          %413 = sbr.rel (%p411) target = $region80
        $region79: #{se_bottleneck_forward.2} parent=51 // pred_region
          %414 = dma.done [#allocation13], 32
        $region80: #{se_bottleneck_forward.2} parent=51 // pred_fallthru
          _
        // Predicated region
        $region81: #{se_bottleneck_forward.2} parent=51 // pred_check
          %p415 = pneg %p202
        $region82: #{se_bottleneck_forward.2} parent=51 // pred_check_branch
          %417 = sbr.rel (%p415) target = $region84
        $region83: #{se_bottleneck_forward.2} parent=51 // pred_region
          %418 = dma.done [#allocation5], 16
        $region84: #{se_bottleneck_forward.2} parent=51 // pred_fallthru
          _
        %419 = sfence
        %s420 = sand.u32 %s42, 1
        %s421 = scalar_lea.sflag [#allocation3], %s420
        %s422 = sand.u32 %s42, 1
        %s423 = smul.addr %s422, 256
        %s424 = scalar_lea.vmem [#allocation2], %s423
        %p425 = pneg %p55
        %p426 = pneg %p52
        %p427 = pneg %p76
        %p428 = pneg %p73
        %p429 = pneg %p97
        %p430 = pneg %p94
        %p431 = pneg %p118
        %p432 = pneg %p115
        %p433 = pneg %p139
        %p434 = pneg %p136
        %p435 = pneg %p160
        %p436 = pneg %p157
        %p437 = pneg %p181
        %p438 = pneg %p178
        %p439 = pneg %p202
        %p440 = pneg %p199
        %p441 = pneg %p228
        %p442 = pneg %p225
        %s443 = sand.u32 %s215, 1
        %s444 = scalar_lea.sflag [#allocation4], %s443
        %s445 = sand.u32 %s215, 1
        %s446 = smul.addr %s445, 128
        %s447 = scalar_lea.vmem [#allocation16], %s446
        %p448 = pneg %p254
        %p449 = pneg %p251
        %s450 = sand.u32 %s241, 1
        %s451 = scalar_lea.sflag [#allocation18], %s450
        %s452 = sand.u32 %s241, 1
        %s453 = scalar_lea.vmem [#allocation17], %s452
        %v455 = vld [vmem:[%s386] sm:$0xff]
        %v456 = vld [vmem:[%s386 + $0x8] sm:$0xff]
        %v457 = vld [vmem:[%s386 + $0x10] sm:$0xff]
        %v458 = vld [vmem:[%s386 + $0x18] sm:$0xff]
        %v459 = vld [vmem:[%s386 + $0x20] sm:$0xff]
        %v460 = vld [vmem:[%s386 + $0x28] sm:$0xff]
        %v461 = vld [vmem:[%s386 + $0x30] sm:$0xff]
        %v462 = vld [vmem:[%s386 + $0x38] sm:$0xff]
        %v463 = vld [vmem:[%s386 + $0x40] sm:$0xff]
        %v464 = vld [vmem:[%s386 + $0x48] sm:$0xff]
        %v465 = vld [vmem:[%s386 + $0x50] sm:$0xff]
        %v466 = vld [vmem:[%s386 + $0x58] sm:$0xff]
        %v467 = vld [vmem:[%s386 + $0x60] sm:$0xff]
        %v468 = vld [vmem:[%s386 + $0x68] sm:$0xff]
        %v469 = vld [vmem:[%s386 + $0x70] sm:$0xff]
        %v470 = vld [vmem:[%s386 + $0x78] sm:$0xff]
        %v471 = vld [vmem:[%s386 + $0x80] sm:$0xff]
        %v472 = vld [vmem:[%s386 + $0x88] sm:$0xff]
        %v473 = vld [vmem:[%s386 + $0x90] sm:$0xff]
        %v474 = vld [vmem:[%s386 + $0x98] sm:$0xff]
        %v475 = vld [vmem:[%s386 + $0xa0] sm:$0xff]
        %v476 = vld [vmem:[%s386 + $0xa8] sm:$0xff]
        %v477 = vld [vmem:[%s386 + $0xb0] sm:$0xff]
        %v478 = vld [vmem:[%s386 + $0xb8] sm:$0xff]
        %v479 = vld [vmem:[%s386 + $0xc0] sm:$0xff]
        %v480 = vld [vmem:[%s386 + $0xc8] sm:$0xff]
        %v481 = vld [vmem:[%s386 + $0xd0] sm:$0xff]
        %v482 = vld [vmem:[%s386 + $0xd8] sm:$0xff]
        %v483 = vld [vmem:[%s386 + $0xe0] sm:$0xff]
        %v484 = vld [vmem:[%s386 + $0xe8] sm:$0xff]
        %v485 = vld [vmem:[%s386 + $0xf0] sm:$0xff]
        %v486 = vld [vmem:[%s386 + $0xf8] sm:$0xff]
        %487 = vxpose.xlu0.b32.start [1/16] %v455, 128
        %488 = vxpose.xlu0.b32.cont [2/16] %v457, 128
        %489 = vxpose.xlu0.b32.cont [3/16] %v459, 128
        %490 = vxpose.xlu0.b32.cont [4/16] %v461, 128
        %491 = vxpose.xlu0.b32.cont [5/16] %v463, 128
        %492 = vxpose.xlu0.b32.cont [6/16] %v465, 128
        %493 = vxpose.xlu0.b32.cont [7/16] %v467, 128
        %494 = vxpose.xlu0.b32.cont [8/16] %v469, 128
        %495 = vxpose.xlu0.b32.cont [9/16] %v471, 128
        %496 = vxpose.xlu0.b32.cont [10/16] %v473, 128
        %497 = vxpose.xlu0.b32.cont [11/16] %v475, 128
        %498 = vxpose.xlu0.b32.cont [12/16] %v477, 128
        %499 = vxpose.xlu0.b32.cont [13/16] %v479, 128
        %500 = vxpose.xlu0.b32.cont [14/16] %v481, 128
        %501 = vxpose.xlu0.b32.cont [15/16] %v483, 128
        %502 = vxpose.xlu0.b32.end [16/16] %v485, 128
        %v503 = vpop.trf.xlu0
        %v504 = vpop.trf.xlu0
        %v505 = vpop.trf.xlu0
        %v506 = vpop.trf.xlu0
        %v507 = vpop.trf.xlu0
        %v508 = vpop.trf.xlu0
        %v509 = vpop.trf.xlu0
        %v510 = vpop.trf.xlu0
        %v511 = vpop.trf.xlu0
        %v512 = vpop.trf.xlu0
        %v513 = vpop.trf.xlu0
        %v514 = vpop.trf.xlu0
        %v515 = vpop.trf.xlu0
        %v516 = vpop.trf.xlu0
        %v517 = vpop.trf.xlu0
        %v518 = vpop.trf.xlu0
        %519 = vxpose.xlu0.b32.start [1/16] %v456, 128
        %520 = vxpose.xlu0.b32.cont [2/16] %v458, 128
        %521 = vxpose.xlu0.b32.cont [3/16] %v460, 128
        %522 = vxpose.xlu0.b32.cont [4/16] %v462, 128
        %523 = vxpose.xlu0.b32.cont [5/16] %v464, 128
        %524 = vxpose.xlu0.b32.cont [6/16] %v466, 128
        %525 = vxpose.xlu0.b32.cont [7/16] %v468, 128
        %526 = vxpose.xlu0.b32.cont [8/16] %v470, 128
        %527 = vxpose.xlu0.b32.cont [9/16] %v472, 128
        %528 = vxpose.xlu0.b32.cont [10/16] %v474, 128
        %529 = vxpose.xlu0.b32.cont [11/16] %v476, 128
        %530 = vxpose.xlu0.b32.cont [12/16] %v478, 128
        %531 = vxpose.xlu0.b32.cont [13/16] %v480, 128
        %532 = vxpose.xlu0.b32.cont [14/16] %v482, 128
        %533 = vxpose.xlu0.b32.cont [15/16] %v484, 128
        %534 = vxpose.xlu0.b32.end [16/16] %v486, 128
        %v535 = vpop.trf.xlu0
        %v536 = vpop.trf.xlu0
        %v537 = vpop.trf.xlu0
        %v538 = vpop.trf.xlu0
        %v539 = vpop.trf.xlu0
        %v540 = vpop.trf.xlu0
        %v541 = vpop.trf.xlu0
        %v542 = vpop.trf.xlu0
        %v543 = vpop.trf.xlu0
        %v544 = vpop.trf.xlu0
        %v545 = vpop.trf.xlu0
        %v546 = vpop.trf.xlu0
        %v547 = vpop.trf.xlu0
        %v548 = vpop.trf.xlu0
        %v549 = vpop.trf.xlu0
        %v550 = vpop.trf.xlu0
        %v551 = vpack.c.bf16 %v504, %v503
        %v552 = vpack.c.bf16 %v506, %v505
        %v553 = vpack.c.bf16 %v508, %v507
        %v554 = vpack.c.bf16 %v510, %v509
        %v555 = vpack.c.bf16 %v512, %v511
        %v556 = vpack.c.bf16 %v514, %v513
        %v557 = vpack.c.bf16 %v516, %v515
        %v558 = vpack.c.bf16 %v518, %v517
        %v559 = vpack.c.bf16 %v536, %v535
        %v560 = vpack.c.bf16 %v538, %v537
        %v561 = vpack.c.bf16 %v540, %v539
        %v562 = vpack.c.bf16 %v542, %v541
        %v563 = vpack.c.bf16 %v544, %v543
        %v564 = vpack.c.bf16 %v546, %v545
        %v565 = vpack.c.bf16 %v548, %v547
        %v566 = vpack.c.bf16 %v550, %v549
        %v567 = vld [vmem:[#allocation6] sm:$0xf]
        %v568 = vld [vmem:[#allocation6 + $0x4] sm:$0xf]
        %v569 = vld [vmem:[#allocation6 + $0x8] sm:$0xf]
        %v570 = vld [vmem:[#allocation6 + $0xc] sm:$0xf]
        %v571 = vld [vmem:[#allocation6 + $0x10] sm:$0xf]
        %v572 = vld [vmem:[#allocation6 + $0x14] sm:$0xf]
        %v573 = vld [vmem:[#allocation6 + $0x18] sm:$0xf]
        %v574 = vld [vmem:[#allocation6 + $0x1c] sm:$0xf]
        %v575 = vld [vmem:[#allocation6 + $0x20] sm:$0xf]
        %v576 = vld [vmem:[#allocation6 + $0x24] sm:$0xf]
        %v577 = vld [vmem:[#allocation6 + $0x28] sm:$0xf]
        %v578 = vld [vmem:[#allocation6 + $0x2c] sm:$0xf]
        %v579 = vld [vmem:[#allocation6 + $0x30] sm:$0xf]
        %v580 = vld [vmem:[#allocation6 + $0x34] sm:$0xf]
        %v581 = vld [vmem:[#allocation6 + $0x38] sm:$0xf]
        %v582 = vld [vmem:[#allocation6 + $0x3c] sm:$0xf]
        %v599 = vunpack.c.l.b16 %v567
        %v600 = vunpack.c.l.b16 %v568
        %v601 = vunpack.c.l.b16 %v569
        %v602 = vunpack.c.l.b16 %v570
        %v603 = vunpack.c.l.b16 %v571
        %v604 = vunpack.c.l.b16 %v572
        %v605 = vunpack.c.l.b16 %v573
        %v606 = vunpack.c.l.b16 %v574
        %v607 = vunpack.c.l.b16 %v575
        %v608 = vunpack.c.l.b16 %v576
        %v609 = vunpack.c.l.b16 %v577
        %v610 = vunpack.c.l.b16 %v578
        %v611 = vunpack.c.l.b16 %v579
        %v612 = vunpack.c.l.b16 %v580
        %v613 = vunpack.c.l.b16 %v581
        %v614 = vunpack.c.l.b16 %v582
        %v615 = vpack.c.b16 %v600, %v599
        %v616 = vpack.c.b16 %v602, %v601
        %v617 = vpack.c.b16 %v604, %v603
        %v618 = vpack.c.b16 %v606, %v605
        %v619 = vpack.c.b16 %v608, %v607
        %v620 = vpack.c.b16 %v610, %v609
        %v621 = vpack.c.b16 %v612, %v611
        %v622 = vpack.c.b16 %v614, %v613
        %631 = vmatprep.subr.bf16.mxu0 0
        %632 = vmatpush1.bf16.msra.mxu0 %v615
        %633 = vmatprep.subr.bf16.mxu0 0
        %634 = vmatpush1.bf16.msra.mxu0 %v616
        %635 = vmatprep.subr.bf16.mxu0 0
        %636 = vmatpush1.bf16.msra.mxu0 %v617
        %637 = vmatprep.subr.bf16.mxu0 0
        %638 = vmatpush1.bf16.msra.mxu0 %v618
        %639 = vmatprep.subr.bf16.mxu0 0
        %640 = vmatpush1.bf16.msra.mxu0 %v619
        %641 = vmatprep.subr.bf16.mxu0 0
        %642 = vmatpush1.bf16.msra.mxu0 %v620
        %643 = vmatprep.subr.bf16.mxu0 0
        %644 = vmatpush1.bf16.msra.mxu0 %v621
        %645 = vmatprep.subr.bf16.mxu0 0
        %646 = vmatpush1.bf16.msra.mxu0 %v622
        %647 = vmatprep.subr.bf16.mxu0 0
        %648 = vmatpush1.bf16.msra.mxu0 0
        %649 = vmatprep.subr.bf16.mxu0 0
        %650 = vmatpush1.bf16.msra.mxu0 0
        %651 = vmatprep.subr.bf16.mxu0 0
        %652 = vmatpush1.bf16.msra.mxu0 0
        %653 = vmatprep.subr.bf16.mxu0 0
        %654 = vmatpush1.bf16.msra.mxu0 0
        %655 = vmatprep.subr.bf16.mxu0 0
        %656 = vmatpush1.bf16.msra.mxu0 0
        %657 = vmatprep.subr.bf16.mxu0 0
        %658 = vmatpush1.bf16.msra.mxu0 0
        %659 = vmatprep.subr.bf16.mxu0 0
        %660 = vmatpush1.bf16.msra.mxu0 0
        %661 = vmatprep.subr.bf16.mxu0 0
        %662 = vmatpush1.bf16.msra.mxu0 0
        %663 = vmatprep.mubr.bf16.mxu0 0
        %664 = vmatmul.mubr.bf16.gmra.mrb[0].mxu0 %v551
        %v665 = vpop.f32.mrb[0].mxu0
        %v666 = vadd.f32 0.0, %v665
        %v667 = vpop.f32.mrb[0].mxu0
        %v668 = vpop.f32.mrb[0].mxu0
        %v669 = vadd.f32 0.0, %v668
        %v670 = vpop.f32.mrb[0].mxu0
        %671 = vmatprep.mubr.bf16.mxu0 0
        %672 = vmatmul.mubr.bf16.gmra.mrb[0].mxu0 %v552
        %v673 = vpop.f32.mrb[0].mxu0
        %v674 = vadd.f32 0.0, %v673
        %v675 = vpop.f32.mrb[0].mxu0
        %v676 = vpop.f32.mrb[0].mxu0
        %v677 = vadd.f32 0.0, %v676
        %v678 = vpop.f32.mrb[0].mxu0
        %679 = vmatprep.mubr.bf16.mxu0 0
        %680 = vmatmul.mubr.bf16.gmra.mrb[0].mxu0 %v553
        %v681 = vpop.f32.mrb[0].mxu0
        %v682 = vadd.f32 0.0, %v681
        %v683 = vpop.f32.mrb[0].mxu0
        %v684 = vpop.f32.mrb[0].mxu0
        %v685 = vadd.f32 0.0, %v684
        %v686 = vpop.f32.mrb[0].mxu0
        %687 = vmatprep.mubr.bf16.mxu0 0
        %688 = vmatmul.mubr.bf16.gmra.mrb[0].mxu0 %v554
        %v689 = vpop.f32.mrb[0].mxu0
        %v690 = vadd.f32 0.0, %v689
        %v691 = vpop.f32.mrb[0].mxu0
        %v692 = vpop.f32.mrb[0].mxu0
        %v693 = vadd.f32 0.0, %v692
        %v694 = vpop.f32.mrb[0].mxu0
        %695 = vmatprep.mubr.bf16.mxu0 0
        %696 = vmatmul.mubr.bf16.gmra.mrb[0].mxu0 %v555
        %v697 = vpop.f32.mrb[0].mxu0
        %v698 = vadd.f32 0.0, %v697
        %v699 = vpop.f32.mrb[0].mxu0
        %v700 = vpop.f32.mrb[0].mxu0
        %v701 = vadd.f32 0.0, %v700
        %v702 = vpop.f32.mrb[0].mxu0
        %703 = vmatprep.mubr.bf16.mxu0 0
        %704 = vmatmul.mubr.bf16.gmra.mrb[0].mxu0 %v556
        %v705 = vpop.f32.mrb[0].mxu0
        %v706 = vadd.f32 0.0, %v705
        %v707 = vpop.f32.mrb[0].mxu0
        %v708 = vpop.f32.mrb[0].mxu0
        %v709 = vadd.f32 0.0, %v708
        %v710 = vpop.f32.mrb[0].mxu0
        %711 = vmatprep.mubr.bf16.mxu0 0
        %712 = vmatmul.mubr.bf16.gmra.mrb[0].mxu0 %v557
        %v713 = vpop.f32.mrb[0].mxu0
        %v714 = vadd.f32 0.0, %v713
        %v715 = vpop.f32.mrb[0].mxu0
        %v716 = vpop.f32.mrb[0].mxu0
        %v717 = vadd.f32 0.0, %v716
        %v718 = vpop.f32.mrb[0].mxu0
        %719 = vmatprep.mubr.bf16.mxu0 0
        %720 = vmatmul.mubr.bf16.gmra.mrb[0].mxu0 %v558
        %v721 = vpop.f32.mrb[0].mxu0
        %v722 = vadd.f32 0.0, %v721
        %v723 = vpop.f32.mrb[0].mxu0
        %v724 = vpop.f32.mrb[0].mxu0
        %v725 = vadd.f32 0.0, %v724
        %v726 = vpop.f32.mrb[0].mxu0
        %727 = vmatprep.mubr.bf16.mxu0 0
        %728 = vmatmul.mubr.bf16.gmra.mrb[0].mxu0 %v559
        %v729 = vpop.f32.mrb[0].mxu0
        %v730 = vadd.f32 0.0, %v729
        %v731 = vpop.f32.mrb[0].mxu0
        %v732 = vpop.f32.mrb[0].mxu0
        %v733 = vadd.f32 0.0, %v732
        %v734 = vpop.f32.mrb[0].mxu0
        %735 = vmatprep.mubr.bf16.mxu0 0
        %736 = vmatmul.mubr.bf16.gmra.mrb[0].mxu0 %v560
        %v737 = vpop.f32.mrb[0].mxu0
        %v738 = vadd.f32 0.0, %v737
        %v739 = vpop.f32.mrb[0].mxu0
        %v740 = vpop.f32.mrb[0].mxu0
        %v741 = vadd.f32 0.0, %v740
        %v742 = vpop.f32.mrb[0].mxu0
        %743 = vmatprep.mubr.bf16.mxu0 0
        %744 = vmatmul.mubr.bf16.gmra.mrb[0].mxu0 %v561
        %v745 = vpop.f32.mrb[0].mxu0
        %v746 = vadd.f32 0.0, %v745
        %v747 = vpop.f32.mrb[0].mxu0
        %v748 = vpop.f32.mrb[0].mxu0
        %v749 = vadd.f32 0.0, %v748
        %v750 = vpop.f32.mrb[0].mxu0
        %751 = vmatprep.mubr.bf16.mxu0 0
        %752 = vmatmul.mubr.bf16.gmra.mrb[0].mxu0 %v562
        %v753 = vpop.f32.mrb[0].mxu0
        %v754 = vadd.f32 0.0, %v753
        %v755 = vpop.f32.mrb[0].mxu0
        %v756 = vpop.f32.mrb[0].mxu0
        %v757 = vadd.f32 0.0, %v756
        %v758 = vpop.f32.mrb[0].mxu0
        %759 = vmatprep.mubr.bf16.mxu0 0
        %760 = vmatmul.mubr.bf16.gmra.mrb[0].mxu0 %v563
        %v761 = vpop.f32.mrb[0].mxu0
        %v762 = vadd.f32 0.0, %v761
        %v763 = vpop.f32.mrb[0].mxu0
        %v764 = vpop.f32.mrb[0].mxu0
        %v765 = vadd.f32 0.0, %v764
        %v766 = vpop.f32.mrb[0].mxu0
        %767 = vmatprep.mubr.bf16.mxu0 0
        %768 = vmatmul.mubr.bf16.gmra.mrb[0].mxu0 %v564
        %v769 = vpop.f32.mrb[0].mxu0
        %v770 = vadd.f32 0.0, %v769
        %v771 = vpop.f32.mrb[0].mxu0
        %v772 = vpop.f32.mrb[0].mxu0
        %v773 = vadd.f32 0.0, %v772
        %v774 = vpop.f32.mrb[0].mxu0
        %775 = vmatprep.mubr.bf16.mxu0 0
        %776 = vmatmul.mubr.bf16.gmra.mrb[0].mxu0 %v565
        %v777 = vpop.f32.mrb[0].mxu0
        %v778 = vadd.f32 0.0, %v777
        %v779 = vpop.f32.mrb[0].mxu0
        %v780 = vpop.f32.mrb[0].mxu0
        %v781 = vadd.f32 0.0, %v780
        %v782 = vpop.f32.mrb[0].mxu0
        %783 = vmatprep.mubr.bf16.mxu0 0
        %784 = vmatmul.mubr.bf16.gmra.mrb[0].mxu0 %v566
        %v785 = vpop.f32.mrb[0].mxu0
        %v786 = vadd.f32 0.0, %v785
        %v787 = vpop.f32.mrb[0].mxu0
        %v788 = vpop.f32.mrb[0].mxu0
        %v789 = vadd.f32 0.0, %v788
        %v790 = vpop.f32.mrb[0].mxu0
        %791 = vdwg.mxu0
        %v792 = vld [vmem:[#allocation8] sm:$0x1]
        %v793 = vlaneseq
        %v794 = vshrl.u32 %v793, 7
        %v795 = vsub.s32 0, %v794
        %v796 = vrot.slane %v792, %v795
        %v797 = vmul.f32 %v666, %v796
        %v798 = vmul.f32 %v669, %v796
        %v799 = vmul.f32 %v674, %v796
        %v800 = vmul.f32 %v677, %v796
        %v801 = vmul.f32 %v682, %v796
        %v802 = vmul.f32 %v685, %v796
        %v803 = vmul.f32 %v690, %v796
        %v804 = vmul.f32 %v693, %v796
        %v805 = vmul.f32 %v698, %v796
        %v806 = vmul.f32 %v701, %v796
        %v807 = vmul.f32 %v706, %v796
        %v808 = vmul.f32 %v709, %v796
        %v809 = vmul.f32 %v714, %v796
        %v810 = vmul.f32 %v717, %v796
        %v811 = vmul.f32 %v722, %v796
        %v812 = vmul.f32 %v725, %v796
        %v813 = vmul.f32 %v730, %v796
        %v814 = vmul.f32 %v733, %v796
        %v815 = vmul.f32 %v738, %v796
        %v816 = vmul.f32 %v741, %v796
        %v817 = vmul.f32 %v746, %v796
        %v818 = vmul.f32 %v749, %v796
        %v819 = vmul.f32 %v754, %v796
        %v820 = vmul.f32 %v757, %v796
        %v821 = vmul.f32 %v762, %v796
        %v822 = vmul.f32 %v765, %v796
        %v823 = vmul.f32 %v770, %v796
        %v824 = vmul.f32 %v773, %v796
        %v825 = vmul.f32 %v778, %v796
        %v826 = vmul.f32 %v781, %v796
        %v827 = vmul.f32 %v786, %v796
        %v828 = vmul.f32 %v789, %v796
        %v829 = vld [vmem:[#allocation8 + $0x1] sm:$0x1]
        %v830 = vlaneseq
        %v831 = vshrl.u32 %v830, 7
        %v832 = vsub.s32 0, %v831
        %v833 = vrot.slane %v829, %v832
        %v834 = vadd.f32 %v797, %v833
        %v835 = vadd.f32 %v798, %v833
        %v836 = vadd.f32 %v799, %v833
        %v837 = vadd.f32 %v800, %v833
        %v838 = vadd.f32 %v801, %v833
        %v839 = vadd.f32 %v802, %v833
        %v840 = vadd.f32 %v803, %v833
        %v841 = vadd.f32 %v804, %v833
        %v842 = vadd.f32 %v805, %v833
        %v843 = vadd.f32 %v806, %v833
        %v844 = vadd.f32 %v807, %v833
        %v845 = vadd.f32 %v808, %v833
        %v846 = vadd.f32 %v809, %v833
        %v847 = vadd.f32 %v810, %v833
        %v848 = vadd.f32 %v811, %v833
        %v849 = vadd.f32 %v812, %v833
        %v850 = vadd.f32 %v813, %v833
        %v851 = vadd.f32 %v814, %v833
        %v852 = vadd.f32 %v815, %v833
        %v853 = vadd.f32 %v816, %v833
        %v854 = vadd.f32 %v817, %v833
        %v855 = vadd.f32 %v818, %v833
        %v856 = vadd.f32 %v819, %v833
        %v857 = vadd.f32 %v820, %v833
        %v858 = vadd.f32 %v821, %v833
        %v859 = vadd.f32 %v822, %v833
        %v860 = vadd.f32 %v823, %v833
        %v861 = vadd.f32 %v824, %v833
        %v862 = vadd.f32 %v825, %v833
        %v863 = vadd.f32 %v826, %v833
        %v864 = vadd.f32 %v827, %v833
        %v865 = vadd.f32 %v828, %v833
        %s866 = sld [smem:[#allocation15]]
        %s867 = sld [smem:[#allocation15 + $0x1]]
        %s868 = sld [smem:[#allocation15 + $0x2]]
        %v869 = vstv %s866
        %v870 = vmul.f32 %v869, %v834
        %v871 = vmul.f32 %v869, %v835
        %v872 = vmul.f32 %v869, %v836
        %v873 = vmul.f32 %v869, %v837
        %v874 = vmul.f32 %v869, %v838
        %v875 = vmul.f32 %v869, %v839
        %v876 = vmul.f32 %v869, %v840
        %v877 = vmul.f32 %v869, %v841
        %v878 = vmul.f32 %v869, %v842
        %v879 = vmul.f32 %v869, %v843
        %v880 = vmul.f32 %v869, %v844
        %v881 = vmul.f32 %v869, %v845
        %v882 = vmul.f32 %v869, %v846
        %v883 = vmul.f32 %v869, %v847
        %v884 = vmul.f32 %v869, %v848
        %v885 = vmul.f32 %v869, %v849
        %v886 = vmul.f32 %v869, %v850
        %v887 = vmul.f32 %v869, %v851
        %v888 = vmul.f32 %v869, %v852
        %v889 = vmul.f32 %v869, %v853
        %v890 = vmul.f32 %v869, %v854
        %v891 = vmul.f32 %v869, %v855
        %v892 = vmul.f32 %v869, %v856
        %v893 = vmul.f32 %v869, %v857
        %v894 = vmul.f32 %v869, %v858
        %v895 = vmul.f32 %v869, %v859
        %v896 = vmul.f32 %v869, %v860
        %v897 = vmul.f32 %v869, %v861
        %v898 = vmul.f32 %v869, %v862
        %v899 = vmul.f32 %v869, %v863
        %v900 = vmul.f32 %v869, %v864
        %v901 = vmul.f32 %v869, %v865
        %v902 = vstv %s867
        %v903 = vadd.f32 %v870, %v902
        %v904 = vadd.f32 %v871, %v902
        %v905 = vadd.f32 %v872, %v902
        %v906 = vadd.f32 %v873, %v902
        %v907 = vadd.f32 %v874, %v902
        %v908 = vadd.f32 %v875, %v902
        %v909 = vadd.f32 %v876, %v902
        %v910 = vadd.f32 %v877, %v902
        %v911 = vadd.f32 %v878, %v902
        %v912 = vadd.f32 %v879, %v902
        %v913 = vadd.f32 %v880, %v902
        %v914 = vadd.f32 %v881, %v902
        %v915 = vadd.f32 %v882, %v902
        %v916 = vadd.f32 %v883, %v902
        %v917 = vadd.f32 %v884, %v902
        %v918 = vadd.f32 %v885, %v902
        %v919 = vadd.f32 %v886, %v902
        %v920 = vadd.f32 %v887, %v902
        %v921 = vadd.f32 %v888, %v902
        %v922 = vadd.f32 %v889, %v902
        %v923 = vadd.f32 %v890, %v902
        %v924 = vadd.f32 %v891, %v902
        %v925 = vadd.f32 %v892, %v902
        %v926 = vadd.f32 %v893, %v902
        %v927 = vadd.f32 %v894, %v902
        %v928 = vadd.f32 %v895, %v902
        %v929 = vadd.f32 %v896, %v902
        %v930 = vadd.f32 %v897, %v902
        %v931 = vadd.f32 %v898, %v902
        %v932 = vadd.f32 %v899, %v902
        %v933 = vadd.f32 %v900, %v902
        %v934 = vadd.f32 %v901, %v902
        %v935 = vsub.f32 0.0, %v903
        %v936 = vsub.f32 0.0, %v904
        %v937 = vsub.f32 0.0, %v905
        %v938 = vsub.f32 0.0, %v906
        %v939 = vsub.f32 0.0, %v907
        %v940 = vsub.f32 0.0, %v908
        %v941 = vsub.f32 0.0, %v909
        %v942 = vsub.f32 0.0, %v910
        %v943 = vsub.f32 0.0, %v911
        %v944 = vsub.f32 0.0, %v912
        %v945 = vsub.f32 0.0, %v913
        %v946 = vsub.f32 0.0, %v914
        %v947 = vsub.f32 0.0, %v915
        %v948 = vsub.f32 0.0, %v916
        %v949 = vsub.f32 0.0, %v917
        %v950 = vsub.f32 0.0, %v918
        %v951 = vsub.f32 0.0, %v919
        %v952 = vsub.f32 0.0, %v920
        %v953 = vsub.f32 0.0, %v921
        %v954 = vsub.f32 0.0, %v922
        %v955 = vsub.f32 0.0, %v923
        %v956 = vsub.f32 0.0, %v924
        %v957 = vsub.f32 0.0, %v925
        %v958 = vsub.f32 0.0, %v926
        %v959 = vsub.f32 0.0, %v927
        %v960 = vsub.f32 0.0, %v928
        %v961 = vsub.f32 0.0, %v929
        %v962 = vsub.f32 0.0, %v930
        %v963 = vsub.f32 0.0, %v931
        %v964 = vsub.f32 0.0, %v932
        %v965 = vsub.f32 0.0, %v933
        %v966 = vsub.f32 0.0, %v934
        %v967 = vmin.f32 %v935, 20.0
        %v968 = vmin.f32 %v936, 20.0
        %v969 = vmin.f32 %v937, 20.0
        %v970 = vmin.f32 %v938, 20.0
        %v971 = vmin.f32 %v939, 20.0
        %v972 = vmin.f32 %v940, 20.0
        %v973 = vmin.f32 %v941, 20.0
        %v974 = vmin.f32 %v942, 20.0
        %v975 = vmin.f32 %v943, 20.0
        %v976 = vmin.f32 %v944, 20.0
        %v977 = vmin.f32 %v945, 20.0
        %v978 = vmin.f32 %v946, 20.0
        %v979 = vmin.f32 %v947, 20.0
        %v980 = vmin.f32 %v948, 20.0
        %v981 = vmin.f32 %v949, 20.0
        %v982 = vmin.f32 %v950, 20.0
        %v983 = vmin.f32 %v951, 20.0
        %v984 = vmin.f32 %v952, 20.0
        %v985 = vmin.f32 %v953, 20.0
        %v986 = vmin.f32 %v954, 20.0
        %v987 = vmin.f32 %v955, 20.0
        %v988 = vmin.f32 %v956, 20.0
        %v989 = vmin.f32 %v957, 20.0
        %v990 = vmin.f32 %v958, 20.0
        %v991 = vmin.f32 %v959, 20.0
        %v992 = vmin.f32 %v960, 20.0
        %v993 = vmin.f32 %v961, 20.0
        %v994 = vmin.f32 %v962, 20.0
        %v995 = vmin.f32 %v963, 20.0
        %v996 = vmin.f32 %v964, 20.0
        %v997 = vmin.f32 %v965, 20.0
        %v998 = vmin.f32 %v966, 20.0
        %v999 = vmul.f32 %v967, 1.442695
        %v1000 = vpow.pop %v999
        %v1001 = vmul.f32 %v968, 1.442695
        %v1002 = vpow.pop %v1001
        %v1003 = vmul.f32 %v969, 1.442695
        %v1004 = vpow.pop %v1003
        %v1005 = vmul.f32 %v970, 1.442695
        %v1006 = vpow.pop %v1005
        %v1007 = vmul.f32 %v971, 1.442695
        %v1008 = vpow.pop %v1007
        %v1009 = vmul.f32 %v972, 1.442695
        %v1010 = vpow.pop %v1009
        %v1011 = vmul.f32 %v973, 1.442695
        %v1012 = vpow.pop %v1011
        %v1013 = vmul.f32 %v974, 1.442695
        %v1014 = vpow.pop %v1013
        %v1015 = vmul.f32 %v975, 1.442695
        %v1016 = vpow.pop %v1015
        %v1017 = vmul.f32 %v976, 1.442695
        %v1018 = vpow.pop %v1017
        %v1019 = vmul.f32 %v977, 1.442695
        %v1020 = vpow.pop %v1019
        %v1021 = vmul.f32 %v978, 1.442695
        %v1022 = vpow.pop %v1021
        %v1023 = vmul.f32 %v979, 1.442695
        %v1024 = vpow.pop %v1023
        %v1025 = vmul.f32 %v980, 1.442695
        %v1026 = vpow.pop %v1025
        %v1027 = vmul.f32 %v981, 1.442695
        %v1028 = vpow.pop %v1027
        %v1029 = vmul.f32 %v982, 1.442695
        %v1030 = vpow.pop %v1029
        %v1031 = vmul.f32 %v983, 1.442695
        %v1032 = vpow.pop %v1031
        %v1033 = vmul.f32 %v984, 1.442695
        %v1034 = vpow.pop %v1033
        %v1035 = vmul.f32 %v985, 1.442695
        %v1036 = vpow.pop %v1035
        %v1037 = vmul.f32 %v986, 1.442695
        %v1038 = vpow.pop %v1037
        %v1039 = vmul.f32 %v987, 1.442695
        %v1040 = vpow.pop %v1039
        %v1041 = vmul.f32 %v988, 1.442695
        %v1042 = vpow.pop %v1041
        %v1043 = vmul.f32 %v989, 1.442695
        %v1044 = vpow.pop %v1043
        %v1045 = vmul.f32 %v990, 1.442695
        %v1046 = vpow.pop %v1045
        %v1047 = vmul.f32 %v991, 1.442695
        %v1048 = vpow.pop %v1047
        %v1049 = vmul.f32 %v992, 1.442695
        %v1050 = vpow.pop %v1049
        %v1051 = vmul.f32 %v993, 1.442695
        %v1052 = vpow.pop %v1051
        %v1053 = vmul.f32 %v994, 1.442695
        %v1054 = vpow.pop %v1053
        %v1055 = vmul.f32 %v995, 1.442695
        %v1056 = vpow.pop %v1055
        %v1057 = vmul.f32 %v996, 1.442695
        %v1058 = vpow.pop %v1057
        %v1059 = vmul.f32 %v997, 1.442695
        %v1060 = vpow.pop %v1059
        %v1061 = vmul.f32 %v998, 1.442695
        %v1062 = vpow.pop %v1061
        %v1063 = vadd.f32 %v1000, 1.0
        %v1064 = vlog2.pop %v1063
        %v1065 = vmul.f32 %v1064, 0.6931472
        %v1066 = vmul.f32 -0.5, %v1000
        %v1067 = vadd.f32 %v1066, 1.0
        %v1068 = vmul.f32 %v1067, %v1000
        %v1069 = vand.u32 2147483647, %v1000
        %vm1070 = vcmp.lt.f32.partialorder %v1069, 0.0004427343
        %v1071 = vsel %vm1070, %v1068, %v1065
        %v1072 = vadd.f32 %v1002, 1.0
        %v1073 = vlog2.pop %v1072
        %v1074 = vmul.f32 %v1073, 0.6931472
        %v1075 = vmul.f32 -0.5, %v1002
        %v1076 = vadd.f32 %v1075, 1.0
        %v1077 = vmul.f32 %v1076, %v1002
        %v1078 = vand.u32 2147483647, %v1002
        %vm1079 = vcmp.lt.f32.partialorder %v1078, 0.0004427343
        %v1080 = vsel %vm1079, %v1077, %v1074
        %v1081 = vadd.f32 %v1004, 1.0
        %v1082 = vlog2.pop %v1081
        %v1083 = vmul.f32 %v1082, 0.6931472
        %v1084 = vmul.f32 -0.5, %v1004
        %v1085 = vadd.f32 %v1084, 1.0
        %v1086 = vmul.f32 %v1085, %v1004
        %v1087 = vand.u32 2147483647, %v1004
        %vm1088 = vcmp.lt.f32.partialorder %v1087, 0.0004427343
        %v1089 = vsel %vm1088, %v1086, %v1083
        %v1090 = vadd.f32 %v1006, 1.0
        %v1091 = vlog2.pop %v1090
        %v1092 = vmul.f32 %v1091, 0.6931472
        %v1093 = vmul.f32 -0.5, %v1006
        %v1094 = vadd.f32 %v1093, 1.0
        %v1095 = vmul.f32 %v1094, %v1006
        %v1096 = vand.u32 2147483647, %v1006
        %vm1097 = vcmp.lt.f32.partialorder %v1096, 0.0004427343
        %v1098 = vsel %vm1097, %v1095, %v1092
        %v1099 = vadd.f32 %v1008, 1.0
        %v1100 = vlog2.pop %v1099
        %v1101 = vmul.f32 %v1100, 0.6931472
        %v1102 = vmul.f32 -0.5, %v1008
        %v1103 = vadd.f32 %v1102, 1.0
        %v1104 = vmul.f32 %v1103, %v1008
        %v1105 = vand.u32 2147483647, %v1008
        %vm1106 = vcmp.lt.f32.partialorder %v1105, 0.0004427343
        %v1107 = vsel %vm1106, %v1104, %v1101
        %v1108 = vadd.f32 %v1010, 1.0
        %v1109 = vlog2.pop %v1108
        %v1110 = vmul.f32 %v1109, 0.6931472
        %v1111 = vmul.f32 -0.5, %v1010
        %v1112 = vadd.f32 %v1111, 1.0
        %v1113 = vmul.f32 %v1112, %v1010
        %v1114 = vand.u32 2147483647, %v1010
        %vm1115 = vcmp.lt.f32.partialorder %v1114, 0.0004427343
        %v1116 = vsel %vm1115, %v1113, %v1110
        %v1117 = vadd.f32 %v1012, 1.0
        %v1118 = vlog2.pop %v1117
        %v1119 = vmul.f32 %v1118, 0.6931472
        %v1120 = vmul.f32 -0.5, %v1012
        %v1121 = vadd.f32 %v1120, 1.0
        %v1122 = vmul.f32 %v1121, %v1012
        %v1123 = vand.u32 2147483647, %v1012
        %vm1124 = vcmp.lt.f32.partialorder %v1123, 0.0004427343
        %v1125 = vsel %vm1124, %v1122, %v1119
        %v1126 = vadd.f32 %v1014, 1.0
        %v1127 = vlog2.pop %v1126
        %v1128 = vmul.f32 %v1127, 0.6931472
        %v1129 = vmul.f32 -0.5, %v1014
        %v1130 = vadd.f32 %v1129, 1.0
        %v1131 = vmul.f32 %v1130, %v1014
        %v1132 = vand.u32 2147483647, %v1014
        %vm1133 = vcmp.lt.f32.partialorder %v1132, 0.0004427343
        %v1134 = vsel %vm1133, %v1131, %v1128
        %v1135 = vadd.f32 %v1016, 1.0
        %v1136 = vlog2.pop %v1135
        %v1137 = vmul.f32 %v1136, 0.6931472
        %v1138 = vmul.f32 -0.5, %v1016
        %v1139 = vadd.f32 %v1138, 1.0
        %v1140 = vmul.f32 %v1139, %v1016
        %v1141 = vand.u32 2147483647, %v1016
        %vm1142 = vcmp.lt.f32.partialorder %v1141, 0.0004427343
        %v1143 = vsel %vm1142, %v1140, %v1137
        %v1144 = vadd.f32 %v1018, 1.0
        %v1145 = vlog2.pop %v1144
        %v1146 = vmul.f32 %v1145, 0.6931472
        %v1147 = vmul.f32 -0.5, %v1018
        %v1148 = vadd.f32 %v1147, 1.0
        %v1149 = vmul.f32 %v1148, %v1018
        %v1150 = vand.u32 2147483647, %v1018
        %vm1151 = vcmp.lt.f32.partialorder %v1150, 0.0004427343
        %v1152 = vsel %vm1151, %v1149, %v1146
        %v1153 = vadd.f32 %v1020, 1.0
        %v1154 = vlog2.pop %v1153
        %v1155 = vmul.f32 %v1154, 0.6931472
        %v1156 = vmul.f32 -0.5, %v1020
        %v1157 = vadd.f32 %v1156, 1.0
        %v1158 = vmul.f32 %v1157, %v1020
        %v1159 = vand.u32 2147483647, %v1020
        %vm1160 = vcmp.lt.f32.partialorder %v1159, 0.0004427343
        %v1161 = vsel %vm1160, %v1158, %v1155
        %v1162 = vadd.f32 %v1022, 1.0
        %v1163 = vlog2.pop %v1162
        %v1164 = vmul.f32 %v1163, 0.6931472
        %v1165 = vmul.f32 -0.5, %v1022
        %v1166 = vadd.f32 %v1165, 1.0
        %v1167 = vmul.f32 %v1166, %v1022
        %v1168 = vand.u32 2147483647, %v1022
        %vm1169 = vcmp.lt.f32.partialorder %v1168, 0.0004427343
        %v1170 = vsel %vm1169, %v1167, %v1164
        %v1171 = vadd.f32 %v1024, 1.0
        %v1172 = vlog2.pop %v1171
        %v1173 = vmul.f32 %v1172, 0.6931472
        %v1174 = vmul.f32 -0.5, %v1024
        %v1175 = vadd.f32 %v1174, 1.0
        %v1176 = vmul.f32 %v1175, %v1024
        %v1177 = vand.u32 2147483647, %v1024
        %vm1178 = vcmp.lt.f32.partialorder %v1177, 0.0004427343
        %v1179 = vsel %vm1178, %v1176, %v1173
        %v1180 = vadd.f32 %v1026, 1.0
        %v1181 = vlog2.pop %v1180
        %v1182 = vmul.f32 %v1181, 0.6931472
        %v1183 = vmul.f32 -0.5, %v1026
        %v1184 = vadd.f32 %v1183, 1.0
        %v1185 = vmul.f32 %v1184, %v1026
        %v1186 = vand.u32 2147483647, %v1026
        %vm1187 = vcmp.lt.f32.partialorder %v1186, 0.0004427343
        %v1188 = vsel %vm1187, %v1185, %v1182
        %v1189 = vadd.f32 %v1028, 1.0
        %v1190 = vlog2.pop %v1189
        %v1191 = vmul.f32 %v1190, 0.6931472
        %v1192 = vmul.f32 -0.5, %v1028
        %v1193 = vadd.f32 %v1192, 1.0
        %v1194 = vmul.f32 %v1193, %v1028
        %v1195 = vand.u32 2147483647, %v1028
        %vm1196 = vcmp.lt.f32.partialorder %v1195, 0.0004427343
        %v1197 = vsel %vm1196, %v1194, %v1191
        %v1198 = vadd.f32 %v1030, 1.0
        %v1199 = vlog2.pop %v1198
        %v1200 = vmul.f32 %v1199, 0.6931472
        %v1201 = vmul.f32 -0.5, %v1030
        %v1202 = vadd.f32 %v1201, 1.0
        %v1203 = vmul.f32 %v1202, %v1030
        %v1204 = vand.u32 2147483647, %v1030
        %vm1205 = vcmp.lt.f32.partialorder %v1204, 0.0004427343
        %v1206 = vsel %vm1205, %v1203, %v1200
        %v1207 = vadd.f32 %v1032, 1.0
        %v1208 = vlog2.pop %v1207
        %v1209 = vmul.f32 %v1208, 0.6931472
        %v1210 = vmul.f32 -0.5, %v1032
        %v1211 = vadd.f32 %v1210, 1.0
        %v1212 = vmul.f32 %v1211, %v1032
        %v1213 = vand.u32 2147483647, %v1032
        %vm1214 = vcmp.lt.f32.partialorder %v1213, 0.0004427343
        %v1215 = vsel %vm1214, %v1212, %v1209
        %v1216 = vadd.f32 %v1034, 1.0
        %v1217 = vlog2.pop %v1216
        %v1218 = vmul.f32 %v1217, 0.6931472
        %v1219 = vmul.f32 -0.5, %v1034
        %v1220 = vadd.f32 %v1219, 1.0
        %v1221 = vmul.f32 %v1220, %v1034
        %v1222 = vand.u32 2147483647, %v1034
        %vm1223 = vcmp.lt.f32.partialorder %v1222, 0.0004427343
        %v1224 = vsel %vm1223, %v1221, %v1218
        %v1225 = vadd.f32 %v1036, 1.0
        %v1226 = vlog2.pop %v1225
        %v1227 = vmul.f32 %v1226, 0.6931472
        %v1228 = vmul.f32 -0.5, %v1036
        %v1229 = vadd.f32 %v1228, 1.0
        %v1230 = vmul.f32 %v1229, %v1036
        %v1231 = vand.u32 2147483647, %v1036
        %vm1232 = vcmp.lt.f32.partialorder %v1231, 0.0004427343
        %v1233 = vsel %vm1232, %v1230, %v1227
        %v1234 = vadd.f32 %v1038, 1.0
        %v1235 = vlog2.pop %v1234
        %v1236 = vmul.f32 %v1235, 0.6931472
        %v1237 = vmul.f32 -0.5, %v1038
        %v1238 = vadd.f32 %v1237, 1.0
        %v1239 = vmul.f32 %v1238, %v1038
        %v1240 = vand.u32 2147483647, %v1038
        %vm1241 = vcmp.lt.f32.partialorder %v1240, 0.0004427343
        %v1242 = vsel %vm1241, %v1239, %v1236
        %v1243 = vadd.f32 %v1040, 1.0
        %v1244 = vlog2.pop %v1243
        %v1245 = vmul.f32 %v1244, 0.6931472
        %v1246 = vmul.f32 -0.5, %v1040
        %v1247 = vadd.f32 %v1246, 1.0
        %v1248 = vmul.f32 %v1247, %v1040
        %v1249 = vand.u32 2147483647, %v1040
        %vm1250 = vcmp.lt.f32.partialorder %v1249, 0.0004427343
        %v1251 = vsel %vm1250, %v1248, %v1245
        %v1252 = vadd.f32 %v1042, 1.0
        %v1253 = vlog2.pop %v1252
        %v1254 = vmul.f32 %v1253, 0.6931472
        %v1255 = vmul.f32 -0.5, %v1042
        %v1256 = vadd.f32 %v1255, 1.0
        %v1257 = vmul.f32 %v1256, %v1042
        %v1258 = vand.u32 2147483647, %v1042
        %vm1259 = vcmp.lt.f32.partialorder %v1258, 0.0004427343
        %v1260 = vsel %vm1259, %v1257, %v1254
        %v1261 = vadd.f32 %v1044, 1.0
        %v1262 = vlog2.pop %v1261
        %v1263 = vmul.f32 %v1262, 0.6931472
        %v1264 = vmul.f32 -0.5, %v1044
        %v1265 = vadd.f32 %v1264, 1.0
        %v1266 = vmul.f32 %v1265, %v1044
        %v1267 = vand.u32 2147483647, %v1044
        %vm1268 = vcmp.lt.f32.partialorder %v1267, 0.0004427343
        %v1269 = vsel %vm1268, %v1266, %v1263
        %v1270 = vadd.f32 %v1046, 1.0
        %v1271 = vlog2.pop %v1270
        %v1272 = vmul.f32 %v1271, 0.6931472
        %v1273 = vmul.f32 -0.5, %v1046
        %v1274 = vadd.f32 %v1273, 1.0
        %v1275 = vmul.f32 %v1274, %v1046
        %v1276 = vand.u32 2147483647, %v1046
        %vm1277 = vcmp.lt.f32.partialorder %v1276, 0.0004427343
        %v1278 = vsel %vm1277, %v1275, %v1272
        %v1279 = vadd.f32 %v1048, 1.0
        %v1280 = vlog2.pop %v1279
        %v1281 = vmul.f32 %v1280, 0.6931472
        %v1282 = vmul.f32 -0.5, %v1048
        %v1283 = vadd.f32 %v1282, 1.0
        %v1284 = vmul.f32 %v1283, %v1048
        %v1285 = vand.u32 2147483647, %v1048
        %vm1286 = vcmp.lt.f32.partialorder %v1285, 0.0004427343
        %v1287 = vsel %vm1286, %v1284, %v1281
        %v1288 = vadd.f32 %v1050, 1.0
        %v1289 = vlog2.pop %v1288
        %v1290 = vmul.f32 %v1289, 0.6931472
        %v1291 = vmul.f32 -0.5, %v1050
        %v1292 = vadd.f32 %v1291, 1.0
        %v1293 = vmul.f32 %v1292, %v1050
        %v1294 = vand.u32 2147483647, %v1050
        %vm1295 = vcmp.lt.f32.partialorder %v1294, 0.0004427343
        %v1296 = vsel %vm1295, %v1293, %v1290
        %v1297 = vadd.f32 %v1052, 1.0
        %v1298 = vlog2.pop %v1297
        %v1299 = vmul.f32 %v1298, 0.6931472
        %v1300 = vmul.f32 -0.5, %v1052
        %v1301 = vadd.f32 %v1300, 1.0
        %v1302 = vmul.f32 %v1301, %v1052
        %v1303 = vand.u32 2147483647, %v1052
        %vm1304 = vcmp.lt.f32.partialorder %v1303, 0.0004427343
        %v1305 = vsel %vm1304, %v1302, %v1299
        %v1306 = vadd.f32 %v1054, 1.0
        %v1307 = vlog2.pop %v1306
        %v1308 = vmul.f32 %v1307, 0.6931472
        %v1309 = vmul.f32 -0.5, %v1054
        %v1310 = vadd.f32 %v1309, 1.0
        %v1311 = vmul.f32 %v1310, %v1054
        %v1312 = vand.u32 2147483647, %v1054
        %vm1313 = vcmp.lt.f32.partialorder %v1312, 0.0004427343
        %v1314 = vsel %vm1313, %v1311, %v1308
        %v1315 = vadd.f32 %v1056, 1.0
        %v1316 = vlog2.pop %v1315
        %v1317 = vmul.f32 %v1316, 0.6931472
        %v1318 = vmul.f32 -0.5, %v1056
        %v1319 = vadd.f32 %v1318, 1.0
        %v1320 = vmul.f32 %v1319, %v1056
        %v1321 = vand.u32 2147483647, %v1056
        %vm1322 = vcmp.lt.f32.partialorder %v1321, 0.0004427343
        %v1323 = vsel %vm1322, %v1320, %v1317
        %v1324 = vadd.f32 %v1058, 1.0
        %v1325 = vlog2.pop %v1324
        %v1326 = vmul.f32 %v1325, 0.6931472
        %v1327 = vmul.f32 -0.5, %v1058
        %v1328 = vadd.f32 %v1327, 1.0
        %v1329 = vmul.f32 %v1328, %v1058
        %v1330 = vand.u32 2147483647, %v1058
        %vm1331 = vcmp.lt.f32.partialorder %v1330, 0.0004427343
        %v1332 = vsel %vm1331, %v1329, %v1326
        %v1333 = vadd.f32 %v1060, 1.0
        %v1334 = vlog2.pop %v1333
        %v1335 = vmul.f32 %v1334, 0.6931472
        %v1336 = vmul.f32 -0.5, %v1060
        %v1337 = vadd.f32 %v1336, 1.0
        %v1338 = vmul.f32 %v1337, %v1060
        %v1339 = vand.u32 2147483647, %v1060
        %vm1340 = vcmp.lt.f32.partialorder %v1339, 0.0004427343
        %v1341 = vsel %vm1340, %v1338, %v1335
        %v1342 = vadd.f32 %v1062, 1.0
        %v1343 = vlog2.pop %v1342
        %v1344 = vmul.f32 %v1343, 0.6931472
        %v1345 = vmul.f32 -0.5, %v1062
        %v1346 = vadd.f32 %v1345, 1.0
        %v1347 = vmul.f32 %v1346, %v1062
        %v1348 = vand.u32 2147483647, %v1062
        %vm1349 = vcmp.lt.f32.partialorder %v1348, 0.0004427343
        %v1350 = vsel %vm1349, %v1347, %v1344
        %v1351 = vsub.f32 0.0, %v1071
        %v1352 = vsub.f32 0.0, %v1080
        %v1353 = vsub.f32 0.0, %v1089
        %v1354 = vsub.f32 0.0, %v1098
        %v1355 = vsub.f32 0.0, %v1107
        %v1356 = vsub.f32 0.0, %v1116
        %v1357 = vsub.f32 0.0, %v1125
        %v1358 = vsub.f32 0.0, %v1134
        %v1359 = vsub.f32 0.0, %v1143
        %v1360 = vsub.f32 0.0, %v1152
        %v1361 = vsub.f32 0.0, %v1161
        %v1362 = vsub.f32 0.0, %v1170
        %v1363 = vsub.f32 0.0, %v1179
        %v1364 = vsub.f32 0.0, %v1188
        %v1365 = vsub.f32 0.0, %v1197
        %v1366 = vsub.f32 0.0, %v1206
        %v1367 = vsub.f32 0.0, %v1215
        %v1368 = vsub.f32 0.0, %v1224
        %v1369 = vsub.f32 0.0, %v1233
        %v1370 = vsub.f32 0.0, %v1242
        %v1371 = vsub.f32 0.0, %v1251
        %v1372 = vsub.f32 0.0, %v1260
        %v1373 = vsub.f32 0.0, %v1269
        %v1374 = vsub.f32 0.0, %v1278
        %v1375 = vsub.f32 0.0, %v1287
        %v1376 = vsub.f32 0.0, %v1296
        %v1377 = vsub.f32 0.0, %v1305
        %v1378 = vsub.f32 0.0, %v1314
        %v1379 = vsub.f32 0.0, %v1323
        %v1380 = vsub.f32 0.0, %v1332
        %v1381 = vsub.f32 0.0, %v1341
        %v1382 = vsub.f32 0.0, %v1350
        %vm1383 = vcmp.gt.f32.partialorder %v935, 20.0
        %vm1384 = vcmp.gt.f32.partialorder %v936, 20.0
        %vm1385 = vcmp.gt.f32.partialorder %v937, 20.0
        %vm1386 = vcmp.gt.f32.partialorder %v938, 20.0
        %vm1387 = vcmp.gt.f32.partialorder %v939, 20.0
        %vm1388 = vcmp.gt.f32.partialorder %v940, 20.0
        %vm1389 = vcmp.gt.f32.partialorder %v941, 20.0
        %vm1390 = vcmp.gt.f32.partialorder %v942, 20.0
        %vm1391 = vcmp.gt.f32.partialorder %v943, 20.0
        %vm1392 = vcmp.gt.f32.partialorder %v944, 20.0
        %vm1393 = vcmp.gt.f32.partialorder %v945, 20.0
        %vm1394 = vcmp.gt.f32.partialorder %v946, 20.0
        %vm1395 = vcmp.gt.f32.partialorder %v947, 20.0
        %vm1396 = vcmp.gt.f32.partialorder %v948, 20.0
        %vm1397 = vcmp.gt.f32.partialorder %v949, 20.0
        %vm1398 = vcmp.gt.f32.partialorder %v950, 20.0
        %vm1399 = vcmp.gt.f32.partialorder %v951, 20.0
        %vm1400 = vcmp.gt.f32.partialorder %v952, 20.0
        %vm1401 = vcmp.gt.f32.partialorder %v953, 20.0
        %vm1402 = vcmp.gt.f32.partialorder %v954, 20.0
        %vm1403 = vcmp.gt.f32.partialorder %v955, 20.0
        %vm1404 = vcmp.gt.f32.partialorder %v956, 20.0
        %vm1405 = vcmp.gt.f32.partialorder %v957, 20.0
        %vm1406 = vcmp.gt.f32.partialorder %v958, 20.0
        %vm1407 = vcmp.gt.f32.partialorder %v959, 20.0
        %vm1408 = vcmp.gt.f32.partialorder %v960, 20.0
        %vm1409 = vcmp.gt.f32.partialorder %v961, 20.0
        %vm1410 = vcmp.gt.f32.partialorder %v962, 20.0
        %vm1411 = vcmp.gt.f32.partialorder %v963, 20.0
        %vm1412 = vcmp.gt.f32.partialorder %v964, 20.0
        %vm1413 = vcmp.gt.f32.partialorder %v965, 20.0
        %vm1414 = vcmp.gt.f32.partialorder %v966, 20.0
        %v1415 = vsel %vm1383, %v903, %v1351
        %v1416 = vsel %vm1384, %v904, %v1352
        %v1417 = vsel %vm1385, %v905, %v1353
        %v1418 = vsel %vm1386, %v906, %v1354
        %v1419 = vsel %vm1387, %v907, %v1355
        %v1420 = vsel %vm1388, %v908, %v1356
        %v1421 = vsel %vm1389, %v909, %v1357
        %v1422 = vsel %vm1390, %v910, %v1358
        %v1423 = vsel %vm1391, %v911, %v1359
        %v1424 = vsel %vm1392, %v912, %v1360
        %v1425 = vsel %vm1393, %v913, %v1361
        %v1426 = vsel %vm1394, %v914, %v1362
        %v1427 = vsel %vm1395, %v915, %v1363
        %v1428 = vsel %vm1396, %v916, %v1364
        %v1429 = vsel %vm1397, %v917, %v1365
        %v1430 = vsel %vm1398, %v918, %v1366
        %v1431 = vsel %vm1399, %v919, %v1367
        %v1432 = vsel %vm1400, %v920, %v1368
        %v1433 = vsel %vm1401, %v921, %v1369
        %v1434 = vsel %vm1402, %v922, %v1370
        %v1435 = vsel %vm1403, %v923, %v1371
        %v1436 = vsel %vm1404, %v924, %v1372
        %v1437 = vsel %vm1405, %v925, %v1373
        %v1438 = vsel %vm1406, %v926, %v1374
        %v1439 = vsel %vm1407, %v927, %v1375
        %v1440 = vsel %vm1408, %v928, %v1376
        %v1441 = vsel %vm1409, %v929, %v1377
        %v1442 = vsel %vm1410, %v930, %v1378
        %v1443 = vsel %vm1411, %v931, %v1379
        %v1444 = vsel %vm1412, %v932, %v1380
        %v1445 = vsel %vm1413, %v933, %v1381
        %v1446 = vsel %vm1414, %v934, %v1382
        %v1447 = vstv %s868
        %v1448 = vmul.f32 %v1447, %v1415
        %v1449 = vmul.f32 %v1447, %v1416
        %v1450 = vmul.f32 %v1447, %v1417
        %v1451 = vmul.f32 %v1447, %v1418
        %v1452 = vmul.f32 %v1447, %v1419
        %v1453 = vmul.f32 %v1447, %v1420
        %v1454 = vmul.f32 %v1447, %v1421
        %v1455 = vmul.f32 %v1447, %v1422
        %v1456 = vmul.f32 %v1447, %v1423
        %v1457 = vmul.f32 %v1447, %v1424
        %v1458 = vmul.f32 %v1447, %v1425
        %v1459 = vmul.f32 %v1447, %v1426
        %v1460 = vmul.f32 %v1447, %v1427
        %v1461 = vmul.f32 %v1447, %v1428
        %v1462 = vmul.f32 %v1447, %v1429
        %v1463 = vmul.f32 %v1447, %v1430
        %v1464 = vmul.f32 %v1447, %v1431
        %v1465 = vmul.f32 %v1447, %v1432
        %v1466 = vmul.f32 %v1447, %v1433
        %v1467 = vmul.f32 %v1447, %v1434
        %v1468 = vmul.f32 %v1447, %v1435
        %v1469 = vmul.f32 %v1447, %v1436
        %v1470 = vmul.f32 %v1447, %v1437
        %v1471 = vmul.f32 %v1447, %v1438
        %v1472 = vmul.f32 %v1447, %v1439
        %v1473 = vmul.f32 %v1447, %v1440
        %v1474 = vmul.f32 %v1447, %v1441
        %v1475 = vmul.f32 %v1447, %v1442
        %v1476 = vmul.f32 %v1447, %v1443
        %v1477 = vmul.f32 %v1447, %v1444
        %v1478 = vmul.f32 %v1447, %v1445
        %v1479 = vmul.f32 %v1447, %v1446
        %v1480 = vmul.f32 %v1448, 1.442695
        %v1481 = vpow.pop %v1480
        %v1482 = vmul.f32 %v1449, 1.442695
        %v1483 = vpow.pop %v1482
        %v1484 = vmul.f32 %v1450, 1.442695
        %v1485 = vpow.pop %v1484
        %v1486 = vmul.f32 %v1451, 1.442695
        %v1487 = vpow.pop %v1486
        %v1488 = vmul.f32 %v1452, 1.442695
        %v1489 = vpow.pop %v1488
        %v1490 = vmul.f32 %v1453, 1.442695
        %v1491 = vpow.pop %v1490
        %v1492 = vmul.f32 %v1454, 1.442695
        %v1493 = vpow.pop %v1492
        %v1494 = vmul.f32 %v1455, 1.442695
        %v1495 = vpow.pop %v1494
        %v1496 = vmul.f32 %v1456, 1.442695
        %v1497 = vpow.pop %v1496
        %v1498 = vmul.f32 %v1457, 1.442695
        %v1499 = vpow.pop %v1498
        %v1500 = vmul.f32 %v1458, 1.442695
        %v1501 = vpow.pop %v1500
        %v1502 = vmul.f32 %v1459, 1.442695
        %v1503 = vpow.pop %v1502
        %v1504 = vmul.f32 %v1460, 1.442695
        %v1505 = vpow.pop %v1504
        %v1506 = vmul.f32 %v1461, 1.442695
        %v1507 = vpow.pop %v1506
        %v1508 = vmul.f32 %v1462, 1.442695
        %v1509 = vpow.pop %v1508
        %v1510 = vmul.f32 %v1463, 1.442695
        %v1511 = vpow.pop %v1510
        %v1512 = vmul.f32 %v1464, 1.442695
        %v1513 = vpow.pop %v1512
        %v1514 = vmul.f32 %v1465, 1.442695
        %v1515 = vpow.pop %v1514
        %v1516 = vmul.f32 %v1466, 1.442695
        %v1517 = vpow.pop %v1516
        %v1518 = vmul.f32 %v1467, 1.442695
        %v1519 = vpow.pop %v1518
        %v1520 = vmul.f32 %v1468, 1.442695
        %v1521 = vpow.pop %v1520
        %v1522 = vmul.f32 %v1469, 1.442695
        %v1523 = vpow.pop %v1522
        %v1524 = vmul.f32 %v1470, 1.442695
        %v1525 = vpow.pop %v1524
        %v1526 = vmul.f32 %v1471, 1.442695
        %v1527 = vpow.pop %v1526
        %v1528 = vmul.f32 %v1472, 1.442695
        %v1529 = vpow.pop %v1528
        %v1530 = vmul.f32 %v1473, 1.442695
        %v1531 = vpow.pop %v1530
        %v1532 = vmul.f32 %v1474, 1.442695
        %v1533 = vpow.pop %v1532
        %v1534 = vmul.f32 %v1475, 1.442695
        %v1535 = vpow.pop %v1534
        %v1536 = vmul.f32 %v1476, 1.442695
        %v1537 = vpow.pop %v1536
        %v1538 = vmul.f32 %v1477, 1.442695
        %v1539 = vpow.pop %v1538
        %v1540 = vmul.f32 %v1478, 1.442695
        %v1541 = vpow.pop %v1540
        %v1542 = vmul.f32 %v1479, 1.442695
        %v1543 = vpow.pop %v1542
        %v1544 = vmul.f32 %v1481, %v834
        %v1545 = vmul.f32 %v1483, %v835
        %v1546 = vmul.f32 %v1485, %v836
        %v1547 = vmul.f32 %v1487, %v837
        %v1548 = vmul.f32 %v1489, %v838
        %v1549 = vmul.f32 %v1491, %v839
        %v1550 = vmul.f32 %v1493, %v840
        %v1551 = vmul.f32 %v1495, %v841
        %v1552 = vmul.f32 %v1497, %v842
        %v1553 = vmul.f32 %v1499, %v843
        %v1554 = vmul.f32 %v1501, %v844
        %v1555 = vmul.f32 %v1503, %v845
        %v1556 = vmul.f32 %v1505, %v846
        %v1557 = vmul.f32 %v1507, %v847
        %v1558 = vmul.f32 %v1509, %v848
        %v1559 = vmul.f32 %v1511, %v849
        %v1560 = vmul.f32 %v1513, %v850
        %v1561 = vmul.f32 %v1515, %v851
        %v1562 = vmul.f32 %v1517, %v852
        %v1563 = vmul.f32 %v1519, %v853
        %v1564 = vmul.f32 %v1521, %v854
        %v1565 = vmul.f32 %v1523, %v855
        %v1566 = vmul.f32 %v1525, %v856
        %v1567 = vmul.f32 %v1527, %v857
        %v1568 = vmul.f32 %v1529, %v858
        %v1569 = vmul.f32 %v1531, %v859
        %v1570 = vmul.f32 %v1533, %v860
        %v1571 = vmul.f32 %v1535, %v861
        %v1572 = vmul.f32 %v1537, %v862
        %v1573 = vmul.f32 %v1539, %v863
        %v1574 = vmul.f32 %v1541, %v864
        %v1575 = vmul.f32 %v1543, %v865
        %v1576 = vlaneseq
        %v1577 = vshrl.u32 %v1576, 7
        %v1578 = vadd.s32 %v1577, 8
        %vm1579 = vcmp.ne.s32.totalorder %v1577, 0
        %vm1580 = vcmp.ne.s32.totalorder %v1578, 0
        %v1581 = vsel %vm1579, 1, 0
        %v1582 = vsel %vm1580, 1, 0
        %v1583 = vcvt.s32.f32 %v1581
        %v1584 = vcvt.s32.f32 %v1582
        %v1585 = vpack.c.bf16 %v1584, %v1583
        %vm1586 = vcmp.ne.s32.totalorder %v1577, 15
        %vm1587 = vcmp.ne.s32.totalorder %v1578, 15
        %v1588 = vsel %vm1586, 1, 0
        %v1589 = vsel %vm1587, 1, 0
        %v1590 = vcvt.s32.f32 %v1588
        %v1591 = vcvt.s32.f32 %v1589
        %v1592 = vpack.c.bf16 %v1591, %v1590
        %v1593 = vpack.c.bf16 0.0, 0.0
        %v1594 = vpack.c.bf16 %v1544, 0.0
        %v1595 = vpack.c.bf16 %v1546, %v1545
        %v1596 = vpack.c.bf16 %v1548, %v1547
        %v1597 = vpack.c.bf16 %v1550, %v1549
        %v1598 = vpack.c.bf16 %v1552, %v1551
        %v1599 = vpack.c.bf16 %v1554, %v1553
        %v1600 = vpack.c.bf16 %v1556, %v1555
        %v1601 = vpack.c.bf16 %v1558, %v1557
        %v1602 = vpack.c.bf16 %v1560, %v1559
        %v1603 = vpack.c.bf16 %v1562, %v1561
        %v1604 = vpack.c.bf16 %v1564, %v1563
        %v1605 = vpack.c.bf16 %v1566, %v1565
        %v1606 = vpack.c.bf16 %v1568, %v1567
        %v1607 = vpack.c.bf16 %v1570, %v1569
        %v1608 = vpack.c.bf16 %v1572, %v1571
        %v1609 = vpack.c.bf16 %v1574, %v1573
        %v1610 = vpack.c.bf16 0.0, %v1575
        %vm1611 = vsmask.f32 4352
        %v1613 = vshrl.u32 %v1593, 16
        %v1615 = vrot.slane %v1613, 3
        %v1616 = vshll.u32 %v1593, 16
        %v1618 = vrot.slane %v1616, 4
        %v1619 = vor.u32 %v1615, %v1618
        %v1621 = vshrl.u32 %v1594, 16
        %v1623 = vrot.slane %v1621, 3
        %v1624 = vshll.u32 %v1594, 16
        %v1626 = vrot.slane %v1624, 4
        %v1627 = vor.u32 %v1623, %v1626
        %v1628 = vsel %vm1611, %v1619, %v1627
        %v1630 = vshrl.u32 %v1595, 16
        %v1632 = vrot.slane %v1630, 3
        %v1633 = vshll.u32 %v1595, 16
        %v1635 = vrot.slane %v1633, 4
        %v1636 = vor.u32 %v1632, %v1635
        %v1637 = vsel %vm1611, %v1627, %v1636
        %v1639 = vshrl.u32 %v1596, 16
        %v1641 = vrot.slane %v1639, 3
        %v1642 = vshll.u32 %v1596, 16
        %v1644 = vrot.slane %v1642, 4
        %v1645 = vor.u32 %v1641, %v1644
        %v1646 = vsel %vm1611, %v1636, %v1645
        %v1648 = vshrl.u32 %v1597, 16
        %v1650 = vrot.slane %v1648, 3
        %v1651 = vshll.u32 %v1597, 16
        %v1653 = vrot.slane %v1651, 4
        %v1654 = vor.u32 %v1650, %v1653
        %v1655 = vsel %vm1611, %v1645, %v1654
        %v1657 = vshrl.u32 %v1598, 16
        %v1659 = vrot.slane %v1657, 3
        %v1660 = vshll.u32 %v1598, 16
        %v1662 = vrot.slane %v1660, 4
        %v1663 = vor.u32 %v1659, %v1662
        %v1664 = vsel %vm1611, %v1654, %v1663
        %v1666 = vshrl.u32 %v1599, 16
        %v1668 = vrot.slane %v1666, 3
        %v1669 = vshll.u32 %v1599, 16
        %v1671 = vrot.slane %v1669, 4
        %v1672 = vor.u32 %v1668, %v1671
        %v1673 = vsel %vm1611, %v1663, %v1672
        %v1675 = vshrl.u32 %v1600, 16
        %v1677 = vrot.slane %v1675, 3
        %v1678 = vshll.u32 %v1600, 16
        %v1680 = vrot.slane %v1678, 4
        %v1681 = vor.u32 %v1677, %v1680
        %v1682 = vsel %vm1611, %v1672, %v1681
        %v1684 = vshrl.u32 %v1601, 16
        %v1686 = vrot.slane %v1684, 3
        %v1687 = vshll.u32 %v1601, 16
        %v1689 = vrot.slane %v1687, 4
        %v1690 = vor.u32 %v1686, %v1689
        %v1691 = vsel %vm1611, %v1681, %v1690
        %v1693 = vshrl.u32 %v1602, 16
        %v1695 = vrot.slane %v1693, 3
        %v1696 = vshll.u32 %v1602, 16
        %v1698 = vrot.slane %v1696, 4
        %v1699 = vor.u32 %v1695, %v1698
        %v1700 = vsel %vm1611, %v1690, %v1699
        %v1702 = vshrl.u32 %v1603, 16
        %v1704 = vrot.slane %v1702, 3
        %v1705 = vshll.u32 %v1603, 16
        %v1707 = vrot.slane %v1705, 4
        %v1708 = vor.u32 %v1704, %v1707
        %v1709 = vsel %vm1611, %v1699, %v1708
        %v1711 = vshrl.u32 %v1604, 16
        %v1713 = vrot.slane %v1711, 3
        %v1714 = vshll.u32 %v1604, 16
        %v1716 = vrot.slane %v1714, 4
        %v1717 = vor.u32 %v1713, %v1716
        %v1718 = vsel %vm1611, %v1708, %v1717
        %v1720 = vshrl.u32 %v1605, 16
        %v1722 = vrot.slane %v1720, 3
        %v1723 = vshll.u32 %v1605, 16
        %v1725 = vrot.slane %v1723, 4
        %v1726 = vor.u32 %v1722, %v1725
        %v1727 = vsel %vm1611, %v1717, %v1726
        %v1729 = vshrl.u32 %v1606, 16
        %v1731 = vrot.slane %v1729, 3
        %v1732 = vshll.u32 %v1606, 16
        %v1734 = vrot.slane %v1732, 4
        %v1735 = vor.u32 %v1731, %v1734
        %v1736 = vsel %vm1611, %v1726, %v1735
        %v1738 = vshrl.u32 %v1607, 16
        %v1740 = vrot.slane %v1738, 3
        %v1741 = vshll.u32 %v1607, 16
        %v1743 = vrot.slane %v1741, 4
        %v1744 = vor.u32 %v1740, %v1743
        %v1745 = vsel %vm1611, %v1735, %v1744
        %v1747 = vshrl.u32 %v1608, 16
        %v1749 = vrot.slane %v1747, 3
        %v1750 = vshll.u32 %v1608, 16
        %v1752 = vrot.slane %v1750, 4
        %v1753 = vor.u32 %v1749, %v1752
        %v1754 = vsel %vm1611, %v1744, %v1753
        %v1756 = vshrl.u32 %v1609, 16
        %v1758 = vrot.slane %v1756, 3
        %v1759 = vshll.u32 %v1609, 16
        %v1761 = vrot.slane %v1759, 4
        %v1762 = vor.u32 %v1758, %v1761
        %v1763 = vsel %vm1611, %v1753, %v1762
        %v1765 = vshrl.u32 %v1610, 16
        %v1767 = vrot.slane %v1765, 3
        %v1768 = vshll.u32 %v1610, 16
        %v1770 = vrot.slane %v1768, 4
        %v1771 = vor.u32 %v1767, %v1770
        %v1772 = vsel %vm1611, %v1762, %v1771
        %v1773 = vsel %vm1611, %v1771, %v1619
        %v1792 = vmul.bf16 %v1628, %v1585
        %v1793 = vmul.bf16 %v1637, %v1585
        %v1794 = vmul.bf16 %v1646, %v1585
        %v1795 = vmul.bf16 %v1655, %v1585
        %v1796 = vmul.bf16 %v1664, %v1585
        %v1797 = vmul.bf16 %v1673, %v1585
        %v1798 = vmul.bf16 %v1682, %v1585
        %v1799 = vmul.bf16 %v1691, %v1585
        %v1800 = vmul.bf16 %v1700, %v1585
        %v1801 = vmul.bf16 %v1709, %v1585
        %v1802 = vmul.bf16 %v1718, %v1585
        %v1803 = vmul.bf16 %v1727, %v1585
        %v1804 = vmul.bf16 %v1736, %v1585
        %v1805 = vmul.bf16 %v1745, %v1585
        %v1806 = vmul.bf16 %v1754, %v1585
        %v1807 = vmul.bf16 %v1763, %v1585
        %v1808 = vmul.bf16 %v1772, %v1585
        %v1809 = vmul.bf16 %v1773, %v1585
        %v1810 = vpack.c.bf16 %v1545, %v1544
        %v1811 = vpack.c.bf16 %v1547, %v1546
        %v1812 = vpack.c.bf16 %v1549, %v1548
        %v1813 = vpack.c.bf16 %v1551, %v1550
        %v1814 = vpack.c.bf16 %v1553, %v1552
        %v1815 = vpack.c.bf16 %v1555, %v1554
        %v1816 = vpack.c.bf16 %v1557, %v1556
        %v1817 = vpack.c.bf16 %v1559, %v1558
        %v1818 = vpack.c.bf16 %v1561, %v1560
        %v1819 = vpack.c.bf16 %v1563, %v1562
        %v1820 = vpack.c.bf16 %v1565, %v1564
        %v1821 = vpack.c.bf16 %v1567, %v1566
        %v1822 = vpack.c.bf16 %v1569, %v1568
        %v1823 = vpack.c.bf16 %v1571, %v1570
        %v1824 = vpack.c.bf16 %v1573, %v1572
        %v1825 = vpack.c.bf16 %v1575, %v1574
        %vm1826 = vsmask.f32 7424
        %v1827 = vrot.slane %v1616, 1
        %v1828 = vor.u32 %v1613, %v1827
        %v1830 = vshll.u32 %v1810, 16
        %v1832 = vrot.slane %v1830, 1
        %v1833 = vsel %vm1826, %v1828, %v1832
        %v1834 = vshrl.u32 %v1810, 16
        %v1836 = vor.u32 %v1834, %v1832
        %v1838 = vshll.u32 %v1811, 16
        %v1840 = vrot.slane %v1838, 1
        %v1841 = vsel %vm1826, %v1836, %v1840
        %v1842 = vshrl.u32 %v1811, 16
        %v1844 = vor.u32 %v1842, %v1840
        %v1846 = vshll.u32 %v1812, 16
        %v1848 = vrot.slane %v1846, 1
        %v1849 = vsel %vm1826, %v1844, %v1848
        %v1850 = vshrl.u32 %v1812, 16
        %v1852 = vor.u32 %v1850, %v1848
        %v1854 = vshll.u32 %v1813, 16
        %v1856 = vrot.slane %v1854, 1
        %v1857 = vsel %vm1826, %v1852, %v1856
        %v1858 = vshrl.u32 %v1813, 16
        %v1860 = vor.u32 %v1858, %v1856
        %v1862 = vshll.u32 %v1814, 16
        %v1864 = vrot.slane %v1862, 1
        %v1865 = vsel %vm1826, %v1860, %v1864
        %v1866 = vshrl.u32 %v1814, 16
        %v1868 = vor.u32 %v1866, %v1864
        %v1870 = vshll.u32 %v1815, 16
        %v1872 = vrot.slane %v1870, 1
        %v1873 = vsel %vm1826, %v1868, %v1872
        %v1874 = vshrl.u32 %v1815, 16
        %v1876 = vor.u32 %v1874, %v1872
        %v1878 = vshll.u32 %v1816, 16
        %v1880 = vrot.slane %v1878, 1
        %v1881 = vsel %vm1826, %v1876, %v1880
        %v1882 = vshrl.u32 %v1816, 16
        %v1884 = vor.u32 %v1882, %v1880
        %v1886 = vshll.u32 %v1817, 16
        %v1888 = vrot.slane %v1886, 1
        %v1889 = vsel %vm1826, %v1884, %v1888
        %v1890 = vshrl.u32 %v1817, 16
        %v1892 = vor.u32 %v1890, %v1888
        %v1894 = vshll.u32 %v1818, 16
        %v1896 = vrot.slane %v1894, 1
        %v1897 = vsel %vm1826, %v1892, %v1896
        %v1898 = vshrl.u32 %v1818, 16
        %v1900 = vor.u32 %v1898, %v1896
        %v1902 = vshll.u32 %v1819, 16
        %v1904 = vrot.slane %v1902, 1
        %v1905 = vsel %vm1826, %v1900, %v1904
        %v1906 = vshrl.u32 %v1819, 16
        %v1908 = vor.u32 %v1906, %v1904
        %v1910 = vshll.u32 %v1820, 16
        %v1912 = vrot.slane %v1910, 1
        %v1913 = vsel %vm1826, %v1908, %v1912
        %v1914 = vshrl.u32 %v1820, 16
        %v1916 = vor.u32 %v1914, %v1912
        %v1918 = vshll.u32 %v1821, 16
        %v1920 = vrot.slane %v1918, 1
        %v1921 = vsel %vm1826, %v1916, %v1920
        %v1922 = vshrl.u32 %v1821, 16
        %v1924 = vor.u32 %v1922, %v1920
        %v1926 = vshll.u32 %v1822, 16
        %v1928 = vrot.slane %v1926, 1
        %v1929 = vsel %vm1826, %v1924, %v1928
        %v1930 = vshrl.u32 %v1822, 16
        %v1932 = vor.u32 %v1930, %v1928
        %v1934 = vshll.u32 %v1823, 16
        %v1936 = vrot.slane %v1934, 1
        %v1937 = vsel %vm1826, %v1932, %v1936
        %v1938 = vshrl.u32 %v1823, 16
        %v1940 = vor.u32 %v1938, %v1936
        %v1942 = vshll.u32 %v1824, 16
        %v1944 = vrot.slane %v1942, 1
        %v1945 = vsel %vm1826, %v1940, %v1944
        %v1946 = vshrl.u32 %v1824, 16
        %v1948 = vor.u32 %v1946, %v1944
        %v1950 = vshll.u32 %v1825, 16
        %v1952 = vrot.slane %v1950, 1
        %v1953 = vsel %vm1826, %v1948, %v1952
        %v1954 = vshrl.u32 %v1825, 16
        %v1956 = vor.u32 %v1954, %v1952
        %v1957 = vsel %vm1826, %v1956, %v1827
        %v1958 = vsel %vm1826, %v1828, %v1827
        %v1977 = vmul.bf16 %v1833, %v1592
        %v1978 = vmul.bf16 %v1841, %v1592
        %v1979 = vmul.bf16 %v1849, %v1592
        %v1980 = vmul.bf16 %v1857, %v1592
        %v1981 = vmul.bf16 %v1865, %v1592
        %v1982 = vmul.bf16 %v1873, %v1592
        %v1983 = vmul.bf16 %v1881, %v1592
        %v1984 = vmul.bf16 %v1889, %v1592
        %v1985 = vmul.bf16 %v1897, %v1592
        %v1986 = vmul.bf16 %v1905, %v1592
        %v1987 = vmul.bf16 %v1913, %v1592
        %v1988 = vmul.bf16 %v1921, %v1592
        %v1989 = vmul.bf16 %v1929, %v1592
        %v1990 = vmul.bf16 %v1937, %v1592
        %v1991 = vmul.bf16 %v1945, %v1592
        %v1992 = vmul.bf16 %v1953, %v1592
        %v1993 = vmul.bf16 %v1957, %v1592
        %v1994 = vmul.bf16 %v1958, %v1592
        %2011 = vrot.lane.b32.xlu0 %v1593, 32
        %v2012 = vpop.permute.xlu0 %2011
        %2013 = vrot.lane.b32.xlu0 %v1810, 32
        %v2014 = vpop.permute.xlu0 %2013
        %2015 = vrot.lane.b32.xlu0 %v1811, 32
        %v2016 = vpop.permute.xlu0 %2015
        %2017 = vrot.lane.b32.xlu0 %v1812, 32
        %v2018 = vpop.permute.xlu0 %2017
        %2019 = vrot.lane.b32.xlu0 %v1813, 32
        %v2020 = vpop.permute.xlu0 %2019
        %2021 = vrot.lane.b32.xlu0 %v1814, 32
        %v2022 = vpop.permute.xlu0 %2021
        %2023 = vrot.lane.b32.xlu0 %v1815, 32
        %v2024 = vpop.permute.xlu0 %2023
        %2025 = vrot.lane.b32.xlu0 %v1816, 32
        %v2026 = vpop.permute.xlu0 %2025
        %2027 = vrot.lane.b32.xlu0 %v1817, 32
        %v2028 = vpop.permute.xlu0 %2027
        %2029 = vrot.lane.b32.xlu0 %v1818, 32
        %v2030 = vpop.permute.xlu0 %2029
        %2031 = vrot.lane.b32.xlu0 %v1819, 32
        %v2032 = vpop.permute.xlu0 %2031
        %2033 = vrot.lane.b32.xlu0 %v1820, 32
        %v2034 = vpop.permute.xlu0 %2033
        %2035 = vrot.lane.b32.xlu0 %v1821, 32
        %v2036 = vpop.permute.xlu0 %2035
        %2037 = vrot.lane.b32.xlu0 %v1822, 32
        %v2038 = vpop.permute.xlu0 %2037
        %2039 = vrot.lane.b32.xlu0 %v1823, 32
        %v2040 = vpop.permute.xlu0 %2039
        %2041 = vrot.lane.b32.xlu0 %v1824, 32
        %v2042 = vpop.permute.xlu0 %2041
        %2059 = vrot.lane.b32.xlu0 %v1977, 64
        %v2060 = vpop.permute.xlu0 %2059
        %2061 = vrot.lane.b32.xlu0 %v1978, 64
        %v2062 = vpop.permute.xlu0 %2061
        %2063 = vrot.lane.b32.xlu0 %v1979, 64
        %v2064 = vpop.permute.xlu0 %2063
        %2065 = vrot.lane.b32.xlu0 %v1980, 64
        %v2066 = vpop.permute.xlu0 %2065
        %2067 = vrot.lane.b32.xlu0 %v1981, 64
        %v2068 = vpop.permute.xlu0 %2067
        %2069 = vrot.lane.b32.xlu0 %v1982, 64
        %v2070 = vpop.permute.xlu0 %2069
        %2071 = vrot.lane.b32.xlu0 %v1983, 64
        %v2072 = vpop.permute.xlu0 %2071
        %2073 = vrot.lane.b32.xlu0 %v1984, 64
        %v2074 = vpop.permute.xlu0 %2073
        %2075 = vrot.lane.b32.xlu0 %v1985, 64
        %v2076 = vpop.permute.xlu0 %2075
        %2077 = vrot.lane.b32.xlu0 %v1986, 64
        %v2078 = vpop.permute.xlu0 %2077
        %2079 = vrot.lane.b32.xlu0 %v1987, 64
        %v2080 = vpop.permute.xlu0 %2079
        %2081 = vrot.lane.b32.xlu0 %v1988, 64
        %v2082 = vpop.permute.xlu0 %2081
        %2083 = vrot.lane.b32.xlu0 %v1989, 64
        %v2084 = vpop.permute.xlu0 %2083
        %2085 = vrot.lane.b32.xlu0 %v1990, 64
        %v2086 = vpop.permute.xlu0 %2085
        %2087 = vrot.lane.b32.xlu0 %v1991, 64
        %v2088 = vpop.permute.xlu0 %2087
        %2089 = vrot.lane.b32.xlu0 %v1992, 64
        %v2090 = vpop.permute.xlu0 %2089
        %2107 = vrot.lane.b32.xlu0 %v1793, 96
        %v2108 = vpop.permute.xlu0 %2107
        %2109 = vrot.lane.b32.xlu0 %v1794, 96
        %v2110 = vpop.permute.xlu0 %2109
        %2111 = vrot.lane.b32.xlu0 %v1795, 96
        %v2112 = vpop.permute.xlu0 %2111
        %2113 = vrot.lane.b32.xlu0 %v1796, 96
        %v2114 = vpop.permute.xlu0 %2113
        %2115 = vrot.lane.b32.xlu0 %v1797, 96
        %v2116 = vpop.permute.xlu0 %2115
        %2117 = vrot.lane.b32.xlu0 %v1798, 96
        %v2118 = vpop.permute.xlu0 %2117
        %2119 = vrot.lane.b32.xlu0 %v1799, 96
        %v2120 = vpop.permute.xlu0 %2119
        %2121 = vrot.lane.b32.xlu0 %v1800, 96
        %v2122 = vpop.permute.xlu0 %2121
        %2123 = vrot.lane.b32.xlu0 %v1801, 96
        %v2124 = vpop.permute.xlu0 %2123
        %2125 = vrot.lane.b32.xlu0 %v1802, 96
        %v2126 = vpop.permute.xlu0 %2125
        %2127 = vrot.lane.b32.xlu0 %v1803, 96
        %v2128 = vpop.permute.xlu0 %2127
        %2129 = vrot.lane.b32.xlu0 %v1804, 96
        %v2130 = vpop.permute.xlu0 %2129
        %2131 = vrot.lane.b32.xlu0 %v1805, 96
        %v2132 = vpop.permute.xlu0 %2131
        %2133 = vrot.lane.b32.xlu0 %v1806, 96
        %v2134 = vpop.permute.xlu0 %2133
        %2135 = vrot.lane.b32.xlu0 %v1807, 96
        %v2136 = vpop.permute.xlu0 %2135
        %2137 = vrot.lane.b32.xlu0 %v1808, 96
        %v2138 = vpop.permute.xlu0 %2137
        %2140 = vrot.lane.b32.xlu0 %v1978, 32
        %v2141 = vpop.permute.xlu0 %2140
        %2142 = vrot.lane.b32.xlu0 %v1979, 32
        %v2143 = vpop.permute.xlu0 %2142
        %2144 = vrot.lane.b32.xlu0 %v1980, 32
        %v2145 = vpop.permute.xlu0 %2144
        %2146 = vrot.lane.b32.xlu0 %v1981, 32
        %v2147 = vpop.permute.xlu0 %2146
        %2148 = vrot.lane.b32.xlu0 %v1982, 32
        %v2149 = vpop.permute.xlu0 %2148
        %2150 = vrot.lane.b32.xlu0 %v1983, 32
        %v2151 = vpop.permute.xlu0 %2150
        %2152 = vrot.lane.b32.xlu0 %v1984, 32
        %v2153 = vpop.permute.xlu0 %2152
        %2154 = vrot.lane.b32.xlu0 %v1985, 32
        %v2155 = vpop.permute.xlu0 %2154
        %2156 = vrot.lane.b32.xlu0 %v1986, 32
        %v2157 = vpop.permute.xlu0 %2156
        %2158 = vrot.lane.b32.xlu0 %v1987, 32
        %v2159 = vpop.permute.xlu0 %2158
        %2160 = vrot.lane.b32.xlu0 %v1988, 32
        %v2161 = vpop.permute.xlu0 %2160
        %2162 = vrot.lane.b32.xlu0 %v1989, 32
        %v2163 = vpop.permute.xlu0 %2162
        %2164 = vrot.lane.b32.xlu0 %v1990, 32
        %v2165 = vpop.permute.xlu0 %2164
        %2166 = vrot.lane.b32.xlu0 %v1991, 32
        %v2167 = vpop.permute.xlu0 %2166
        %2168 = vrot.lane.b32.xlu0 %v1992, 32
        %v2169 = vpop.permute.xlu0 %2168
        %2170 = vrot.lane.b32.xlu0 %v1993, 32
        %v2171 = vpop.permute.xlu0 %2170
        %2173 = vrot.lane.b32.xlu0 %v1794, 64
        %v2174 = vpop.permute.xlu0 %2173
        %2175 = vrot.lane.b32.xlu0 %v1795, 64
        %v2176 = vpop.permute.xlu0 %2175
        %2177 = vrot.lane.b32.xlu0 %v1796, 64
        %v2178 = vpop.permute.xlu0 %2177
        %2179 = vrot.lane.b32.xlu0 %v1797, 64
        %v2180 = vpop.permute.xlu0 %2179
        %2181 = vrot.lane.b32.xlu0 %v1798, 64
        %v2182 = vpop.permute.xlu0 %2181
        %2183 = vrot.lane.b32.xlu0 %v1799, 64
        %v2184 = vpop.permute.xlu0 %2183
        %2185 = vrot.lane.b32.xlu0 %v1800, 64
        %v2186 = vpop.permute.xlu0 %2185
        %2187 = vrot.lane.b32.xlu0 %v1801, 64
        %v2188 = vpop.permute.xlu0 %2187
        %2189 = vrot.lane.b32.xlu0 %v1802, 64
        %v2190 = vpop.permute.xlu0 %2189
        %2191 = vrot.lane.b32.xlu0 %v1803, 64
        %v2192 = vpop.permute.xlu0 %2191
        %2193 = vrot.lane.b32.xlu0 %v1804, 64
        %v2194 = vpop.permute.xlu0 %2193
        %2195 = vrot.lane.b32.xlu0 %v1805, 64
        %v2196 = vpop.permute.xlu0 %2195
        %2197 = vrot.lane.b32.xlu0 %v1806, 64
        %v2198 = vpop.permute.xlu0 %2197
        %2199 = vrot.lane.b32.xlu0 %v1807, 64
        %v2200 = vpop.permute.xlu0 %2199
        %2201 = vrot.lane.b32.xlu0 %v1808, 64
        %v2202 = vpop.permute.xlu0 %2201
        %2203 = vrot.lane.b32.xlu0 %v1809, 64
        %v2204 = vpop.permute.xlu0 %2203
        %2206 = vrot.lane.b32.xlu0 %v1811, 96
        %v2207 = vpop.permute.xlu0 %2206
        %2208 = vrot.lane.b32.xlu0 %v1812, 96
        %v2209 = vpop.permute.xlu0 %2208
        %2210 = vrot.lane.b32.xlu0 %v1813, 96
        %v2211 = vpop.permute.xlu0 %2210
        %2212 = vrot.lane.b32.xlu0 %v1814, 96
        %v2213 = vpop.permute.xlu0 %2212
        %2214 = vrot.lane.b32.xlu0 %v1815, 96
        %v2215 = vpop.permute.xlu0 %2214
        %2216 = vrot.lane.b32.xlu0 %v1816, 96
        %v2217 = vpop.permute.xlu0 %2216
        %2218 = vrot.lane.b32.xlu0 %v1817, 96
        %v2219 = vpop.permute.xlu0 %2218
        %2220 = vrot.lane.b32.xlu0 %v1818, 96
        %v2221 = vpop.permute.xlu0 %2220
        %2222 = vrot.lane.b32.xlu0 %v1819, 96
        %v2223 = vpop.permute.xlu0 %2222
        %2224 = vrot.lane.b32.xlu0 %v1820, 96
        %v2225 = vpop.permute.xlu0 %2224
        %2226 = vrot.lane.b32.xlu0 %v1821, 96
        %v2227 = vpop.permute.xlu0 %2226
        %2228 = vrot.lane.b32.xlu0 %v1822, 96
        %v2229 = vpop.permute.xlu0 %2228
        %2230 = vrot.lane.b32.xlu0 %v1823, 96
        %v2231 = vpop.permute.xlu0 %2230
        %2232 = vrot.lane.b32.xlu0 %v1824, 96
        %v2233 = vpop.permute.xlu0 %2232
        %2234 = vrot.lane.b32.xlu0 %v1825, 96
        %v2235 = vpop.permute.xlu0 %2234
        %2236 = vrot.lane.b32.xlu0 %v1593, 96
        %v2237 = vpop.permute.xlu0 %2236
        %vm2238 = vcmask 261120
        %v2241 = vsel %vm2238, %v1792, %v2012
        %v2244 = vsel %vm2238, %v1793, %v2014
        %v2247 = vsel %vm2238, %v1794, %v2016
        %v2250 = vsel %vm2238, %v1795, %v2018
        %v2253 = vsel %vm2238, %v1796, %v2020
        %v2256 = vsel %vm2238, %v1797, %v2022
        %v2259 = vsel %vm2238, %v1798, %v2024
        %v2262 = vsel %vm2238, %v1799, %v2026
        %v2265 = vsel %vm2238, %v1800, %v2028
        %v2268 = vsel %vm2238, %v1801, %v2030
        %v2271 = vsel %vm2238, %v1802, %v2032
        %v2274 = vsel %vm2238, %v1803, %v2034
        %v2277 = vsel %vm2238, %v1804, %v2036
        %v2280 = vsel %vm2238, %v1805, %v2038
        %v2283 = vsel %vm2238, %v1806, %v2040
        %v2286 = vsel %vm2238, %v1807, %v2042
        %vm2287 = vcmask 523264
        %v2289 = vsel %vm2287, %v2241, %v2060
        %v2291 = vsel %vm2287, %v2244, %v2062
        %v2293 = vsel %vm2287, %v2247, %v2064
        %v2295 = vsel %vm2287, %v2250, %v2066
        %v2297 = vsel %vm2287, %v2253, %v2068
        %v2299 = vsel %vm2287, %v2256, %v2070
        %v2301 = vsel %vm2287, %v2259, %v2072
        %v2303 = vsel %vm2287, %v2262, %v2074
        %v2305 = vsel %vm2287, %v2265, %v2076
        %v2307 = vsel %vm2287, %v2268, %v2078
        %v2309 = vsel %vm2287, %v2271, %v2080
        %v2311 = vsel %vm2287, %v2274, %v2082
        %v2313 = vsel %vm2287, %v2277, %v2084
        %v2315 = vsel %vm2287, %v2280, %v2086
        %v2317 = vsel %vm2287, %v2283, %v2088
        %v2319 = vsel %vm2287, %v2286, %v2090
        %vm2320 = vcmask 785408
        %v2322 = vsel %vm2320, %v2289, %v2108
        %v2325 = vsel %vm2320, %v2291, %v2110
        %v2328 = vsel %vm2320, %v2293, %v2112
        %v2331 = vsel %vm2320, %v2295, %v2114
        %v2334 = vsel %vm2320, %v2297, %v2116
        %v2337 = vsel %vm2320, %v2299, %v2118
        %v2340 = vsel %vm2320, %v2301, %v2120
        %v2343 = vsel %vm2320, %v2303, %v2122
        %v2346 = vsel %vm2320, %v2305, %v2124
        %v2349 = vsel %vm2320, %v2307, %v2126
        %v2352 = vsel %vm2320, %v2309, %v2128
        %v2355 = vsel %vm2320, %v2311, %v2130
        %v2358 = vsel %vm2320, %v2313, %v2132
        %v2361 = vsel %vm2320, %v2315, %v2134
        %v2364 = vsel %vm2320, %v2317, %v2136
        %v2367 = vsel %vm2320, %v2319, %v2138
        %v2370 = vsel %vm2238, %v1810, %v2141
        %v2372 = vsel %vm2238, %v1811, %v2143
        %v2374 = vsel %vm2238, %v1812, %v2145
        %v2376 = vsel %vm2238, %v1813, %v2147
        %v2378 = vsel %vm2238, %v1814, %v2149
        %v2380 = vsel %vm2238, %v1815, %v2151
        %v2382 = vsel %vm2238, %v1816, %v2153
        %v2384 = vsel %vm2238, %v1817, %v2155
        %v2386 = vsel %vm2238, %v1818, %v2157
        %v2388 = vsel %vm2238, %v1819, %v2159
        %v2390 = vsel %vm2238, %v1820, %v2161
        %v2392 = vsel %vm2238, %v1821, %v2163
        %v2394 = vsel %vm2238, %v1822, %v2165
        %v2396 = vsel %vm2238, %v1823, %v2167
        %v2398 = vsel %vm2238, %v1824, %v2169
        %v2400 = vsel %vm2238, %v1825, %v2171
        %v2402 = vsel %vm2287, %v2370, %v2174
        %v2404 = vsel %vm2287, %v2372, %v2176
        %v2406 = vsel %vm2287, %v2374, %v2178
        %v2408 = vsel %vm2287, %v2376, %v2180
        %v2410 = vsel %vm2287, %v2378, %v2182
        %v2412 = vsel %vm2287, %v2380, %v2184
        %v2414 = vsel %vm2287, %v2382, %v2186
        %v2416 = vsel %vm2287, %v2384, %v2188
        %v2418 = vsel %vm2287, %v2386, %v2190
        %v2420 = vsel %vm2287, %v2388, %v2192
        %v2422 = vsel %vm2287, %v2390, %v2194
        %v2424 = vsel %vm2287, %v2392, %v2196
        %v2426 = vsel %vm2287, %v2394, %v2198
        %v2428 = vsel %vm2287, %v2396, %v2200
        %v2430 = vsel %vm2287, %v2398, %v2202
        %v2432 = vsel %vm2287, %v2400, %v2204
        %v2434 = vsel %vm2320, %v2402, %v2207
        %v2437 = vsel %vm2320, %v2404, %v2209
        %v2440 = vsel %vm2320, %v2406, %v2211
        %v2443 = vsel %vm2320, %v2408, %v2213
        %v2446 = vsel %vm2320, %v2410, %v2215
        %v2449 = vsel %vm2320, %v2412, %v2217
        %v2452 = vsel %vm2320, %v2414, %v2219
        %v2455 = vsel %vm2320, %v2416, %v2221
        %v2458 = vsel %vm2320, %v2418, %v2223
        %v2461 = vsel %vm2320, %v2420, %v2225
        %v2464 = vsel %vm2320, %v2422, %v2227
        %v2467 = vsel %vm2320, %v2424, %v2229
        %v2470 = vsel %vm2320, %v2426, %v2231
        %v2473 = vsel %vm2320, %v2428, %v2233
        %v2476 = vsel %vm2320, %v2430, %v2235
        %v2479 = vsel %vm2320, %v2432, %v2237
        %v2481 = vld [vmem:[#allocation9] sm:$0xf]
        %v2482 = vld [vmem:[#allocation9 + $0x4] sm:$0xf]
        %v2483 = vld [vmem:[#allocation9 + $0x8] sm:$0xf]
        %v2484 = vld [vmem:[#allocation9 + $0xc] sm:$0xf]
        %v2485 = vld [vmem:[#allocation9 + $0x10] sm:$0xf]
        %v2486 = vld [vmem:[#allocation9 + $0x14] sm:$0xf]
        %v2487 = vld [vmem:[#allocation9 + $0x18] sm:$0xf]
        %v2488 = vld [vmem:[#allocation9 + $0x1c] sm:$0xf]
        %v2489 = vld [vmem:[#allocation9 + $0x20] sm:$0xf]
        %v2490 = vld [vmem:[#allocation9 + $0x24] sm:$0xf]
        %v2491 = vld [vmem:[#allocation9 + $0x28] sm:$0xf]
        %v2492 = vld [vmem:[#allocation9 + $0x2c] sm:$0xf]
        %v2493 = vld [vmem:[#allocation9 + $0x30] sm:$0xf]
        %v2494 = vld [vmem:[#allocation9 + $0x34] sm:$0xf]
        %v2495 = vld [vmem:[#allocation9 + $0x38] sm:$0xf]
        %v2496 = vld [vmem:[#allocation9 + $0x3c] sm:$0xf]
        %v2497 = vld [vmem:[#allocation9 + $0x40] sm:$0xf]
        %v2498 = vld [vmem:[#allocation9 + $0x44] sm:$0xf]
        %v2499 = vld [vmem:[#allocation9 + $0x48] sm:$0xf]
        %v2500 = vld [vmem:[#allocation9 + $0x4c] sm:$0xf]
        %v2501 = vld [vmem:[#allocation9 + $0x50] sm:$0xf]
        %v2502 = vld [vmem:[#allocation9 + $0x54] sm:$0xf]
        %v2503 = vld [vmem:[#allocation9 + $0x58] sm:$0xf]
        %v2504 = vld [vmem:[#allocation9 + $0x5c] sm:$0xf]
        %v2505 = vld [vmem:[#allocation9 + $0x60] sm:$0xf]
        %v2506 = vld [vmem:[#allocation9 + $0x64] sm:$0xf]
        %v2507 = vld [vmem:[#allocation9 + $0x68] sm:$0xf]
        %v2508 = vld [vmem:[#allocation9 + $0x6c] sm:$0xf]
        %v2509 = vld [vmem:[#allocation9 + $0x70] sm:$0xf]
        %v2510 = vld [vmem:[#allocation9 + $0x74] sm:$0xf]
        %v2511 = vld [vmem:[#allocation9 + $0x78] sm:$0xf]
        %v2512 = vld [vmem:[#allocation9 + $0x7c] sm:$0xf]
        %v2513 = vld [vmem:[#allocation9 + $0x80] sm:$0xf]
        %v2514 = vld [vmem:[#allocation9 + $0x84] sm:$0xf]
        %v2515 = vld [vmem:[#allocation9 + $0x88] sm:$0xf]
        %v2516 = vld [vmem:[#allocation9 + $0x8c] sm:$0xf]
        %v2553 = vunpack.c.l.b16 %v2481
        %v2554 = vunpack.c.l.b16 %v2482
        %v2555 = vunpack.c.l.b16 %v2483
        %v2556 = vunpack.c.l.b16 %v2484
        %v2557 = vunpack.c.l.b16 %v2485
        %v2558 = vunpack.c.l.b16 %v2486
        %v2559 = vunpack.c.l.b16 %v2487
        %v2560 = vunpack.c.l.b16 %v2488
        %v2561 = vunpack.c.l.b16 %v2489
        %v2562 = vunpack.c.l.b16 %v2490
        %v2563 = vunpack.c.l.b16 %v2491
        %v2564 = vunpack.c.l.b16 %v2492
        %v2565 = vunpack.c.l.b16 %v2493
        %v2566 = vunpack.c.l.b16 %v2494
        %v2567 = vunpack.c.l.b16 %v2495
        %v2568 = vunpack.c.l.b16 %v2496
        %v2569 = vunpack.c.l.b16 %v2497
        %v2570 = vunpack.c.l.b16 %v2498
        %v2571 = vunpack.c.l.b16 %v2499
        %v2572 = vunpack.c.l.b16 %v2500
        %v2573 = vunpack.c.l.b16 %v2501
        %v2574 = vunpack.c.l.b16 %v2502
        %v2575 = vunpack.c.l.b16 %v2503
        %v2576 = vunpack.c.l.b16 %v2504
        %v2577 = vunpack.c.l.b16 %v2505
        %v2578 = vunpack.c.l.b16 %v2506
        %v2579 = vunpack.c.l.b16 %v2507
        %v2580 = vunpack.c.l.b16 %v2508
        %v2581 = vunpack.c.l.b16 %v2509
        %v2582 = vunpack.c.l.b16 %v2510
        %v2583 = vunpack.c.l.b16 %v2511
        %v2584 = vunpack.c.l.b16 %v2512
        %v2585 = vunpack.c.l.b16 %v2513
        %v2586 = vunpack.c.l.b16 %v2514
        %v2587 = vunpack.c.l.b16 %v2515
        %v2588 = vunpack.c.l.b16 %v2516
        %v2589 = vpack.c.b16 %v2554, %v2553
        %v2590 = vpack.c.b16 %v2556, %v2555
        %v2591 = vpack.c.b16 %v2558, %v2557
        %v2592 = vpack.c.b16 %v2560, %v2559
        %v2593 = vpack.c.b16 %v2562, %v2561
        %v2594 = vpack.c.b16 %v2564, %v2563
        %v2595 = vpack.c.b16 %v2566, %v2565
        %v2596 = vpack.c.b16 %v2568, %v2567
        %v2597 = vpack.c.b16 %v2570, %v2569
        %v2598 = vpack.c.b16 %v2572, %v2571
        %v2599 = vpack.c.b16 %v2574, %v2573
        %v2600 = vpack.c.b16 %v2576, %v2575
        %v2601 = vpack.c.b16 %v2578, %v2577
        %v2602 = vpack.c.b16 %v2580, %v2579
        %v2603 = vpack.c.b16 %v2582, %v2581
        %v2604 = vpack.c.b16 %v2584, %v2583
        %v2605 = vpack.c.b16 %v2586, %v2585
        %v2606 = vpack.c.b16 %v2588, %v2587
        %v2626 = vsel %vm2238, %v1979, 0
        %v2629 = vsel %vm2238, %v1980, 0
        %v2632 = vsel %vm2238, %v1981, 0
        %v2635 = vsel %vm2238, %v1982, 0
        %v2638 = vsel %vm2238, %v1983, 0
        %v2641 = vsel %vm2238, %v1984, 0
        %v2644 = vsel %vm2238, %v1985, 0
        %v2647 = vsel %vm2238, %v1986, 0
        %v2650 = vsel %vm2238, %v1987, 0
        %v2653 = vsel %vm2238, %v1988, 0
        %v2656 = vsel %vm2238, %v1989, 0
        %v2659 = vsel %vm2238, %v1990, 0
        %v2662 = vsel %vm2238, %v1991, 0
        %v2665 = vsel %vm2238, %v1992, 0
        %v2668 = vsel %vm2238, %v1993, 0
        %v2671 = vsel %vm2238, %v1994, 0
        %2673 = vmatprep.subr.bf16.mxu0 0
        %2674 = vmatpush1.bf16.msra.mxu0 %v2589
        %2675 = vmatprep.subr.bf16.mxu0 0
        %2676 = vmatpush1.bf16.msra.mxu0 %v2590
        %2677 = vmatprep.subr.bf16.mxu0 0
        %2678 = vmatpush1.bf16.msra.mxu0 %v2591
        %2679 = vmatprep.subr.bf16.mxu0 0
        %2680 = vmatpush1.bf16.msra.mxu0 %v2592
        %2681 = vmatprep.subr.bf16.mxu0 0
        %2682 = vmatpush1.bf16.msra.mxu0 %v2593
        %2683 = vmatprep.subr.bf16.mxu0 0
        %2684 = vmatpush1.bf16.msra.mxu0 %v2594
        %2685 = vmatprep.subr.bf16.mxu0 0
        %2686 = vmatpush1.bf16.msra.mxu0 %v2595
        %2687 = vmatprep.subr.bf16.mxu0 0
        %2688 = vmatpush1.bf16.msra.mxu0 %v2596
        %2689 = vmatprep.subr.bf16.mxu0 0
        %2690 = vmatpush1.bf16.msra.mxu0 %v2597
        %2691 = vmatprep.subr.bf16.mxu0 0
        %2692 = vmatpush1.bf16.msra.mxu0 %v2598
        %2693 = vmatprep.subr.bf16.mxu0 0
        %2694 = vmatpush1.bf16.msra.mxu0 %v2599
        %2695 = vmatprep.subr.bf16.mxu0 0
        %2696 = vmatpush1.bf16.msra.mxu0 %v2600
        %2697 = vmatprep.subr.bf16.mxu0 0
        %2698 = vmatpush1.bf16.msra.mxu0 %v2601
        %2699 = vmatprep.subr.bf16.mxu0 0
        %2700 = vmatpush1.bf16.msra.mxu0 %v2602
        %2701 = vmatprep.subr.bf16.mxu0 0
        %2702 = vmatpush1.bf16.msra.mxu0 %v2603
        %2703 = vmatprep.subr.bf16.mxu0 0
        %2704 = vmatpush1.bf16.msra.mxu0 %v2604
        %2705 = vmatprep.mubr.bf16.mxu0 %v2434
        %2706 = vmatmul.mubr.bf16.gmra.mrb[0].mxu0 %v2322
        %v2707 = vpop.f32.mrb[0].mxu0
        %v2708 = vadd.f32 0.0, %v2707
        %v2709 = vpop.f32.mrb[0].mxu0
        %v2710 = vpop.f32.mrb[0].mxu0
        %v2711 = vadd.f32 0.0, %v2710
        %v2712 = vpop.f32.mrb[0].mxu0
        %2713 = vmatprep.mubr.bf16.mxu0 %v2437
        %2714 = vmatmul.mubr.bf16.gmra.mrb[0].mxu0 %v2325
        %v2715 = vpop.f32.mrb[0].mxu0
        %v2716 = vadd.f32 0.0, %v2715
        %v2717 = vpop.f32.mrb[0].mxu0
        %v2718 = vpop.f32.mrb[0].mxu0
        %v2719 = vadd.f32 0.0, %v2718
        %v2720 = vpop.f32.mrb[0].mxu0
        %2721 = vmatprep.mubr.bf16.mxu0 %v2440
        %2722 = vmatmul.mubr.bf16.gmra.mrb[0].mxu0 %v2328
        %v2723 = vpop.f32.mrb[0].mxu0
        %v2724 = vadd.f32 0.0, %v2723
        %v2725 = vpop.f32.mrb[0].mxu0
        %v2726 = vpop.f32.mrb[0].mxu0
        %v2727 = vadd.f32 0.0, %v2726
        %v2728 = vpop.f32.mrb[0].mxu0
        %2729 = vmatprep.mubr.bf16.mxu0 %v2443
        %2730 = vmatmul.mubr.bf16.gmra.mrb[0].mxu0 %v2331
        %v2731 = vpop.f32.mrb[0].mxu0
        %v2732 = vadd.f32 0.0, %v2731
        %v2733 = vpop.f32.mrb[0].mxu0
        %v2734 = vpop.f32.mrb[0].mxu0
        %v2735 = vadd.f32 0.0, %v2734
        %v2736 = vpop.f32.mrb[0].mxu0
        %2737 = vmatprep.mubr.bf16.mxu0 %v2446
        %2738 = vmatmul.mubr.bf16.gmra.mrb[0].mxu0 %v2334
        %v2739 = vpop.f32.mrb[0].mxu0
        %v2740 = vadd.f32 0.0, %v2739
        %v2741 = vpop.f32.mrb[0].mxu0
        %v2742 = vpop.f32.mrb[0].mxu0
        %v2743 = vadd.f32 0.0, %v2742
        %v2744 = vpop.f32.mrb[0].mxu0
        %2745 = vmatprep.mubr.bf16.mxu0 %v2449
        %2746 = vmatmul.mubr.bf16.gmra.mrb[0].mxu0 %v2337
        %v2747 = vpop.f32.mrb[0].mxu0
        %v2748 = vadd.f32 0.0, %v2747
        %v2749 = vpop.f32.mrb[0].mxu0
        %v2750 = vpop.f32.mrb[0].mxu0
        %v2751 = vadd.f32 0.0, %v2750
        %v2752 = vpop.f32.mrb[0].mxu0
        %2753 = vmatprep.mubr.bf16.mxu0 %v2452
        %2754 = vmatmul.mubr.bf16.gmra.mrb[0].mxu0 %v2340
        %v2755 = vpop.f32.mrb[0].mxu0
        %v2756 = vadd.f32 0.0, %v2755
        %v2757 = vpop.f32.mrb[0].mxu0
        %v2758 = vpop.f32.mrb[0].mxu0
        %v2759 = vadd.f32 0.0, %v2758
        %v2760 = vpop.f32.mrb[0].mxu0
        %2761 = vmatprep.mubr.bf16.mxu0 %v2455
        %2762 = vmatmul.mubr.bf16.gmra.mrb[0].mxu0 %v2343
        %v2763 = vpop.f32.mrb[0].mxu0
        %v2764 = vadd.f32 0.0, %v2763
        %v2765 = vpop.f32.mrb[0].mxu0
        %v2766 = vpop.f32.mrb[0].mxu0
        %v2767 = vadd.f32 0.0, %v2766
        %v2768 = vpop.f32.mrb[0].mxu0
        %2769 = vmatprep.mubr.bf16.mxu0 %v2458
        %2770 = vmatmul.mubr.bf16.gmra.mrb[0].mxu0 %v2346
        %v2771 = vpop.f32.mrb[0].mxu0
        %v2772 = vadd.f32 0.0, %v2771
        %v2773 = vpop.f32.mrb[0].mxu0
        %v2774 = vpop.f32.mrb[0].mxu0
        %v2775 = vadd.f32 0.0, %v2774
        %v2776 = vpop.f32.mrb[0].mxu0
        %2777 = vmatprep.mubr.bf16.mxu0 %v2461
        %2778 = vmatmul.mubr.bf16.gmra.mrb[0].mxu0 %v2349
        %v2779 = vpop.f32.mrb[0].mxu0
        %v2780 = vadd.f32 0.0, %v2779
        %v2781 = vpop.f32.mrb[0].mxu0
        %v2782 = vpop.f32.mrb[0].mxu0
        %v2783 = vadd.f32 0.0, %v2782
        %v2784 = vpop.f32.mrb[0].mxu0
        %2785 = vmatprep.mubr.bf16.mxu0 %v2464
        %2786 = vmatmul.mubr.bf16.gmra.mrb[0].mxu0 %v2352
        %v2787 = vpop.f32.mrb[0].mxu0
        %v2788 = vadd.f32 0.0, %v2787
        %v2789 = vpop.f32.mrb[0].mxu0
        %v2790 = vpop.f32.mrb[0].mxu0
        %v2791 = vadd.f32 0.0, %v2790
        %v2792 = vpop.f32.mrb[0].mxu0
        %2793 = vmatprep.mubr.bf16.mxu0 %v2467
        %2794 = vmatmul.mubr.bf16.gmra.mrb[0].mxu0 %v2355
        %v2795 = vpop.f32.mrb[0].mxu0
        %v2796 = vadd.f32 0.0, %v2795
        %v2797 = vpop.f32.mrb[0].mxu0
        %v2798 = vpop.f32.mrb[0].mxu0
        %v2799 = vadd.f32 0.0, %v2798
        %v2800 = vpop.f32.mrb[0].mxu0
        %2801 = vmatprep.mubr.bf16.mxu0 %v2470
        %2802 = vmatmul.mubr.bf16.gmra.mrb[0].mxu0 %v2358
        %v2803 = vpop.f32.mrb[0].mxu0
        %v2804 = vadd.f32 0.0, %v2803
        %v2805 = vpop.f32.mrb[0].mxu0
        %v2806 = vpop.f32.mrb[0].mxu0
        %v2807 = vadd.f32 0.0, %v2806
        %v2808 = vpop.f32.mrb[0].mxu0
        %2809 = vmatprep.mubr.bf16.mxu0 %v2473
        %2810 = vmatmul.mubr.bf16.gmra.mrb[0].mxu0 %v2361
        %v2811 = vpop.f32.mrb[0].mxu0
        %v2812 = vadd.f32 0.0, %v2811
        %v2813 = vpop.f32.mrb[0].mxu0
        %v2814 = vpop.f32.mrb[0].mxu0
        %v2815 = vadd.f32 0.0, %v2814
        %v2816 = vpop.f32.mrb[0].mxu0
        %2817 = vmatprep.mubr.bf16.mxu0 %v2476
        %2818 = vmatmul.mubr.bf16.gmra.mrb[0].mxu0 %v2364
        %v2819 = vpop.f32.mrb[0].mxu0
        %v2820 = vadd.f32 0.0, %v2819
        %v2821 = vpop.f32.mrb[0].mxu0
        %v2822 = vpop.f32.mrb[0].mxu0
        %v2823 = vadd.f32 0.0, %v2822
        %v2824 = vpop.f32.mrb[0].mxu0
        %2825 = vmatprep.mubr.bf16.mxu0 %v2479
        %2826 = vmatmul.mubr.bf16.gmra.mrb[0].mxu0 %v2367
        %v2827 = vpop.f32.mrb[0].mxu0
        %v2828 = vadd.f32 0.0, %v2827
        %v2829 = vpop.f32.mrb[0].mxu0
        %v2830 = vpop.f32.mrb[0].mxu0
        %v2831 = vadd.f32 0.0, %v2830
        %v2832 = vpop.f32.mrb[0].mxu0
        %2833 = vdwg.mxu0
        %2834 = vmatprep.subr.bf16.mxu0 0
        %2835 = vmatpush1.bf16.msra.mxu0 %v2605
        %2836 = vmatprep.subr.bf16.mxu0 0
        %2837 = vmatpush1.bf16.msra.mxu0 %v2606
        %2838 = vmatprep.subr.bf16.mxu0 0
        %2839 = vmatpush1.bf16.msra.mxu0 0
        %2840 = vmatprep.subr.bf16.mxu0 0
        %2841 = vmatpush1.bf16.msra.mxu0 0
        %2842 = vmatprep.subr.bf16.mxu0 0
        %2843 = vmatpush1.bf16.msra.mxu0 0
        %2844 = vmatprep.subr.bf16.mxu0 0
        %2845 = vmatpush1.bf16.msra.mxu0 0
        %2846 = vmatprep.subr.bf16.mxu0 0
        %2847 = vmatpush1.bf16.msra.mxu0 0
        %2848 = vmatprep.subr.bf16.mxu0 0
        %2849 = vmatpush1.bf16.msra.mxu0 0
        %2850 = vmatprep.subr.bf16.mxu0 0
        %2851 = vmatpush1.bf16.msra.mxu0 0
        %2852 = vmatprep.subr.bf16.mxu0 0
        %2853 = vmatpush1.bf16.msra.mxu0 0
        %2854 = vmatprep.subr.bf16.mxu0 0
        %2855 = vmatpush1.bf16.msra.mxu0 0
        %2856 = vmatprep.subr.bf16.mxu0 0
        %2857 = vmatpush1.bf16.msra.mxu0 0
        %2858 = vmatprep.subr.bf16.mxu0 0
        %2859 = vmatpush1.bf16.msra.mxu0 0
        %2860 = vmatprep.subr.bf16.mxu0 0
        %2861 = vmatpush1.bf16.msra.mxu0 0
        %2862 = vmatprep.subr.bf16.mxu0 0
        %2863 = vmatpush1.bf16.msra.mxu0 0
        %2864 = vmatprep.subr.bf16.mxu0 0
        %2865 = vmatpush1.bf16.msra.mxu0 0
        %2866 = vmatprep.mubr.bf16.mxu0 0
        %2867 = vmatmul.mubr.bf16.gmra.mrb[0].mxu0 %v2626
        %v2868 = vpop.f32.mrb[0].mxu0
        %v2869 = vadd.f32 %v2708, %v2868
        %v2870 = vpop.f32.mrb[0].mxu0
        %v2871 = vpop.f32.mrb[0].mxu0
        %v2872 = vadd.f32 %v2711, %v2871
        %v2873 = vpop.f32.mrb[0].mxu0
        %2874 = vmatprep.mubr.bf16.mxu0 0
        %2875 = vmatmul.mubr.bf16.gmra.mrb[0].mxu0 %v2629
        %v2876 = vpop.f32.mrb[0].mxu0
        %v2877 = vadd.f32 %v2716, %v2876
        %v2878 = vpop.f32.mrb[0].mxu0
        %v2879 = vpop.f32.mrb[0].mxu0
        %v2880 = vadd.f32 %v2719, %v2879
        %v2881 = vpop.f32.mrb[0].mxu0
        %2882 = vmatprep.mubr.bf16.mxu0 0
        %2883 = vmatmul.mubr.bf16.gmra.mrb[0].mxu0 %v2632
        %v2884 = vpop.f32.mrb[0].mxu0
        %v2885 = vadd.f32 %v2724, %v2884
        %v2886 = vpop.f32.mrb[0].mxu0
        %v2887 = vpop.f32.mrb[0].mxu0
        %v2888 = vadd.f32 %v2727, %v2887
        %v2889 = vpop.f32.mrb[0].mxu0
        %2890 = vmatprep.mubr.bf16.mxu0 0
        %2891 = vmatmul.mubr.bf16.gmra.mrb[0].mxu0 %v2635
        %v2892 = vpop.f32.mrb[0].mxu0
        %v2893 = vadd.f32 %v2732, %v2892
        %v2894 = vpop.f32.mrb[0].mxu0
        %v2895 = vpop.f32.mrb[0].mxu0
        %v2896 = vadd.f32 %v2735, %v2895
        %v2897 = vpop.f32.mrb[0].mxu0
        %2898 = vmatprep.mubr.bf16.mxu0 0
        %2899 = vmatmul.mubr.bf16.gmra.mrb[0].mxu0 %v2638
        %v2900 = vpop.f32.mrb[0].mxu0
        %v2901 = vadd.f32 %v2740, %v2900
        %v2902 = vpop.f32.mrb[0].mxu0
        %v2903 = vpop.f32.mrb[0].mxu0
        %v2904 = vadd.f32 %v2743, %v2903
        %v2905 = vpop.f32.mrb[0].mxu0
        %2906 = vmatprep.mubr.bf16.mxu0 0
        %2907 = vmatmul.mubr.bf16.gmra.mrb[0].mxu0 %v2641
        %v2908 = vpop.f32.mrb[0].mxu0
        %v2909 = vadd.f32 %v2748, %v2908
        %v2910 = vpop.f32.mrb[0].mxu0
        %v2911 = vpop.f32.mrb[0].mxu0
        %v2912 = vadd.f32 %v2751, %v2911
        %v2913 = vpop.f32.mrb[0].mxu0
        %2914 = vmatprep.mubr.bf16.mxu0 0
        %2915 = vmatmul.mubr.bf16.gmra.mrb[0].mxu0 %v2644
        %v2916 = vpop.f32.mrb[0].mxu0
        %v2917 = vadd.f32 %v2756, %v2916
        %v2918 = vpop.f32.mrb[0].mxu0
        %v2919 = vpop.f32.mrb[0].mxu0
        %v2920 = vadd.f32 %v2759, %v2919
        %v2921 = vpop.f32.mrb[0].mxu0
        %2922 = vmatprep.mubr.bf16.mxu0 0
        %2923 = vmatmul.mubr.bf16.gmra.mrb[0].mxu0 %v2647
        %v2924 = vpop.f32.mrb[0].mxu0
        %v2925 = vadd.f32 %v2764, %v2924
        %v2926 = vpop.f32.mrb[0].mxu0
        %v2927 = vpop.f32.mrb[0].mxu0
        %v2928 = vadd.f32 %v2767, %v2927
        %v2929 = vpop.f32.mrb[0].mxu0
        %2930 = vmatprep.mubr.bf16.mxu0 0
        %2931 = vmatmul.mubr.bf16.gmra.mrb[0].mxu0 %v2650
        %v2932 = vpop.f32.mrb[0].mxu0
        %v2933 = vadd.f32 %v2772, %v2932
        %v2934 = vpop.f32.mrb[0].mxu0
        %v2935 = vpop.f32.mrb[0].mxu0
        %v2936 = vadd.f32 %v2775, %v2935
        %v2937 = vpop.f32.mrb[0].mxu0
        %2938 = vmatprep.mubr.bf16.mxu0 0
        %2939 = vmatmul.mubr.bf16.gmra.mrb[0].mxu0 %v2653
        %v2940 = vpop.f32.mrb[0].mxu0
        %v2941 = vadd.f32 %v2780, %v2940
        %v2942 = vpop.f32.mrb[0].mxu0
        %v2943 = vpop.f32.mrb[0].mxu0
        %v2944 = vadd.f32 %v2783, %v2943
        %v2945 = vpop.f32.mrb[0].mxu0
        %2946 = vmatprep.mubr.bf16.mxu0 0
        %2947 = vmatmul.mubr.bf16.gmra.mrb[0].mxu0 %v2656
        %v2948 = vpop.f32.mrb[0].mxu0
        %v2949 = vadd.f32 %v2788, %v2948
        %v2950 = vpop.f32.mrb[0].mxu0
        %v2951 = vpop.f32.mrb[0].mxu0
        %v2952 = vadd.f32 %v2791, %v2951
        %v2953 = vpop.f32.mrb[0].mxu0
        %2954 = vmatprep.mubr.bf16.mxu0 0
        %2955 = vmatmul.mubr.bf16.gmra.mrb[0].mxu0 %v2659
        %v2956 = vpop.f32.mrb[0].mxu0
        %v2957 = vadd.f32 %v2796, %v2956
        %v2958 = vpop.f32.mrb[0].mxu0
        %v2959 = vpop.f32.mrb[0].mxu0
        %v2960 = vadd.f32 %v2799, %v2959
        %v2961 = vpop.f32.mrb[0].mxu0
        %2962 = vmatprep.mubr.bf16.mxu0 0
        %2963 = vmatmul.mubr.bf16.gmra.mrb[0].mxu0 %v2662
        %v2964 = vpop.f32.mrb[0].mxu0
        %v2965 = vadd.f32 %v2804, %v2964
        %v2966 = vpop.f32.mrb[0].mxu0
        %v2967 = vpop.f32.mrb[0].mxu0
        %v2968 = vadd.f32 %v2807, %v2967
        %v2969 = vpop.f32.mrb[0].mxu0
        %2970 = vmatprep.mubr.bf16.mxu0 0
        %2971 = vmatmul.mubr.bf16.gmra.mrb[0].mxu0 %v2665
        %v2972 = vpop.f32.mrb[0].mxu0
        %v2973 = vadd.f32 %v2812, %v2972
        %v2974 = vpop.f32.mrb[0].mxu0
        %v2975 = vpop.f32.mrb[0].mxu0
        %v2976 = vadd.f32 %v2815, %v2975
        %v2977 = vpop.f32.mrb[0].mxu0
        %2978 = vmatprep.mubr.bf16.mxu0 0
        %2979 = vmatmul.mubr.bf16.gmra.mrb[0].mxu0 %v2668
        %v2980 = vpop.f32.mrb[0].mxu0
        %v2981 = vadd.f32 %v2820, %v2980
        %v2982 = vpop.f32.mrb[0].mxu0
        %v2983 = vpop.f32.mrb[0].mxu0
        %v2984 = vadd.f32 %v2823, %v2983
        %v2985 = vpop.f32.mrb[0].mxu0
        %2986 = vmatprep.mubr.bf16.mxu0 0
        %2987 = vmatmul.mubr.bf16.gmra.mrb[0].mxu0 %v2671
        %v2988 = vpop.f32.mrb[0].mxu0
        %v2989 = vadd.f32 %v2828, %v2988
        %v2990 = vpop.f32.mrb[0].mxu0
        %v2991 = vpop.f32.mrb[0].mxu0
        %v2992 = vadd.f32 %v2831, %v2991
        %v2993 = vpop.f32.mrb[0].mxu0
        %2994 = vdwg.mxu0
        %v2995 = vld [vmem:[#allocation11] sm:$0x1]
        %v2996 = vlaneseq
        %v2997 = vshrl.u32 %v2996, 7
        %v2998 = vsub.s32 0, %v2997
        %v2999 = vrot.slane %v2995, %v2998
        %v3000 = vmul.f32 %v2869, %v2999
        %v3001 = vmul.f32 %v2872, %v2999
        %v3002 = vmul.f32 %v2877, %v2999
        %v3003 = vmul.f32 %v2880, %v2999
        %v3004 = vmul.f32 %v2885, %v2999
        %v3005 = vmul.f32 %v2888, %v2999
        %v3006 = vmul.f32 %v2893, %v2999
        %v3007 = vmul.f32 %v2896, %v2999
        %v3008 = vmul.f32 %v2901, %v2999
        %v3009 = vmul.f32 %v2904, %v2999
        %v3010 = vmul.f32 %v2909, %v2999
        %v3011 = vmul.f32 %v2912, %v2999
        %v3012 = vmul.f32 %v2917, %v2999
        %v3013 = vmul.f32 %v2920, %v2999
        %v3014 = vmul.f32 %v2925, %v2999
        %v3015 = vmul.f32 %v2928, %v2999
        %v3016 = vmul.f32 %v2933, %v2999
        %v3017 = vmul.f32 %v2936, %v2999
        %v3018 = vmul.f32 %v2941, %v2999
        %v3019 = vmul.f32 %v2944, %v2999
        %v3020 = vmul.f32 %v2949, %v2999
        %v3021 = vmul.f32 %v2952, %v2999
        %v3022 = vmul.f32 %v2957, %v2999
        %v3023 = vmul.f32 %v2960, %v2999
        %v3024 = vmul.f32 %v2965, %v2999
        %v3025 = vmul.f32 %v2968, %v2999
        %v3026 = vmul.f32 %v2973, %v2999
        %v3027 = vmul.f32 %v2976, %v2999
        %v3028 = vmul.f32 %v2981, %v2999
        %v3029 = vmul.f32 %v2984, %v2999
        %v3030 = vmul.f32 %v2989, %v2999
        %v3031 = vmul.f32 %v2992, %v2999
        %v3032 = vld [vmem:[#allocation11 + $0x1] sm:$0x1]
        %v3033 = vlaneseq
        %v3034 = vshrl.u32 %v3033, 7
        %v3035 = vsub.s32 0, %v3034
        %v3036 = vrot.slane %v3032, %v3035
        %v3037 = vadd.f32 %v3000, %v3036
        %v3038 = vadd.f32 %v3001, %v3036
        %v3039 = vadd.f32 %v3002, %v3036
        %v3040 = vadd.f32 %v3003, %v3036
        %v3041 = vadd.f32 %v3004, %v3036
        %v3042 = vadd.f32 %v3005, %v3036
        %v3043 = vadd.f32 %v3006, %v3036
        %v3044 = vadd.f32 %v3007, %v3036
        %v3045 = vadd.f32 %v3008, %v3036
        %v3046 = vadd.f32 %v3009, %v3036
        %v3047 = vadd.f32 %v3010, %v3036
        %v3048 = vadd.f32 %v3011, %v3036
        %v3049 = vadd.f32 %v3012, %v3036
        %v3050 = vadd.f32 %v3013, %v3036
        %v3051 = vadd.f32 %v3014, %v3036
        %v3052 = vadd.f32 %v3015, %v3036
        %v3053 = vadd.f32 %v3016, %v3036
        %v3054 = vadd.f32 %v3017, %v3036
        %v3055 = vadd.f32 %v3018, %v3036
        %v3056 = vadd.f32 %v3019, %v3036
        %v3057 = vadd.f32 %v3020, %v3036
        %v3058 = vadd.f32 %v3021, %v3036
        %v3059 = vadd.f32 %v3022, %v3036
        %v3060 = vadd.f32 %v3023, %v3036
        %v3061 = vadd.f32 %v3024, %v3036
        %v3062 = vadd.f32 %v3025, %v3036
        %v3063 = vadd.f32 %v3026, %v3036
        %v3064 = vadd.f32 %v3027, %v3036
        %v3065 = vadd.f32 %v3028, %v3036
        %v3066 = vadd.f32 %v3029, %v3036
        %v3067 = vadd.f32 %v3030, %v3036
        %v3068 = vadd.f32 %v3031, %v3036
        %s3069 = sld [smem:[#allocation15 + $0x3]]
        %s3070 = sld [smem:[#allocation15 + $0x4]]
        %s3071 = sld [smem:[#allocation15 + $0x5]]
        %v3072 = vstv %s3069
        %v3073 = vmul.f32 %v3072, %v3037
        %v3074 = vmul.f32 %v3072, %v3038
        %v3075 = vmul.f32 %v3072, %v3039
        %v3076 = vmul.f32 %v3072, %v3040
        %v3077 = vmul.f32 %v3072, %v3041
        %v3078 = vmul.f32 %v3072, %v3042
        %v3079 = vmul.f32 %v3072, %v3043
        %v3080 = vmul.f32 %v3072, %v3044
        %v3081 = vmul.f32 %v3072, %v3045
        %v3082 = vmul.f32 %v3072, %v3046
        %v3083 = vmul.f32 %v3072, %v3047
        %v3084 = vmul.f32 %v3072, %v3048
        %v3085 = vmul.f32 %v3072, %v3049
        %v3086 = vmul.f32 %v3072, %v3050
        %v3087 = vmul.f32 %v3072, %v3051
        %v3088 = vmul.f32 %v3072, %v3052
        %v3089 = vmul.f32 %v3072, %v3053
        %v3090 = vmul.f32 %v3072, %v3054
        %v3091 = vmul.f32 %v3072, %v3055
        %v3092 = vmul.f32 %v3072, %v3056
        %v3093 = vmul.f32 %v3072, %v3057
        %v3094 = vmul.f32 %v3072, %v3058
        %v3095 = vmul.f32 %v3072, %v3059
        %v3096 = vmul.f32 %v3072, %v3060
        %v3097 = vmul.f32 %v3072, %v3061
        %v3098 = vmul.f32 %v3072, %v3062
        %v3099 = vmul.f32 %v3072, %v3063
        %v3100 = vmul.f32 %v3072, %v3064
        %v3101 = vmul.f32 %v3072, %v3065
        %v3102 = vmul.f32 %v3072, %v3066
        %v3103 = vmul.f32 %v3072, %v3067
        %v3104 = vmul.f32 %v3072, %v3068
        %v3105 = vstv %s3070
        %v3106 = vadd.f32 %v3073, %v3105
        %v3107 = vadd.f32 %v3074, %v3105
        %v3108 = vadd.f32 %v3075, %v3105
        %v3109 = vadd.f32 %v3076, %v3105
        %v3110 = vadd.f32 %v3077, %v3105
        %v3111 = vadd.f32 %v3078, %v3105
        %v3112 = vadd.f32 %v3079, %v3105
        %v3113 = vadd.f32 %v3080, %v3105
        %v3114 = vadd.f32 %v3081, %v3105
        %v3115 = vadd.f32 %v3082, %v3105
        %v3116 = vadd.f32 %v3083, %v3105
        %v3117 = vadd.f32 %v3084, %v3105
        %v3118 = vadd.f32 %v3085, %v3105
        %v3119 = vadd.f32 %v3086, %v3105
        %v3120 = vadd.f32 %v3087, %v3105
        %v3121 = vadd.f32 %v3088, %v3105
        %v3122 = vadd.f32 %v3089, %v3105
        %v3123 = vadd.f32 %v3090, %v3105
        %v3124 = vadd.f32 %v3091, %v3105
        %v3125 = vadd.f32 %v3092, %v3105
        %v3126 = vadd.f32 %v3093, %v3105
        %v3127 = vadd.f32 %v3094, %v3105
        %v3128 = vadd.f32 %v3095, %v3105
        %v3129 = vadd.f32 %v3096, %v3105
        %v3130 = vadd.f32 %v3097, %v3105
        %v3131 = vadd.f32 %v3098, %v3105
        %v3132 = vadd.f32 %v3099, %v3105
        %v3133 = vadd.f32 %v3100, %v3105
        %v3134 = vadd.f32 %v3101, %v3105
        %v3135 = vadd.f32 %v3102, %v3105
        %v3136 = vadd.f32 %v3103, %v3105
        %v3137 = vadd.f32 %v3104, %v3105
        %v3138 = vsub.f32 0.0, %v3106
        %v3139 = vsub.f32 0.0, %v3107
        %v3140 = vsub.f32 0.0, %v3108
        %v3141 = vsub.f32 0.0, %v3109
        %v3142 = vsub.f32 0.0, %v3110
        %v3143 = vsub.f32 0.0, %v3111
        %v3144 = vsub.f32 0.0, %v3112
        %v3145 = vsub.f32 0.0, %v3113
        %v3146 = vsub.f32 0.0, %v3114
        %v3147 = vsub.f32 0.0, %v3115
        %v3148 = vsub.f32 0.0, %v3116
        %v3149 = vsub.f32 0.0, %v3117
        %v3150 = vsub.f32 0.0, %v3118
        %v3151 = vsub.f32 0.0, %v3119
        %v3152 = vsub.f32 0.0, %v3120
        %v3153 = vsub.f32 0.0, %v3121
        %v3154 = vsub.f32 0.0, %v3122
        %v3155 = vsub.f32 0.0, %v3123
        %v3156 = vsub.f32 0.0, %v3124
        %v3157 = vsub.f32 0.0, %v3125
        %v3158 = vsub.f32 0.0, %v3126
        %v3159 = vsub.f32 0.0, %v3127
        %v3160 = vsub.f32 0.0, %v3128
        %v3161 = vsub.f32 0.0, %v3129
        %v3162 = vsub.f32 0.0, %v3130
        %v3163 = vsub.f32 0.0, %v3131
        %v3164 = vsub.f32 0.0, %v3132
        %v3165 = vsub.f32 0.0, %v3133
        %v3166 = vsub.f32 0.0, %v3134
        %v3167 = vsub.f32 0.0, %v3135
        %v3168 = vsub.f32 0.0, %v3136
        %v3169 = vsub.f32 0.0, %v3137
        %v3170 = vmin.f32 %v3138, 20.0
        %v3171 = vmin.f32 %v3139, 20.0
        %v3172 = vmin.f32 %v3140, 20.0
        %v3173 = vmin.f32 %v3141, 20.0
        %v3174 = vmin.f32 %v3142, 20.0
        %v3175 = vmin.f32 %v3143, 20.0
        %v3176 = vmin.f32 %v3144, 20.0
        %v3177 = vmin.f32 %v3145, 20.0
        %v3178 = vmin.f32 %v3146, 20.0
        %v3179 = vmin.f32 %v3147, 20.0
        %v3180 = vmin.f32 %v3148, 20.0
        %v3181 = vmin.f32 %v3149, 20.0
        %v3182 = vmin.f32 %v3150, 20.0
        %v3183 = vmin.f32 %v3151, 20.0
        %v3184 = vmin.f32 %v3152, 20.0
        %v3185 = vmin.f32 %v3153, 20.0
        %v3186 = vmin.f32 %v3154, 20.0
        %v3187 = vmin.f32 %v3155, 20.0
        %v3188 = vmin.f32 %v3156, 20.0
        %v3189 = vmin.f32 %v3157, 20.0
        %v3190 = vmin.f32 %v3158, 20.0
        %v3191 = vmin.f32 %v3159, 20.0
        %v3192 = vmin.f32 %v3160, 20.0
        %v3193 = vmin.f32 %v3161, 20.0
        %v3194 = vmin.f32 %v3162, 20.0
        %v3195 = vmin.f32 %v3163, 20.0
        %v3196 = vmin.f32 %v3164, 20.0
        %v3197 = vmin.f32 %v3165, 20.0
        %v3198 = vmin.f32 %v3166, 20.0
        %v3199 = vmin.f32 %v3167, 20.0
        %v3200 = vmin.f32 %v3168, 20.0
        %v3201 = vmin.f32 %v3169, 20.0
        %v3202 = vmul.f32 %v3170, 1.442695
        %v3203 = vpow.pop %v3202
        %v3204 = vmul.f32 %v3171, 1.442695
        %v3205 = vpow.pop %v3204
        %v3206 = vmul.f32 %v3172, 1.442695
        %v3207 = vpow.pop %v3206
        %v3208 = vmul.f32 %v3173, 1.442695
        %v3209 = vpow.pop %v3208
        %v3210 = vmul.f32 %v3174, 1.442695
        %v3211 = vpow.pop %v3210
        %v3212 = vmul.f32 %v3175, 1.442695
        %v3213 = vpow.pop %v3212
        %v3214 = vmul.f32 %v3176, 1.442695
        %v3215 = vpow.pop %v3214
        %v3216 = vmul.f32 %v3177, 1.442695
        %v3217 = vpow.pop %v3216
        %v3218 = vmul.f32 %v3178, 1.442695
        %v3219 = vpow.pop %v3218
        %v3220 = vmul.f32 %v3179, 1.442695
        %v3221 = vpow.pop %v3220
        %v3222 = vmul.f32 %v3180, 1.442695
        %v3223 = vpow.pop %v3222
        %v3224 = vmul.f32 %v3181, 1.442695
        %v3225 = vpow.pop %v3224
        %v3226 = vmul.f32 %v3182, 1.442695
        %v3227 = vpow.pop %v3226
        %v3228 = vmul.f32 %v3183, 1.442695
        %v3229 = vpow.pop %v3228
        %v3230 = vmul.f32 %v3184, 1.442695
        %v3231 = vpow.pop %v3230
        %v3232 = vmul.f32 %v3185, 1.442695
        %v3233 = vpow.pop %v3232
        %v3234 = vmul.f32 %v3186, 1.442695
        %v3235 = vpow.pop %v3234
        %v3236 = vmul.f32 %v3187, 1.442695
        %v3237 = vpow.pop %v3236
        %v3238 = vmul.f32 %v3188, 1.442695
        %v3239 = vpow.pop %v3238
        %v3240 = vmul.f32 %v3189, 1.442695
        %v3241 = vpow.pop %v3240
        %v3242 = vmul.f32 %v3190, 1.442695
        %v3243 = vpow.pop %v3242
        %v3244 = vmul.f32 %v3191, 1.442695
        %v3245 = vpow.pop %v3244
        %v3246 = vmul.f32 %v3192, 1.442695
        %v3247 = vpow.pop %v3246
        %v3248 = vmul.f32 %v3193, 1.442695
        %v3249 = vpow.pop %v3248
        %v3250 = vmul.f32 %v3194, 1.442695
        %v3251 = vpow.pop %v3250
        %v3252 = vmul.f32 %v3195, 1.442695
        %v3253 = vpow.pop %v3252
        %v3254 = vmul.f32 %v3196, 1.442695
        %v3255 = vpow.pop %v3254
        %v3256 = vmul.f32 %v3197, 1.442695
        %v3257 = vpow.pop %v3256
        %v3258 = vmul.f32 %v3198, 1.442695
        %v3259 = vpow.pop %v3258
        %v3260 = vmul.f32 %v3199, 1.442695
        %v3261 = vpow.pop %v3260
        %v3262 = vmul.f32 %v3200, 1.442695
        %v3263 = vpow.pop %v3262
        %v3264 = vmul.f32 %v3201, 1.442695
        %v3265 = vpow.pop %v3264
        %v3266 = vadd.f32 %v3203, 1.0
        %v3267 = vlog2.pop %v3266
        %v3268 = vmul.f32 %v3267, 0.6931472
        %v3269 = vmul.f32 -0.5, %v3203
        %v3270 = vadd.f32 %v3269, 1.0
        %v3271 = vmul.f32 %v3270, %v3203
        %v3272 = vand.u32 2147483647, %v3203
        %vm3273 = vcmp.lt.f32.partialorder %v3272, 0.0004427343
        %v3274 = vsel %vm3273, %v3271, %v3268
        %v3275 = vadd.f32 %v3205, 1.0
        %v3276 = vlog2.pop %v3275
        %v3277 = vmul.f32 %v3276, 0.6931472
        %v3278 = vmul.f32 -0.5, %v3205
        %v3279 = vadd.f32 %v3278, 1.0
        %v3280 = vmul.f32 %v3279, %v3205
        %v3281 = vand.u32 2147483647, %v3205
        %vm3282 = vcmp.lt.f32.partialorder %v3281, 0.0004427343
        %v3283 = vsel %vm3282, %v3280, %v3277
        %v3284 = vadd.f32 %v3207, 1.0
        %v3285 = vlog2.pop %v3284
        %v3286 = vmul.f32 %v3285, 0.6931472
        %v3287 = vmul.f32 -0.5, %v3207
        %v3288 = vadd.f32 %v3287, 1.0
        %v3289 = vmul.f32 %v3288, %v3207
        %v3290 = vand.u32 2147483647, %v3207
        %vm3291 = vcmp.lt.f32.partialorder %v3290, 0.0004427343
        %v3292 = vsel %vm3291, %v3289, %v3286
        %v3293 = vadd.f32 %v3209, 1.0
        %v3294 = vlog2.pop %v3293
        %v3295 = vmul.f32 %v3294, 0.6931472
        %v3296 = vmul.f32 -0.5, %v3209
        %v3297 = vadd.f32 %v3296, 1.0
        %v3298 = vmul.f32 %v3297, %v3209
        %v3299 = vand.u32 2147483647, %v3209
        %vm3300 = vcmp.lt.f32.partialorder %v3299, 0.0004427343
        %v3301 = vsel %vm3300, %v3298, %v3295
        %v3302 = vadd.f32 %v3211, 1.0
        %v3303 = vlog2.pop %v3302
        %v3304 = vmul.f32 %v3303, 0.6931472
        %v3305 = vmul.f32 -0.5, %v3211
        %v3306 = vadd.f32 %v3305, 1.0
        %v3307 = vmul.f32 %v3306, %v3211
        %v3308 = vand.u32 2147483647, %v3211
        %vm3309 = vcmp.lt.f32.partialorder %v3308, 0.0004427343
        %v3310 = vsel %vm3309, %v3307, %v3304
        %v3311 = vadd.f32 %v3213, 1.0
        %v3312 = vlog2.pop %v3311
        %v3313 = vmul.f32 %v3312, 0.6931472
        %v3314 = vmul.f32 -0.5, %v3213
        %v3315 = vadd.f32 %v3314, 1.0
        %v3316 = vmul.f32 %v3315, %v3213
        %v3317 = vand.u32 2147483647, %v3213
        %vm3318 = vcmp.lt.f32.partialorder %v3317, 0.0004427343
        %v3319 = vsel %vm3318, %v3316, %v3313
        %v3320 = vadd.f32 %v3215, 1.0
        %v3321 = vlog2.pop %v3320
        %v3322 = vmul.f32 %v3321, 0.6931472
        %v3323 = vmul.f32 -0.5, %v3215
        %v3324 = vadd.f32 %v3323, 1.0
        %v3325 = vmul.f32 %v3324, %v3215
        %v3326 = vand.u32 2147483647, %v3215
        %vm3327 = vcmp.lt.f32.partialorder %v3326, 0.0004427343
        %v3328 = vsel %vm3327, %v3325, %v3322
        %v3329 = vadd.f32 %v3217, 1.0
        %v3330 = vlog2.pop %v3329
        %v3331 = vmul.f32 %v3330, 0.6931472
        %v3332 = vmul.f32 -0.5, %v3217
        %v3333 = vadd.f32 %v3332, 1.0
        %v3334 = vmul.f32 %v3333, %v3217
        %v3335 = vand.u32 2147483647, %v3217
        %vm3336 = vcmp.lt.f32.partialorder %v3335, 0.0004427343
        %v3337 = vsel %vm3336, %v3334, %v3331
        %v3338 = vadd.f32 %v3219, 1.0
        %v3339 = vlog2.pop %v3338
        %v3340 = vmul.f32 %v3339, 0.6931472
        %v3341 = vmul.f32 -0.5, %v3219
        %v3342 = vadd.f32 %v3341, 1.0
        %v3343 = vmul.f32 %v3342, %v3219
        %v3344 = vand.u32 2147483647, %v3219
        %vm3345 = vcmp.lt.f32.partialorder %v3344, 0.0004427343
        %v3346 = vsel %vm3345, %v3343, %v3340
        %v3347 = vadd.f32 %v3221, 1.0
        %v3348 = vlog2.pop %v3347
        %v3349 = vmul.f32 %v3348, 0.6931472
        %v3350 = vmul.f32 -0.5, %v3221
        %v3351 = vadd.f32 %v3350, 1.0
        %v3352 = vmul.f32 %v3351, %v3221
        %v3353 = vand.u32 2147483647, %v3221
        %vm3354 = vcmp.lt.f32.partialorder %v3353, 0.0004427343
        %v3355 = vsel %vm3354, %v3352, %v3349
        %v3356 = vadd.f32 %v3223, 1.0
        %v3357 = vlog2.pop %v3356
        %v3358 = vmul.f32 %v3357, 0.6931472
        %v3359 = vmul.f32 -0.5, %v3223
        %v3360 = vadd.f32 %v3359, 1.0
        %v3361 = vmul.f32 %v3360, %v3223
        %v3362 = vand.u32 2147483647, %v3223
        %vm3363 = vcmp.lt.f32.partialorder %v3362, 0.0004427343
        %v3364 = vsel %vm3363, %v3361, %v3358
        %v3365 = vadd.f32 %v3225, 1.0
        %v3366 = vlog2.pop %v3365
        %v3367 = vmul.f32 %v3366, 0.6931472
        %v3368 = vmul.f32 -0.5, %v3225
        %v3369 = vadd.f32 %v3368, 1.0
        %v3370 = vmul.f32 %v3369, %v3225
        %v3371 = vand.u32 2147483647, %v3225
        %vm3372 = vcmp.lt.f32.partialorder %v3371, 0.0004427343
        %v3373 = vsel %vm3372, %v3370, %v3367
        %v3374 = vadd.f32 %v3227, 1.0
        %v3375 = vlog2.pop %v3374
        %v3376 = vmul.f32 %v3375, 0.6931472
        %v3377 = vmul.f32 -0.5, %v3227
        %v3378 = vadd.f32 %v3377, 1.0
        %v3379 = vmul.f32 %v3378, %v3227
        %v3380 = vand.u32 2147483647, %v3227
        %vm3381 = vcmp.lt.f32.partialorder %v3380, 0.0004427343
        %v3382 = vsel %vm3381, %v3379, %v3376
        %v3383 = vadd.f32 %v3229, 1.0
        %v3384 = vlog2.pop %v3383
        %v3385 = vmul.f32 %v3384, 0.6931472
        %v3386 = vmul.f32 -0.5, %v3229
        %v3387 = vadd.f32 %v3386, 1.0
        %v3388 = vmul.f32 %v3387, %v3229
        %v3389 = vand.u32 2147483647, %v3229
        %vm3390 = vcmp.lt.f32.partialorder %v3389, 0.0004427343
        %v3391 = vsel %vm3390, %v3388, %v3385
        %v3392 = vadd.f32 %v3231, 1.0
        %v3393 = vlog2.pop %v3392
        %v3394 = vmul.f32 %v3393, 0.6931472
        %v3395 = vmul.f32 -0.5, %v3231
        %v3396 = vadd.f32 %v3395, 1.0
        %v3397 = vmul.f32 %v3396, %v3231
        %v3398 = vand.u32 2147483647, %v3231
        %vm3399 = vcmp.lt.f32.partialorder %v3398, 0.0004427343
        %v3400 = vsel %vm3399, %v3397, %v3394
        %v3401 = vadd.f32 %v3233, 1.0
        %v3402 = vlog2.pop %v3401
        %v3403 = vmul.f32 %v3402, 0.6931472
        %v3404 = vmul.f32 -0.5, %v3233
        %v3405 = vadd.f32 %v3404, 1.0
        %v3406 = vmul.f32 %v3405, %v3233
        %v3407 = vand.u32 2147483647, %v3233
        %vm3408 = vcmp.lt.f32.partialorder %v3407, 0.0004427343
        %v3409 = vsel %vm3408, %v3406, %v3403
        %v3410 = vadd.f32 %v3235, 1.0
        %v3411 = vlog2.pop %v3410
        %v3412 = vmul.f32 %v3411, 0.6931472
        %v3413 = vmul.f32 -0.5, %v3235
        %v3414 = vadd.f32 %v3413, 1.0
        %v3415 = vmul.f32 %v3414, %v3235
        %v3416 = vand.u32 2147483647, %v3235
        %vm3417 = vcmp.lt.f32.partialorder %v3416, 0.0004427343
        %v3418 = vsel %vm3417, %v3415, %v3412
        %v3419 = vadd.f32 %v3237, 1.0
        %v3420 = vlog2.pop %v3419
        %v3421 = vmul.f32 %v3420, 0.6931472
        %v3422 = vmul.f32 -0.5, %v3237
        %v3423 = vadd.f32 %v3422, 1.0
        %v3424 = vmul.f32 %v3423, %v3237
        %v3425 = vand.u32 2147483647, %v3237
        %vm3426 = vcmp.lt.f32.partialorder %v3425, 0.0004427343
        %v3427 = vsel %vm3426, %v3424, %v3421
        %v3428 = vadd.f32 %v3239, 1.0
        %v3429 = vlog2.pop %v3428
        %v3430 = vmul.f32 %v3429, 0.6931472
        %v3431 = vmul.f32 -0.5, %v3239
        %v3432 = vadd.f32 %v3431, 1.0
        %v3433 = vmul.f32 %v3432, %v3239
        %v3434 = vand.u32 2147483647, %v3239
        %vm3435 = vcmp.lt.f32.partialorder %v3434, 0.0004427343
        %v3436 = vsel %vm3435, %v3433, %v3430
        %v3437 = vadd.f32 %v3241, 1.0
        %v3438 = vlog2.pop %v3437
        %v3439 = vmul.f32 %v3438, 0.6931472
        %v3440 = vmul.f32 -0.5, %v3241
        %v3441 = vadd.f32 %v3440, 1.0
        %v3442 = vmul.f32 %v3441, %v3241
        %v3443 = vand.u32 2147483647, %v3241
        %vm3444 = vcmp.lt.f32.partialorder %v3443, 0.0004427343
        %v3445 = vsel %vm3444, %v3442, %v3439
        %v3446 = vadd.f32 %v3243, 1.0
        %v3447 = vlog2.pop %v3446
        %v3448 = vmul.f32 %v3447, 0.6931472
        %v3449 = vmul.f32 -0.5, %v3243
        %v3450 = vadd.f32 %v3449, 1.0
        %v3451 = vmul.f32 %v3450, %v3243
        %v3452 = vand.u32 2147483647, %v3243
        %vm3453 = vcmp.lt.f32.partialorder %v3452, 0.0004427343
        %v3454 = vsel %vm3453, %v3451, %v3448
        %v3455 = vadd.f32 %v3245, 1.0
        %v3456 = vlog2.pop %v3455
        %v3457 = vmul.f32 %v3456, 0.6931472
        %v3458 = vmul.f32 -0.5, %v3245
        %v3459 = vadd.f32 %v3458, 1.0
        %v3460 = vmul.f32 %v3459, %v3245
        %v3461 = vand.u32 2147483647, %v3245
        %vm3462 = vcmp.lt.f32.partialorder %v3461, 0.0004427343
        %v3463 = vsel %vm3462, %v3460, %v3457
        %v3464 = vadd.f32 %v3247, 1.0
        %v3465 = vlog2.pop %v3464
        %v3466 = vmul.f32 %v3465, 0.6931472
        %v3467 = vmul.f32 -0.5, %v3247
        %v3468 = vadd.f32 %v3467, 1.0
        %v3469 = vmul.f32 %v3468, %v3247
        %v3470 = vand.u32 2147483647, %v3247
        %vm3471 = vcmp.lt.f32.partialorder %v3470, 0.0004427343
        %v3472 = vsel %vm3471, %v3469, %v3466
        %v3473 = vadd.f32 %v3249, 1.0
        %v3474 = vlog2.pop %v3473
        %v3475 = vmul.f32 %v3474, 0.6931472
        %v3476 = vmul.f32 -0.5, %v3249
        %v3477 = vadd.f32 %v3476, 1.0
        %v3478 = vmul.f32 %v3477, %v3249
        %v3479 = vand.u32 2147483647, %v3249
        %vm3480 = vcmp.lt.f32.partialorder %v3479, 0.0004427343
        %v3481 = vsel %vm3480, %v3478, %v3475
        %v3482 = vadd.f32 %v3251, 1.0
        %v3483 = vlog2.pop %v3482
        %v3484 = vmul.f32 %v3483, 0.6931472
        %v3485 = vmul.f32 -0.5, %v3251
        %v3486 = vadd.f32 %v3485, 1.0
        %v3487 = vmul.f32 %v3486, %v3251
        %v3488 = vand.u32 2147483647, %v3251
        %vm3489 = vcmp.lt.f32.partialorder %v3488, 0.0004427343
        %v3490 = vsel %vm3489, %v3487, %v3484
        %v3491 = vadd.f32 %v3253, 1.0
        %v3492 = vlog2.pop %v3491
        %v3493 = vmul.f32 %v3492, 0.6931472
        %v3494 = vmul.f32 -0.5, %v3253
        %v3495 = vadd.f32 %v3494, 1.0
        %v3496 = vmul.f32 %v3495, %v3253
        %v3497 = vand.u32 2147483647, %v3253
        %vm3498 = vcmp.lt.f32.partialorder %v3497, 0.0004427343
        %v3499 = vsel %vm3498, %v3496, %v3493
        %v3500 = vadd.f32 %v3255, 1.0
        %v3501 = vlog2.pop %v3500
        %v3502 = vmul.f32 %v3501, 0.6931472
        %v3503 = vmul.f32 -0.5, %v3255
        %v3504 = vadd.f32 %v3503, 1.0
        %v3505 = vmul.f32 %v3504, %v3255
        %v3506 = vand.u32 2147483647, %v3255
        %vm3507 = vcmp.lt.f32.partialorder %v3506, 0.0004427343
        %v3508 = vsel %vm3507, %v3505, %v3502
        %v3509 = vadd.f32 %v3257, 1.0
        %v3510 = vlog2.pop %v3509
        %v3511 = vmul.f32 %v3510, 0.6931472
        %v3512 = vmul.f32 -0.5, %v3257
        %v3513 = vadd.f32 %v3512, 1.0
        %v3514 = vmul.f32 %v3513, %v3257
        %v3515 = vand.u32 2147483647, %v3257
        %vm3516 = vcmp.lt.f32.partialorder %v3515, 0.0004427343
        %v3517 = vsel %vm3516, %v3514, %v3511
        %v3518 = vadd.f32 %v3259, 1.0
        %v3519 = vlog2.pop %v3518
        %v3520 = vmul.f32 %v3519, 0.6931472
        %v3521 = vmul.f32 -0.5, %v3259
        %v3522 = vadd.f32 %v3521, 1.0
        %v3523 = vmul.f32 %v3522, %v3259
        %v3524 = vand.u32 2147483647, %v3259
        %vm3525 = vcmp.lt.f32.partialorder %v3524, 0.0004427343
        %v3526 = vsel %vm3525, %v3523, %v3520
        %v3527 = vadd.f32 %v3261, 1.0
        %v3528 = vlog2.pop %v3527
        %v3529 = vmul.f32 %v3528, 0.6931472
        %v3530 = vmul.f32 -0.5, %v3261
        %v3531 = vadd.f32 %v3530, 1.0
        %v3532 = vmul.f32 %v3531, %v3261
        %v3533 = vand.u32 2147483647, %v3261
        %vm3534 = vcmp.lt.f32.partialorder %v3533, 0.0004427343
        %v3535 = vsel %vm3534, %v3532, %v3529
        %v3536 = vadd.f32 %v3263, 1.0
        %v3537 = vlog2.pop %v3536
        %v3538 = vmul.f32 %v3537, 0.6931472
        %v3539 = vmul.f32 -0.5, %v3263
        %v3540 = vadd.f32 %v3539, 1.0
        %v3541 = vmul.f32 %v3540, %v3263
        %v3542 = vand.u32 2147483647, %v3263
        %vm3543 = vcmp.lt.f32.partialorder %v3542, 0.0004427343
        %v3544 = vsel %vm3543, %v3541, %v3538
        %v3545 = vadd.f32 %v3265, 1.0
        %v3546 = vlog2.pop %v3545
        %v3547 = vmul.f32 %v3546, 0.6931472
        %v3548 = vmul.f32 -0.5, %v3265
        %v3549 = vadd.f32 %v3548, 1.0
        %v3550 = vmul.f32 %v3549, %v3265
        %v3551 = vand.u32 2147483647, %v3265
        %vm3552 = vcmp.lt.f32.partialorder %v3551, 0.0004427343
        %v3553 = vsel %vm3552, %v3550, %v3547
        %v3554 = vsub.f32 0.0, %v3274
        %v3555 = vsub.f32 0.0, %v3283
        %v3556 = vsub.f32 0.0, %v3292
        %v3557 = vsub.f32 0.0, %v3301
        %v3558 = vsub.f32 0.0, %v3310
        %v3559 = vsub.f32 0.0, %v3319
        %v3560 = vsub.f32 0.0, %v3328
        %v3561 = vsub.f32 0.0, %v3337
        %v3562 = vsub.f32 0.0, %v3346
        %v3563 = vsub.f32 0.0, %v3355
        %v3564 = vsub.f32 0.0, %v3364
        %v3565 = vsub.f32 0.0, %v3373
        %v3566 = vsub.f32 0.0, %v3382
        %v3567 = vsub.f32 0.0, %v3391
        %v3568 = vsub.f32 0.0, %v3400
        %v3569 = vsub.f32 0.0, %v3409
        %v3570 = vsub.f32 0.0, %v3418
        %v3571 = vsub.f32 0.0, %v3427
        %v3572 = vsub.f32 0.0, %v3436
        %v3573 = vsub.f32 0.0, %v3445
        %v3574 = vsub.f32 0.0, %v3454
        %v3575 = vsub.f32 0.0, %v3463
        %v3576 = vsub.f32 0.0, %v3472
        %v3577 = vsub.f32 0.0, %v3481
        %v3578 = vsub.f32 0.0, %v3490
        %v3579 = vsub.f32 0.0, %v3499
        %v3580 = vsub.f32 0.0, %v3508
        %v3581 = vsub.f32 0.0, %v3517
        %v3582 = vsub.f32 0.0, %v3526
        %v3583 = vsub.f32 0.0, %v3535
        %v3584 = vsub.f32 0.0, %v3544
        %v3585 = vsub.f32 0.0, %v3553
        %vm3586 = vcmp.gt.f32.partialorder %v3138, 20.0
        %vm3587 = vcmp.gt.f32.partialorder %v3139, 20.0
        %vm3588 = vcmp.gt.f32.partialorder %v3140, 20.0
        %vm3589 = vcmp.gt.f32.partialorder %v3141, 20.0
        %vm3590 = vcmp.gt.f32.partialorder %v3142, 20.0
        %vm3591 = vcmp.gt.f32.partialorder %v3143, 20.0
        %vm3592 = vcmp.gt.f32.partialorder %v3144, 20.0
        %vm3593 = vcmp.gt.f32.partialorder %v3145, 20.0
        %vm3594 = vcmp.gt.f32.partialorder %v3146, 20.0
        %vm3595 = vcmp.gt.f32.partialorder %v3147, 20.0
        %vm3596 = vcmp.gt.f32.partialorder %v3148, 20.0
        %vm3597 = vcmp.gt.f32.partialorder %v3149, 20.0
        %vm3598 = vcmp.gt.f32.partialorder %v3150, 20.0
        %vm3599 = vcmp.gt.f32.partialorder %v3151, 20.0
        %vm3600 = vcmp.gt.f32.partialorder %v3152, 20.0
        %vm3601 = vcmp.gt.f32.partialorder %v3153, 20.0
        %vm3602 = vcmp.gt.f32.partialorder %v3154, 20.0
        %vm3603 = vcmp.gt.f32.partialorder %v3155, 20.0
        %vm3604 = vcmp.gt.f32.partialorder %v3156, 20.0
        %vm3605 = vcmp.gt.f32.partialorder %v3157, 20.0
        %vm3606 = vcmp.gt.f32.partialorder %v3158, 20.0
        %vm3607 = vcmp.gt.f32.partialorder %v3159, 20.0
        %vm3608 = vcmp.gt.f32.partialorder %v3160, 20.0
        %vm3609 = vcmp.gt.f32.partialorder %v3161, 20.0
        %vm3610 = vcmp.gt.f32.partialorder %v3162, 20.0
        %vm3611 = vcmp.gt.f32.partialorder %v3163, 20.0
        %vm3612 = vcmp.gt.f32.partialorder %v3164, 20.0
        %vm3613 = vcmp.gt.f32.partialorder %v3165, 20.0
        %vm3614 = vcmp.gt.f32.partialorder %v3166, 20.0
        %vm3615 = vcmp.gt.f32.partialorder %v3167, 20.0
        %vm3616 = vcmp.gt.f32.partialorder %v3168, 20.0
        %vm3617 = vcmp.gt.f32.partialorder %v3169, 20.0
        %v3618 = vsel %vm3586, %v3106, %v3554
        %v3619 = vsel %vm3587, %v3107, %v3555
        %v3620 = vsel %vm3588, %v3108, %v3556
        %v3621 = vsel %vm3589, %v3109, %v3557
        %v3622 = vsel %vm3590, %v3110, %v3558
        %v3623 = vsel %vm3591, %v3111, %v3559
        %v3624 = vsel %vm3592, %v3112, %v3560
        %v3625 = vsel %vm3593, %v3113, %v3561
        %v3626 = vsel %vm3594, %v3114, %v3562
        %v3627 = vsel %vm3595, %v3115, %v3563
        %v3628 = vsel %vm3596, %v3116, %v3564
        %v3629 = vsel %vm3597, %v3117, %v3565
        %v3630 = vsel %vm3598, %v3118, %v3566
        %v3631 = vsel %vm3599, %v3119, %v3567
        %v3632 = vsel %vm3600, %v3120, %v3568
        %v3633 = vsel %vm3601, %v3121, %v3569
        %v3634 = vsel %vm3602, %v3122, %v3570
        %v3635 = vsel %vm3603, %v3123, %v3571
        %v3636 = vsel %vm3604, %v3124, %v3572
        %v3637 = vsel %vm3605, %v3125, %v3573
        %v3638 = vsel %vm3606, %v3126, %v3574
        %v3639 = vsel %vm3607, %v3127, %v3575
        %v3640 = vsel %vm3608, %v3128, %v3576
        %v3641 = vsel %vm3609, %v3129, %v3577
        %v3642 = vsel %vm3610, %v3130, %v3578
        %v3643 = vsel %vm3611, %v3131, %v3579
        %v3644 = vsel %vm3612, %v3132, %v3580
        %v3645 = vsel %vm3613, %v3133, %v3581
        %v3646 = vsel %vm3614, %v3134, %v3582
        %v3647 = vsel %vm3615, %v3135, %v3583
        %v3648 = vsel %vm3616, %v3136, %v3584
        %v3649 = vsel %vm3617, %v3137, %v3585
        %v3650 = vstv %s3071
        %v3651 = vmul.f32 %v3650, %v3618
        %v3652 = vmul.f32 %v3650, %v3619
        %v3653 = vmul.f32 %v3650, %v3620
        %v3654 = vmul.f32 %v3650, %v3621
        %v3655 = vmul.f32 %v3650, %v3622
        %v3656 = vmul.f32 %v3650, %v3623
        %v3657 = vmul.f32 %v3650, %v3624
        %v3658 = vmul.f32 %v3650, %v3625
        %v3659 = vmul.f32 %v3650, %v3626
        %v3660 = vmul.f32 %v3650, %v3627
        %v3661 = vmul.f32 %v3650, %v3628
        %v3662 = vmul.f32 %v3650, %v3629
        %v3663 = vmul.f32 %v3650, %v3630
        %v3664 = vmul.f32 %v3650, %v3631
        %v3665 = vmul.f32 %v3650, %v3632
        %v3666 = vmul.f32 %v3650, %v3633
        %v3667 = vmul.f32 %v3650, %v3634
        %v3668 = vmul.f32 %v3650, %v3635
        %v3669 = vmul.f32 %v3650, %v3636
        %v3670 = vmul.f32 %v3650, %v3637
        %v3671 = vmul.f32 %v3650, %v3638
        %v3672 = vmul.f32 %v3650, %v3639
        %v3673 = vmul.f32 %v3650, %v3640
        %v3674 = vmul.f32 %v3650, %v3641
        %v3675 = vmul.f32 %v3650, %v3642
        %v3676 = vmul.f32 %v3650, %v3643
        %v3677 = vmul.f32 %v3650, %v3644
        %v3678 = vmul.f32 %v3650, %v3645
        %v3679 = vmul.f32 %v3650, %v3646
        %v3680 = vmul.f32 %v3650, %v3647
        %v3681 = vmul.f32 %v3650, %v3648
        %v3682 = vmul.f32 %v3650, %v3649
        %v3683 = vmul.f32 %v3651, 1.442695
        %v3684 = vpow.pop %v3683
        %v3685 = vmul.f32 %v3652, 1.442695
        %v3686 = vpow.pop %v3685
        %v3687 = vmul.f32 %v3653, 1.442695
        %v3688 = vpow.pop %v3687
        %v3689 = vmul.f32 %v3654, 1.442695
        %v3690 = vpow.pop %v3689
        %v3691 = vmul.f32 %v3655, 1.442695
        %v3692 = vpow.pop %v3691
        %v3693 = vmul.f32 %v3656, 1.442695
        %v3694 = vpow.pop %v3693
        %v3695 = vmul.f32 %v3657, 1.442695
        %v3696 = vpow.pop %v3695
        %v3697 = vmul.f32 %v3658, 1.442695
        %v3698 = vpow.pop %v3697
        %v3699 = vmul.f32 %v3659, 1.442695
        %v3700 = vpow.pop %v3699
        %v3701 = vmul.f32 %v3660, 1.442695
        %v3702 = vpow.pop %v3701
        %v3703 = vmul.f32 %v3661, 1.442695
        %v3704 = vpow.pop %v3703
        %v3705 = vmul.f32 %v3662, 1.442695
        %v3706 = vpow.pop %v3705
        %v3707 = vmul.f32 %v3663, 1.442695
        %v3708 = vpow.pop %v3707
        %v3709 = vmul.f32 %v3664, 1.442695
        %v3710 = vpow.pop %v3709
        %v3711 = vmul.f32 %v3665, 1.442695
        %v3712 = vpow.pop %v3711
        %v3713 = vmul.f32 %v3666, 1.442695
        %v3714 = vpow.pop %v3713
        %v3715 = vmul.f32 %v3667, 1.442695
        %v3716 = vpow.pop %v3715
        %v3717 = vmul.f32 %v3668, 1.442695
        %v3718 = vpow.pop %v3717
        %v3719 = vmul.f32 %v3669, 1.442695
        %v3720 = vpow.pop %v3719
        %v3721 = vmul.f32 %v3670, 1.442695
        %v3722 = vpow.pop %v3721
        %v3723 = vmul.f32 %v3671, 1.442695
        %v3724 = vpow.pop %v3723
        %v3725 = vmul.f32 %v3672, 1.442695
        %v3726 = vpow.pop %v3725
        %v3727 = vmul.f32 %v3673, 1.442695
        %v3728 = vpow.pop %v3727
        %v3729 = vmul.f32 %v3674, 1.442695
        %v3730 = vpow.pop %v3729
        %v3731 = vmul.f32 %v3675, 1.442695
        %v3732 = vpow.pop %v3731
        %v3733 = vmul.f32 %v3676, 1.442695
        %v3734 = vpow.pop %v3733
        %v3735 = vmul.f32 %v3677, 1.442695
        %v3736 = vpow.pop %v3735
        %v3737 = vmul.f32 %v3678, 1.442695
        %v3738 = vpow.pop %v3737
        %v3739 = vmul.f32 %v3679, 1.442695
        %v3740 = vpow.pop %v3739
        %v3741 = vmul.f32 %v3680, 1.442695
        %v3742 = vpow.pop %v3741
        %v3743 = vmul.f32 %v3681, 1.442695
        %v3744 = vpow.pop %v3743
        %v3745 = vmul.f32 %v3682, 1.442695
        %v3746 = vpow.pop %v3745
        %v3747 = vmul.f32 %v3684, %v3037
        %v3748 = vmul.f32 %v3686, %v3038
        %v3749 = vmul.f32 %v3688, %v3039
        %v3750 = vmul.f32 %v3690, %v3040
        %v3751 = vmul.f32 %v3692, %v3041
        %v3752 = vmul.f32 %v3694, %v3042
        %v3753 = vmul.f32 %v3696, %v3043
        %v3754 = vmul.f32 %v3698, %v3044
        %v3755 = vmul.f32 %v3700, %v3045
        %v3756 = vmul.f32 %v3702, %v3046
        %v3757 = vmul.f32 %v3704, %v3047
        %v3758 = vmul.f32 %v3706, %v3048
        %v3759 = vmul.f32 %v3708, %v3049
        %v3760 = vmul.f32 %v3710, %v3050
        %v3761 = vmul.f32 %v3712, %v3051
        %v3762 = vmul.f32 %v3714, %v3052
        %v3763 = vmul.f32 %v3716, %v3053
        %v3764 = vmul.f32 %v3718, %v3054
        %v3765 = vmul.f32 %v3720, %v3055
        %v3766 = vmul.f32 %v3722, %v3056
        %v3767 = vmul.f32 %v3724, %v3057
        %v3768 = vmul.f32 %v3726, %v3058
        %v3769 = vmul.f32 %v3728, %v3059
        %v3770 = vmul.f32 %v3730, %v3060
        %v3771 = vmul.f32 %v3732, %v3061
        %v3772 = vmul.f32 %v3734, %v3062
        %v3773 = vmul.f32 %v3736, %v3063
        %v3774 = vmul.f32 %v3738, %v3064
        %v3775 = vmul.f32 %v3740, %v3065
        %v3776 = vmul.f32 %v3742, %v3066
        %v3777 = vmul.f32 %v3744, %v3067
        %v3778 = vmul.f32 %v3746, %v3068
        %v3779 = vpack.c.bf16 %v3748, %v3747
        %v3780 = vpack.c.bf16 %v3750, %v3749
        %v3781 = vpack.c.bf16 %v3752, %v3751
        %v3782 = vpack.c.bf16 %v3754, %v3753
        %v3783 = vpack.c.bf16 %v3756, %v3755
        %v3784 = vpack.c.bf16 %v3758, %v3757
        %v3785 = vpack.c.bf16 %v3760, %v3759
        %v3786 = vpack.c.bf16 %v3762, %v3761
        %v3787 = vpack.c.bf16 %v3764, %v3763
        %v3788 = vpack.c.bf16 %v3766, %v3765
        %v3789 = vpack.c.bf16 %v3768, %v3767
        %v3790 = vpack.c.bf16 %v3770, %v3769
        %v3791 = vpack.c.bf16 %v3772, %v3771
        %v3792 = vpack.c.bf16 %v3774, %v3773
        %v3793 = vpack.c.bf16 %v3776, %v3775
        %v3794 = vpack.c.bf16 %v3778, %v3777
        %v3795 = vld [vmem:[#allocation12] sm:$0xf]
        %v3796 = vld [vmem:[#allocation12 + $0x4] sm:$0xf]
        %v3797 = vld [vmem:[#allocation12 + $0x8] sm:$0xf]
        %v3798 = vld [vmem:[#allocation12 + $0xc] sm:$0xf]
        %v3803 = vunpack.c.l.b16 %v3795
        %v3804 = vunpack.c.l.b16 %v3796
        %v3805 = vunpack.c.l.b16 %v3797
        %v3806 = vunpack.c.l.b16 %v3798
        %v3807 = vpack.c.b16 %v3804, %v3803
        %v3808 = vpack.c.b16 %v3806, %v3805
        %v3812 = vsel %vm2238, %v3779, 0
        %v3815 = vsel %vm2238, %v3780, 0
        %v3818 = vsel %vm2238, %v3781, 0
        %v3821 = vsel %vm2238, %v3782, 0
        %v3824 = vsel %vm2238, %v3783, 0
        %v3827 = vsel %vm2238, %v3784, 0
        %v3830 = vsel %vm2238, %v3785, 0
        %v3833 = vsel %vm2238, %v3786, 0
        %v3836 = vsel %vm2238, %v3787, 0
        %v3839 = vsel %vm2238, %v3788, 0
        %v3842 = vsel %vm2238, %v3789, 0
        %v3845 = vsel %vm2238, %v3790, 0
        %v3848 = vsel %vm2238, %v3791, 0
        %v3851 = vsel %vm2238, %v3792, 0
        %v3854 = vsel %vm2238, %v3793, 0
        %v3857 = vsel %vm2238, %v3794, 0
        %3859 = vmatprep.subr.bf16.mxu0 0
        %3860 = vmatpush1.bf16.msra.mxu0 %v3807
        %3861 = vmatprep.subr.bf16.mxu0 0
        %3862 = vmatpush1.bf16.msra.mxu0 %v3808
        %3863 = vmatprep.subr.bf16.mxu0 0
        %3864 = vmatpush1.bf16.msra.mxu0 0
        %3865 = vmatprep.subr.bf16.mxu0 0
        %3866 = vmatpush1.bf16.msra.mxu0 0
        %3867 = vmatprep.subr.bf16.mxu0 0
        %3868 = vmatpush1.bf16.msra.mxu0 0
        %3869 = vmatprep.subr.bf16.mxu0 0
        %3870 = vmatpush1.bf16.msra.mxu0 0
        %3871 = vmatprep.subr.bf16.mxu0 0
        %3872 = vmatpush1.bf16.msra.mxu0 0
        %3873 = vmatprep.subr.bf16.mxu0 0
        %3874 = vmatpush1.bf16.msra.mxu0 0
        %3875 = vmatprep.subr.bf16.mxu0 0
        %3876 = vmatpush1.bf16.msra.mxu0 0
        %3877 = vmatprep.subr.bf16.mxu0 0
        %3878 = vmatpush1.bf16.msra.mxu0 0
        %3879 = vmatprep.subr.bf16.mxu0 0
        %3880 = vmatpush1.bf16.msra.mxu0 0
        %3881 = vmatprep.subr.bf16.mxu0 0
        %3882 = vmatpush1.bf16.msra.mxu0 0
        %3883 = vmatprep.subr.bf16.mxu0 0
        %3884 = vmatpush1.bf16.msra.mxu0 0
        %3885 = vmatprep.subr.bf16.mxu0 0
        %3886 = vmatpush1.bf16.msra.mxu0 0
        %3887 = vmatprep.subr.bf16.mxu0 0
        %3888 = vmatpush1.bf16.msra.mxu0 0
        %3889 = vmatprep.subr.bf16.mxu0 0
        %3890 = vmatpush1.bf16.msra.mxu0 0
        %3891 = vmatprep.mubr.bf16.mxu0 0
        %3892 = vmatmul.mubr.bf16.gmra.mrb[0].mxu0 %v3812
        %v3893 = vpop.f32.mrb[0].mxu0
        %v3894 = vadd.f32 0.0, %v3893
        %v3895 = vpop.f32.mrb[0].mxu0
        %v3896 = vpop.f32.mrb[0].mxu0
        %v3897 = vadd.f32 0.0, %v3896
        %v3898 = vpop.f32.mrb[0].mxu0
        %3899 = vmatprep.mubr.bf16.mxu0 0
        %3900 = vmatmul.mubr.bf16.gmra.mrb[0].mxu0 %v3815
        %v3901 = vpop.f32.mrb[0].mxu0
        %v3902 = vadd.f32 0.0, %v3901
        %v3903 = vpop.f32.mrb[0].mxu0
        %v3904 = vpop.f32.mrb[0].mxu0
        %v3905 = vadd.f32 0.0, %v3904
        %v3906 = vpop.f32.mrb[0].mxu0
        %3907 = vmatprep.mubr.bf16.mxu0 0
        %3908 = vmatmul.mubr.bf16.gmra.mrb[0].mxu0 %v3818
        %v3909 = vpop.f32.mrb[0].mxu0
        %v3910 = vadd.f32 0.0, %v3909
        %v3911 = vpop.f32.mrb[0].mxu0
        %v3912 = vpop.f32.mrb[0].mxu0
        %v3913 = vadd.f32 0.0, %v3912
        %v3914 = vpop.f32.mrb[0].mxu0
        %3915 = vmatprep.mubr.bf16.mxu0 0
        %3916 = vmatmul.mubr.bf16.gmra.mrb[0].mxu0 %v3821
        %v3917 = vpop.f32.mrb[0].mxu0
        %v3918 = vadd.f32 0.0, %v3917
        %v3919 = vpop.f32.mrb[0].mxu0
        %v3920 = vpop.f32.mrb[0].mxu0
        %v3921 = vadd.f32 0.0, %v3920
        %v3922 = vpop.f32.mrb[0].mxu0
        %3923 = vmatprep.mubr.bf16.mxu0 0
        %3924 = vmatmul.mubr.bf16.gmra.mrb[0].mxu0 %v3824
        %v3925 = vpop.f32.mrb[0].mxu0
        %v3926 = vadd.f32 0.0, %v3925
        %v3927 = vpop.f32.mrb[0].mxu0
        %v3928 = vpop.f32.mrb[0].mxu0
        %v3929 = vadd.f32 0.0, %v3928
        %v3930 = vpop.f32.mrb[0].mxu0
        %3931 = vmatprep.mubr.bf16.mxu0 0
        %3932 = vmatmul.mubr.bf16.gmra.mrb[0].mxu0 %v3827
        %v3933 = vpop.f32.mrb[0].mxu0
        %v3934 = vadd.f32 0.0, %v3933
        %v3935 = vpop.f32.mrb[0].mxu0
        %v3936 = vpop.f32.mrb[0].mxu0
        %v3937 = vadd.f32 0.0, %v3936
        %v3938 = vpop.f32.mrb[0].mxu0
        %3939 = vmatprep.mubr.bf16.mxu0 0
        %3940 = vmatmul.mubr.bf16.gmra.mrb[0].mxu0 %v3830
        %v3941 = vpop.f32.mrb[0].mxu0
        %v3942 = vadd.f32 0.0, %v3941
        %v3943 = vpop.f32.mrb[0].mxu0
        %v3944 = vpop.f32.mrb[0].mxu0
        %v3945 = vadd.f32 0.0, %v3944
        %v3946 = vpop.f32.mrb[0].mxu0
        %3947 = vmatprep.mubr.bf16.mxu0 0
        %3948 = vmatmul.mubr.bf16.gmra.mrb[0].mxu0 %v3833
        %v3949 = vpop.f32.mrb[0].mxu0
        %v3950 = vadd.f32 0.0, %v3949
        %v3951 = vpop.f32.mrb[0].mxu0
        %v3952 = vpop.f32.mrb[0].mxu0
        %v3953 = vadd.f32 0.0, %v3952
        %v3954 = vpop.f32.mrb[0].mxu0
        %3955 = vmatprep.mubr.bf16.mxu0 0
        %3956 = vmatmul.mubr.bf16.gmra.mrb[0].mxu0 %v3836
        %v3957 = vpop.f32.mrb[0].mxu0
        %v3958 = vadd.f32 0.0, %v3957
        %v3959 = vpop.f32.mrb[0].mxu0
        %v3960 = vpop.f32.mrb[0].mxu0
        %v3961 = vadd.f32 0.0, %v3960
        %v3962 = vpop.f32.mrb[0].mxu0
        %3963 = vmatprep.mubr.bf16.mxu0 0
        %3964 = vmatmul.mubr.bf16.gmra.mrb[0].mxu0 %v3839
        %v3965 = vpop.f32.mrb[0].mxu0
        %v3966 = vadd.f32 0.0, %v3965
        %v3967 = vpop.f32.mrb[0].mxu0
        %v3968 = vpop.f32.mrb[0].mxu0
        %v3969 = vadd.f32 0.0, %v3968
        %v3970 = vpop.f32.mrb[0].mxu0
        %3971 = vmatprep.mubr.bf16.mxu0 0
        %3972 = vmatmul.mubr.bf16.gmra.mrb[0].mxu0 %v3842
        %v3973 = vpop.f32.mrb[0].mxu0
        %v3974 = vadd.f32 0.0, %v3973
        %v3975 = vpop.f32.mrb[0].mxu0
        %v3976 = vpop.f32.mrb[0].mxu0
        %v3977 = vadd.f32 0.0, %v3976
        %v3978 = vpop.f32.mrb[0].mxu0
        %3979 = vmatprep.mubr.bf16.mxu0 0
        %3980 = vmatmul.mubr.bf16.gmra.mrb[0].mxu0 %v3845
        %v3981 = vpop.f32.mrb[0].mxu0
        %v3982 = vadd.f32 0.0, %v3981
        %v3983 = vpop.f32.mrb[0].mxu0
        %v3984 = vpop.f32.mrb[0].mxu0
        %v3985 = vadd.f32 0.0, %v3984
        %v3986 = vpop.f32.mrb[0].mxu0
        %3987 = vmatprep.mubr.bf16.mxu0 0
        %3988 = vmatmul.mubr.bf16.gmra.mrb[0].mxu0 %v3848
        %v3989 = vpop.f32.mrb[0].mxu0
        %v3990 = vadd.f32 0.0, %v3989
        %v3991 = vpop.f32.mrb[0].mxu0
        %v3992 = vpop.f32.mrb[0].mxu0
        %v3993 = vadd.f32 0.0, %v3992
        %v3994 = vpop.f32.mrb[0].mxu0
        %3995 = vmatprep.mubr.bf16.mxu0 0
        %3996 = vmatmul.mubr.bf16.gmra.mrb[0].mxu0 %v3851
        %v3997 = vpop.f32.mrb[0].mxu0
        %v3998 = vadd.f32 0.0, %v3997
        %v3999 = vpop.f32.mrb[0].mxu0
        %v4000 = vpop.f32.mrb[0].mxu0
        %v4001 = vadd.f32 0.0, %v4000
        %v4002 = vpop.f32.mrb[0].mxu0
        %4003 = vmatprep.mubr.bf16.mxu0 0
        %4004 = vmatmul.mubr.bf16.gmra.mrb[0].mxu0 %v3854
        %v4005 = vpop.f32.mrb[0].mxu0
        %v4006 = vadd.f32 0.0, %v4005
        %v4007 = vpop.f32.mrb[0].mxu0
        %v4008 = vpop.f32.mrb[0].mxu0
        %v4009 = vadd.f32 0.0, %v4008
        %v4010 = vpop.f32.mrb[0].mxu0
        %4011 = vmatprep.mubr.bf16.mxu0 0
        %4012 = vmatmul.mubr.bf16.gmra.mrb[0].mxu0 %v3857
        %v4013 = vpop.f32.mrb[0].mxu0
        %v4014 = vadd.f32 0.0, %v4013
        %v4015 = vpop.f32.mrb[0].mxu0
        %v4016 = vpop.f32.mrb[0].mxu0
        %v4017 = vadd.f32 0.0, %v4016
        %v4018 = vpop.f32.mrb[0].mxu0
        %4019 = vdwg.mxu0
        %v4020 = vld [vmem:[#allocation14] sm:$0x1]
        %v4021 = vlaneseq
        %v4022 = vshrl.u32 %v4021, 7
        %v4023 = vsub.s32 0, %v4022
        %v4024 = vrot.slane %v4020, %v4023
        %v4025 = vmul.f32 %v3894, %v4024
        %v4026 = vmul.f32 %v3897, %v4024
        %v4027 = vmul.f32 %v3902, %v4024
        %v4028 = vmul.f32 %v3905, %v4024
        %v4029 = vmul.f32 %v3910, %v4024
        %v4030 = vmul.f32 %v3913, %v4024
        %v4031 = vmul.f32 %v3918, %v4024
        %v4032 = vmul.f32 %v3921, %v4024
        %v4033 = vmul.f32 %v3926, %v4024
        %v4034 = vmul.f32 %v3929, %v4024
        %v4035 = vmul.f32 %v3934, %v4024
        %v4036 = vmul.f32 %v3937, %v4024
        %v4037 = vmul.f32 %v3942, %v4024
        %v4038 = vmul.f32 %v3945, %v4024
        %v4039 = vmul.f32 %v3950, %v4024
        %v4040 = vmul.f32 %v3953, %v4024
        %v4041 = vmul.f32 %v3958, %v4024
        %v4042 = vmul.f32 %v3961, %v4024
        %v4043 = vmul.f32 %v3966, %v4024
        %v4044 = vmul.f32 %v3969, %v4024
        %v4045 = vmul.f32 %v3974, %v4024
        %v4046 = vmul.f32 %v3977, %v4024
        %v4047 = vmul.f32 %v3982, %v4024
        %v4048 = vmul.f32 %v3985, %v4024
        %v4049 = vmul.f32 %v3990, %v4024
        %v4050 = vmul.f32 %v3993, %v4024
        %v4051 = vmul.f32 %v3998, %v4024
        %v4052 = vmul.f32 %v4001, %v4024
        %v4053 = vmul.f32 %v4006, %v4024
        %v4054 = vmul.f32 %v4009, %v4024
        %v4055 = vmul.f32 %v4014, %v4024
        %v4056 = vmul.f32 %v4017, %v4024
        %v4057 = vld [vmem:[#allocation14 + $0x1] sm:$0x1]
        %v4058 = vlaneseq
        %v4059 = vshrl.u32 %v4058, 7
        %v4060 = vsub.s32 0, %v4059
        %v4061 = vrot.slane %v4057, %v4060
        %v4062 = vadd.f32 %v4025, %v4061
        %v4063 = vadd.f32 %v4026, %v4061
        %v4064 = vadd.f32 %v4027, %v4061
        %v4065 = vadd.f32 %v4028, %v4061
        %v4066 = vadd.f32 %v4029, %v4061
        %v4067 = vadd.f32 %v4030, %v4061
        %v4068 = vadd.f32 %v4031, %v4061
        %v4069 = vadd.f32 %v4032, %v4061
        %v4070 = vadd.f32 %v4033, %v4061
        %v4071 = vadd.f32 %v4034, %v4061
        %v4072 = vadd.f32 %v4035, %v4061
        %v4073 = vadd.f32 %v4036, %v4061
        %v4074 = vadd.f32 %v4037, %v4061
        %v4075 = vadd.f32 %v4038, %v4061
        %v4076 = vadd.f32 %v4039, %v4061
        %v4077 = vadd.f32 %v4040, %v4061
        %v4078 = vadd.f32 %v4041, %v4061
        %v4079 = vadd.f32 %v4042, %v4061
        %v4080 = vadd.f32 %v4043, %v4061
        %v4081 = vadd.f32 %v4044, %v4061
        %v4082 = vadd.f32 %v4045, %v4061
        %v4083 = vadd.f32 %v4046, %v4061
        %v4084 = vadd.f32 %v4047, %v4061
        %v4085 = vadd.f32 %v4048, %v4061
        %v4086 = vadd.f32 %v4049, %v4061
        %v4087 = vadd.f32 %v4050, %v4061
        %v4088 = vadd.f32 %v4051, %v4061
        %v4089 = vadd.f32 %v4052, %v4061
        %v4090 = vadd.f32 %v4053, %v4061
        %v4091 = vadd.f32 %v4054, %v4061
        %v4092 = vadd.f32 %v4055, %v4061
        %v4093 = vadd.f32 %v4056, %v4061
        %v4094 = vadd.f32 %v4062, %v4063
        %v4095 = vadd.f32 %v4094, %v4064
        %v4096 = vadd.f32 %v4095, %v4065
        %v4097 = vadd.f32 %v4096, %v4066
        %v4098 = vadd.f32 %v4097, %v4067
        %v4099 = vadd.f32 %v4098, %v4068
        %v4100 = vadd.f32 %v4099, %v4069
        %v4101 = vadd.f32 %v4100, %v4070
        %v4102 = vadd.f32 %v4101, %v4071
        %v4103 = vadd.f32 %v4102, %v4072
        %v4104 = vadd.f32 %v4103, %v4073
        %v4105 = vadd.f32 %v4104, %v4074
        %v4106 = vadd.f32 %v4105, %v4075
        %v4107 = vadd.f32 %v4106, %v4076
        %v4108 = vadd.f32 %v4107, %v4077
        %v4109 = vadd.f32 %v4108, %v4078
        %v4110 = vadd.f32 %v4109, %v4079
        %v4111 = vadd.f32 %v4110, %v4080
        %v4112 = vadd.f32 %v4111, %v4081
        %v4113 = vadd.f32 %v4112, %v4082
        %v4114 = vadd.f32 %v4113, %v4083
        %v4115 = vadd.f32 %v4114, %v4084
        %v4116 = vadd.f32 %v4115, %v4085
        %v4117 = vadd.f32 %v4116, %v4086
        %v4118 = vadd.f32 %v4117, %v4087
        %v4119 = vadd.f32 %v4118, %v4088
        %v4120 = vadd.f32 %v4119, %v4089
        %v4121 = vadd.f32 %v4120, %v4090
        %v4122 = vadd.f32 %v4121, %v4091
        %v4123 = vadd.f32 %v4122, %v4092
        %v4124 = vadd.f32 %v4123, %v4093
        %v4125 = vrot.slane %v4124, 4
        %v4126 = vadd.f32 %v4124, %v4125
        %v4127 = vrot.slane %v4126, 2
        %v4128 = vadd.f32 %v4126, %v4127
        %v4129 = vrot.slane %v4128, 1
        %v4130 = vadd.f32 %v4128, %v4129
        %4131 = vst [vmem:[%s453] sm:$0x1] %v4130
        %v4132 = vpack.c.bf16 %v4063, %v4062
        %v4133 = vpack.c.bf16 %v4065, %v4064
        %v4134 = vpack.c.bf16 %v4067, %v4066
        %v4135 = vpack.c.bf16 %v4069, %v4068
        %v4136 = vpack.c.bf16 %v4071, %v4070
        %v4137 = vpack.c.bf16 %v4073, %v4072
        %v4138 = vpack.c.bf16 %v4075, %v4074
        %v4139 = vpack.c.bf16 %v4077, %v4076
        %v4140 = vpack.c.bf16 %v4079, %v4078
        %v4141 = vpack.c.bf16 %v4081, %v4080
        %v4142 = vpack.c.bf16 %v4083, %v4082
        %v4143 = vpack.c.bf16 %v4085, %v4084
        %v4144 = vpack.c.bf16 %v4087, %v4086
        %v4145 = vpack.c.bf16 %v4089, %v4088
        %v4146 = vpack.c.bf16 %v4091, %v4090
        %v4147 = vpack.c.bf16 %v4093, %v4092
        %v4164 = vunpack.c.l.b16 %v4132
        %v4165 = vunpack.c.h.b16 %v4132
        %v4166 = vunpack.c.l.b16 %v4133
        %v4167 = vunpack.c.h.b16 %v4133
        %v4168 = vunpack.c.l.b16 %v4134
        %v4169 = vunpack.c.h.b16 %v4134
        %v4170 = vunpack.c.l.b16 %v4135
        %v4171 = vunpack.c.h.b16 %v4135
        %v4172 = vunpack.c.l.b16 %v4136
        %v4173 = vunpack.c.h.b16 %v4136
        %v4174 = vunpack.c.l.b16 %v4137
        %v4175 = vunpack.c.h.b16 %v4137
        %v4176 = vunpack.c.l.b16 %v4138
        %v4177 = vunpack.c.h.b16 %v4138
        %v4178 = vunpack.c.l.b16 %v4139
        %v4179 = vunpack.c.h.b16 %v4139
        %v4180 = vunpack.c.l.b16 %v4140
        %v4181 = vunpack.c.h.b16 %v4140
        %v4182 = vunpack.c.l.b16 %v4141
        %v4183 = vunpack.c.h.b16 %v4141
        %v4184 = vunpack.c.l.b16 %v4142
        %v4185 = vunpack.c.h.b16 %v4142
        %v4186 = vunpack.c.l.b16 %v4143
        %v4187 = vunpack.c.h.b16 %v4143
        %v4188 = vunpack.c.l.b16 %v4144
        %v4189 = vunpack.c.h.b16 %v4144
        %v4190 = vunpack.c.l.b16 %v4145
        %v4191 = vunpack.c.h.b16 %v4145
        %v4192 = vunpack.c.l.b16 %v4146
        %v4193 = vunpack.c.h.b16 %v4146
        %v4194 = vunpack.c.l.b16 %v4147
        %v4195 = vunpack.c.h.b16 %v4147
        %v4196 = vpack.c.b16 %v4164, %v4164
        %v4197 = vpack.c.b16 %v4165, %v4165
        %v4198 = vpack.c.b16 %v4166, %v4166
        %v4199 = vpack.c.b16 %v4167, %v4167
        %v4200 = vpack.c.b16 %v4168, %v4168
        %v4201 = vpack.c.b16 %v4169, %v4169
        %v4202 = vpack.c.b16 %v4170, %v4170
        %v4203 = vpack.c.b16 %v4171, %v4171
        %v4204 = vpack.c.b16 %v4172, %v4172
        %v4205 = vpack.c.b16 %v4173, %v4173
        %v4206 = vpack.c.b16 %v4174, %v4174
        %v4207 = vpack.c.b16 %v4175, %v4175
        %v4208 = vpack.c.b16 %v4176, %v4176
        %v4209 = vpack.c.b16 %v4177, %v4177
        %v4210 = vpack.c.b16 %v4178, %v4178
        %v4211 = vpack.c.b16 %v4179, %v4179
        %v4212 = vpack.c.b16 %v4180, %v4180
        %v4213 = vpack.c.b16 %v4181, %v4181
        %v4214 = vpack.c.b16 %v4182, %v4182
        %v4215 = vpack.c.b16 %v4183, %v4183
        %v4216 = vpack.c.b16 %v4184, %v4184
        %v4217 = vpack.c.b16 %v4185, %v4185
        %v4218 = vpack.c.b16 %v4186, %v4186
        %v4219 = vpack.c.b16 %v4187, %v4187
        %v4220 = vpack.c.b16 %v4188, %v4188
        %v4221 = vpack.c.b16 %v4189, %v4189
        %v4222 = vpack.c.b16 %v4190, %v4190
        %v4223 = vpack.c.b16 %v4191, %v4191
        %v4224 = vpack.c.b16 %v4192, %v4192
        %v4225 = vpack.c.b16 %v4193, %v4193
        %v4226 = vpack.c.b16 %v4194, %v4194
        %v4227 = vpack.c.b16 %v4195, %v4195
        %4260 = vst [vmem:[%s447] sm:$0xf] %v4196
        %4261 = vst [vmem:[%s447 + $0x4] sm:$0xf] %v4197
        %4262 = vst [vmem:[%s447 + $0x8] sm:$0xf] %v4198
        %4263 = vst [vmem:[%s447 + $0xc] sm:$0xf] %v4199
        %4264 = vst [vmem:[%s447 + $0x10] sm:$0xf] %v4200
        %4265 = vst [vmem:[%s447 + $0x14] sm:$0xf] %v4201
        %4266 = vst [vmem:[%s447 + $0x18] sm:$0xf] %v4202
        %4267 = vst [vmem:[%s447 + $0x1c] sm:$0xf] %v4203
        %4268 = vst [vmem:[%s447 + $0x20] sm:$0xf] %v4204
        %4269 = vst [vmem:[%s447 + $0x24] sm:$0xf] %v4205
        %4270 = vst [vmem:[%s447 + $0x28] sm:$0xf] %v4206
        %4271 = vst [vmem:[%s447 + $0x2c] sm:$0xf] %v4207
        %4272 = vst [vmem:[%s447 + $0x30] sm:$0xf] %v4208
        %4273 = vst [vmem:[%s447 + $0x34] sm:$0xf] %v4209
        %4274 = vst [vmem:[%s447 + $0x38] sm:$0xf] %v4210
        %4275 = vst [vmem:[%s447 + $0x3c] sm:$0xf] %v4211
        %4276 = vst [vmem:[%s447 + $0x40] sm:$0xf] %v4212
        %4277 = vst [vmem:[%s447 + $0x44] sm:$0xf] %v4213
        %4278 = vst [vmem:[%s447 + $0x48] sm:$0xf] %v4214
        %4279 = vst [vmem:[%s447 + $0x4c] sm:$0xf] %v4215
        %4280 = vst [vmem:[%s447 + $0x50] sm:$0xf] %v4216
        %4281 = vst [vmem:[%s447 + $0x54] sm:$0xf] %v4217
        %4282 = vst [vmem:[%s447 + $0x58] sm:$0xf] %v4218
        %4283 = vst [vmem:[%s447 + $0x5c] sm:$0xf] %v4219
        %4284 = vst [vmem:[%s447 + $0x60] sm:$0xf] %v4220
        %4285 = vst [vmem:[%s447 + $0x64] sm:$0xf] %v4221
        %4286 = vst [vmem:[%s447 + $0x68] sm:$0xf] %v4222
        %4287 = vst [vmem:[%s447 + $0x6c] sm:$0xf] %v4223
        %4288 = vst [vmem:[%s447 + $0x70] sm:$0xf] %v4224
        %4289 = vst [vmem:[%s447 + $0x74] sm:$0xf] %v4225
        %4290 = vst [vmem:[%s447 + $0x78] sm:$0xf] %v4226
        %4291 = vst [vmem:[%s447 + $0x7c] sm:$0xf] %v4227
        %s4292 = sand.u32 %s215, 1
        %s4293 = scalar_lea.sflag [#allocation4], %s4292
        %s4294 = sand.u32 %s215, 1
        %s4295 = smul.addr %s4294, 128
        %s4296 = scalar_lea.vmem [#allocation16], %s4295
        %s4297 = sand.u32 %s241, 1
        %s4298 = scalar_lea.sflag [#allocation18], %s4297
        %s4299 = sand.u32 %s241, 1
        %s4300 = scalar_lea.vmem [#allocation17], %s4299
        // Predicated region
        $region85: #{se_bottleneck_forward.2} parent=51 // pred_check
          %p4301 = pneg %p225
        $region86: #{se_bottleneck_forward.2} parent=51 // pred_check_branch
          %4303 = sbr.rel (%p4301) target = $region88
        $region87: #{se_bottleneck_forward.2} parent=51 // pred_region
          %s4305 = ssub.s32 2048, 2048
          %4306 = vsyncadd %s4293, %s4305
          %s4307 = smul.addr %s34, 32
          %s4308 = smul.addr %s4307, 64
          %s4309 = scalar_lea.hbm %s8, %s4308
          %s4310 = sshll.u32 %s4296, 4
          %s4311 = int_to_ptr.vmem [resolvable:$true] %s4310
          %4316 = dma.vmem_to_hbm [thread:$0]  %s4311, 2048, %s4309, %s4293, 64, 64, 4
        $region88: #{se_bottleneck_forward.2} parent=51 // pred_fallthru
          _
        // Predicated region
        $region89: #{se_bottleneck_forward.2} parent=51 // pred_check
          %p4317 = pneg %p251
        $region90: #{se_bottleneck_forward.2} parent=51 // pred_check_branch
          %4319 = sbr.rel (%p4317) target = $region92
        $region91: #{se_bottleneck_forward.2} parent=51 // pred_region
          %s4321 = ssub.s32 16, 16
          %4322 = vsyncadd %s4298, %s4321
          %s4323 = smul.addr %s34, 16
          %s4324 = scalar_lea.hbm %s9, %s4323
          %s4326 = sshll.u32 %s4300, 4
          %s4327 = int_to_ptr.vmem [resolvable:$true] %s4326
          %4329 = dma.vmem_to_hbm [thread:$0]  %s4327, 16, %s4324, %s4298
        $region92: #{se_bottleneck_forward.2} parent=51 // pred_fallthru
          _
      $region52: #{se_bottleneck_forward.2} parent=5 // pred_fallthru
        _
      %p4330 = scmp.le.s32.totalorder 2, %s29
      // Predicated region
      $region93: #{se_bottleneck_forward.2} parent=5 // pred_check
        %p4331 = pneg %p4330
      $region94: #{se_bottleneck_forward.2} parent=5 // pred_check_branch
        %4333 = sbr.rel (%p4331) target = $region96
      $region95: #{se_bottleneck_forward.2} parent=5 // pred_region
        %s4334 = ssub.s32 %s29, 2
        // Predicated region
        $region97: #{se_bottleneck_forward.2} parent=95 // pred_check
          %p4335 = pneg %p231
        $region98: #{se_bottleneck_forward.2} parent=95 // pred_check_branch
          %4337 = sbr.rel (%p4335) target = $region100
        $region99: #{se_bottleneck_forward.2} parent=95 // pred_region
          %s4338 = sand.u32 %s216, 1
          %s4339 = scalar_lea.sflag [#allocation4], %s4338
          %s4340 = sand.u32 %s216, 1
          %s4341 = smul.addr %s4340, 128
          %s4342 = scalar_lea.vmem [#allocation16], %s4341
          %4343 = dma.done %s4339, 2048
        $region100: #{se_bottleneck_forward.2} parent=95 // pred_fallthru
          _
        // Predicated region
        $region101: #{se_bottleneck_forward.2} parent=95 // pred_check
          %p4344 = pneg %p257
        $region102: #{se_bottleneck_forward.2} parent=95 // pred_check_branch
          %4346 = sbr.rel (%p4344) target = $region104
        $region103: #{se_bottleneck_forward.2} parent=95 // pred_region
          %s4347 = sand.u32 %s242, 1
          %s4348 = scalar_lea.sflag [#allocation18], %s4347
          %s4349 = sand.u32 %s242, 1
          %s4350 = scalar_lea.vmem [#allocation17], %s4349
          %4351 = dma.done %s4348, 16
        $region104: #{se_bottleneck_forward.2} parent=95 // pred_fallthru
          _
      $region96: #{se_bottleneck_forward.2} parent=5 // pred_fallthru
        _
    $region6: #{se_bottleneck_forward.2} parent=1 // loop_footer
      %s33 = sadd.s32 1, %s29
    $region7: #{se_bottleneck_forward.2} parent=1 // loop_footer_branch
      %28 = sbr.rel target = $region3
    $region8: #{se_bottleneck_forward.2} parent=1 // loop_exit
      _
    %4352 = vsyncpa [#allocation3], 1
    %s4353 = scalar_lea.sflag [#allocation3], 1
    %4354 = vsyncpa %s4353, 1
    %4355 = vsyncpa [#allocation7], 1
    %4356 = vsyncpa [#allocation10], 1
    %4357 = vsyncpa [#allocation13], 1
    %4358 = vsyncpa [#allocation4], 1
    %s4359 = scalar_lea.sflag [#allocation4], 1
    %4360 = vsyncpa %s4359, 1
    %4361 = vsyncpa [#allocation18], 1
    %s4362 = scalar_lea.sflag [#allocation18], 1
    %4363 = vsyncpa %s4362, 1
    %4364 = vsyncpa [#allocation5], 1
    %s4365 = scalar_lea.sflag [#allocation5], 1
    %4366 = vsyncpa %s4365, 1

</llo_original>
